<compile_context>
chip_gen: v7x
topology: tpu7x:2x2x1
jax: 0.10.0
libtpu: 0.0.40
codegen_flags: <defaults>
</compile_context>

<pallas_src>
import functools

import numpy as np
import jax
import jax.numpy as jnp
from jax import lax
from jax.experimental import pallas as pl
from jax.experimental.pallas import tpu as pltpu

RADIANS_FIVE_DEG = 0.087266


# ---------------------------------------------------------------------------
# arctan for non-negative args (Cephes-style f32 polynomial, single divide).
# ---------------------------------------------------------------------------
def _atan_pos(x):
    tan3pio8 = 2.414213562373095
    tan_pio8 = 0.4142135623730951
    big = x > tan3pio8
    mid = jnp.logical_and(x > tan_pio8, jnp.logical_not(big))
    # one divide total: 1/x for the big branch, 1/(x+1) for the mid branch.
    den = jnp.where(big, x, x + 1.0)          # >= 1 on every lane that uses it
    r = 1.0 / den
    xr = jnp.where(big, -r, jnp.where(mid, (x - 1.0) * r, x))
    yoff = jnp.where(big, np.float32(np.pi / 2.0),
                     jnp.where(mid, np.float32(np.pi / 4.0), 0.0))
    z = xr * xr
    p = ((((8.05374449538e-2 * z - 1.38776856032e-1) * z
           + 1.99777106478e-1) * z - 3.33329491539e-1) * z * xr + xr)
    return yoff + p


# ---------------------------------------------------------------------------
# Pallas kernel: one grid step == Bb batch elements.
# ---------------------------------------------------------------------------
def _grouper_kernel(cfps_ref, all_ref, slab_ref, idx_ref, *,
                    num_group, group_size, num_feat, out_w):
    Bb = all_ref.shape[0]
    N = all_ref.shape[2]
    F = num_feat
    G = num_group
    K = group_size

    # ---- stage 1: farthest point sampling (batch on sublanes) --------------
    cx = cfps_ref[0]                                            # (Bb, N)
    cy = cfps_ref[1]
    cz = cfps_ref[2]

    n_iota2 = lax.broadcasted_iota(jnp.int32, (1, N), 1)        # lanes
    g_iota2 = lax.broadcasted_iota(jnp.int32, (1, G), 1)        # lanes

    def fps_body(g, carry):
        idx, mind, sel = carry          # (Bb,1) i32, (Bb,N) f32, (Bb,G) i32
        sel = jnp.where(g_iota2 == g, idx, sel)
        qmask = (n_iota2 == idx)                                       # (Bb,N)
        qx = jnp.sum(jnp.where(qmask, cx, 0.0), axis=-1, keepdims=True)
        qy = jnp.sum(jnp.where(qmask, cy, 0.0), axis=-1, keepdims=True)
        qz = jnp.sum(jnp.where(qmask, cz, 0.0), axis=-1, keepdims=True)
        dx = cx - qx
        dy = cy - qy
        dz = cz - qz
        d = (dx * dx + dy * dy) + dz * dz      # same association as reference
        mind = jnp.minimum(mind, d)
        m = jnp.max(mind, axis=-1, keepdims=True)                      # (Bb,1)
        nxt = jnp.min(jnp.where(mind == m, n_iota2, N),
                      axis=-1, keepdims=True).astype(jnp.int32)        # (Bb,1)
        return nxt, mind, sel

    fps_init = (jnp.zeros((Bb, 1), jnp.int32),
                jnp.full((Bb, N), 1e10, jnp.float32),   # matches reference init
                jnp.zeros((Bb, G), jnp.int32))
    _, _, sel = lax.fori_loop(0, G, fps_body, fps_init,
                              unroll=True if G <= 32 else 4)

    idx_ref[...] = sel                                   # (Bb, G) local indices

    # ---- bridge: one-hot selection matrix, points on sublanes --------------
    # maskT[b, n, g] = (sel[b, g] == n); built per-batch-row with pure 2-D
    # broadcasts (no lane<->sublane reshape of the index vector).
    n_iota_s = lax.broadcasted_iota(jnp.int32, (N, 1), 0)
    rows = []
    for b in range(Bb):
        sel_b = sel[b:b + 1, :]                              # (1, G)
        mb = (n_iota_s == sel_b).astype(jnp.float32)         # (N, G)
        rows.append(jnp.expand_dims(mb, 0))                  # (1, N, G)
    maskT = jnp.concatenate(rows, axis=0)                    # (Bb, N, G)

    allb = all_ref[...]                                      # (Bb, 3+F, N)

    # ---- one-hot MXU gather (exact under HIGHEST) ---------------------------
    q_ct = jnp.einsum('bcn,bng->bcg', allb, maskT,
                      precision=jax.lax.Precision.HIGHEST,
                      preferred_element_type=jnp.float32)    # (Bb, 3+F, G)
    # identity matmul flips the layout to (Bb, G, 3+F) without a vector
    # transpose (exact: one-hot x HIGHEST).  eye_g is (Bb, G, G); fine for the
    # G values this grouper targets.
    eye_g = (lax.broadcasted_iota(jnp.int32, (Bb, G, G), 1) ==
             lax.broadcasted_iota(jnp.int32, (Bb, G, G), 2)).astype(jnp.float32)
    q_all = jnp.einsum('bgm,bcm->bgc', eye_g, q_ct,
                       precision=jax.lax.Precision.HIGHEST,
                       preferred_element_type=jnp.float32)   # (Bb, G, 3+F)

    n_iota3 = lax.broadcasted_iota(jnp.int32, (1, 1, N), 2)

    # ---- squared distances, per-channel VPU (bit-exact vs reference) --------
    dist = None
    for c in range(3):
        pc = allb[:, c:c + 1, :]                             # (Bb, 1, N)
        qc = q_all[:, :, c:c + 1]                            # (Bb, G, 1)
        dc = pc - qc
        term = dc * dc
        dist = term if dist is None else dist + term         # (Bb, G, N)

    # ---- feature dot / norms -------------------------------------------------
    if F <= 16:
        fdot = None
        bsq = None
        qfsq = None
        for c in range(F):
            fc = allb[:, 3 + c:4 + c, :]                     # (Bb, 1, N)
            qfc = q_all[:, :, 3 + c:4 + c]                   # (Bb, G, 1)
            td = qfc * fc
            tb = fc * fc
            tq = qfc * qfc
            fdot = td if fdot is None else fdot + td         # (Bb, G, N)
            bsq = tb if bsq is None else bsq + tb            # (Bb, 1, N)
            qfsq = tq if qfsq is None else qfsq + tq         # (Bb, G, 1)
    else:
        featb = allb[:, 3:, :]
        q_feat = q_all[:, :, 3:]
        fdot = jnp.einsum('bgc,bcn->bgn', q_feat, featb,
                          precision=jax.lax.Precision.HIGHEST,
                          preferred_element_type=jnp.float32)
        bsq = jnp.sum(featb * featb, axis=1, keepdims=True)
        qfsq = jnp.sum(q_feat * q_feat, axis=-1, keepdims=True)

    # ---- Kahan angle via |a|b| -/+ |a|b|^2 = 2|a||b|(|a||b| -/+ a.b) ---------
    a_norm = jnp.sqrt(qfsq)                                  # (Bb, G, 1)
    b_norm = jnp.sqrt(bsq)                                   # (Bb, 1, N)
    pn = a_norm * b_norm                                     # (Bb, G, N)
    num2 = jnp.maximum(2.0 * pn * (pn - fdot), 0.0)
    den2 = jnp.maximum(2.0 * pn * (pn + fdot), 0.0)
    den_pos = den2 > 0.0
    t = jnp.sqrt(num2) * lax.rsqrt(jnp.where(den_pos, den2, 1.0))   # EUP rsqrt
    ang = 2.0 * jnp.where(den_pos, _atan_pos(t),
                          jnp.where(num2 > 0.0,
                                    np.float32(np.pi / 2.0), 0.0))  # (Bb,G,N)

    # ---- kNN: iterative first-min with inline angle accumulation ------------
    # neighbour 0 (the point itself) excluded, matching angles[:, 1:].
    def knn_body(k, carry):
        dd, acc = carry
        mn = jnp.min(dd, axis=-1, keepdims=True)                     # (Bb,G,1)
        nn = jnp.min(jnp.where(dd == mn, n_iota3, N),
                     axis=-1, keepdims=True)                         # (Bb,G,1)
        nmask = (n_iota3 == nn)                                      # (Bb,G,N)
        contrib = jnp.sum(jnp.where(nmask, ang, 0.0),
                          axis=-1, keepdims=True)                    # (Bb,G,1)
        acc = acc + jnp.where(k >= 1, contrib, 0.0)
        dd = jnp.where(nmask, jnp.float32(jnp.inf), dd)
        return dd, acc

    _, ang_sum = lax.fori_loop(
        0, K, knn_body, (dist, jnp.zeros((Bb, G, 1), jnp.float32)),
        unroll=True if K <= 32 else 4)
    curv = ang_sum * np.float32(1.0 / max(K - 1, 1))   # guard group_size == 1

    # ---- single lane-dense output store --------------------------------------
    pad_w = out_w - (3 + F + 1)
    pieces = [q_all, curv]
    if pad_w:
        pieces.append(jnp.zeros((Bb, G, pad_w), jnp.float32))
    slab_ref[...] = jnp.concatenate(pieces, axis=-1)


# ---------------------------------------------------------------------------
# Wrapper (glue): PyTorch-style flat point cloud in, grouped point cloud out.
# Assumes equal-sized batches (offset = [Npts, 2*Npts, ...]).
# ---------------------------------------------------------------------------
def _round_up(v, m):
    return ((v + m - 1) // m) * m


def _device_kind():
    try:
        return jax.devices()[0].device_kind.lower()
    except Exception:  # pragma: no cover
        return ""


def _vmem_limit_bytes(kind):
    if "v7" in kind:
        return 48 * 2 ** 20      # v7x: 64 MiB physical per TensorCore
    if "v5" in kind or "v6" in kind:
        return 100 * 2 ** 20     # 128 MiB physical
    return None                  # unknown chip: keep the default scoped limit


def _pick_block_batches(B, C, G, N, out_w, budget_bytes, prefer_two_steps):
    """Pick Bb (batches per grid step).  Bb must divide B and be either equal
    to B or a multiple of 8 (FPS blocks put the batch on sublanes)."""
    f = 4
    NP = _round_up(N, 128)
    GP = _round_up(G, 8)
    CP = _round_up(C, 8)

    def fits(bb):
        bp = _round_up(bb, 8)
        in_b = 2 * (3 * bp * NP + bb * CP * NP) * f              # double-buffered
        out_b = 2 * (bb * GP * _round_up(out_w, 128) + bp * _round_up(G, 128)) * f
        # live stage-2 intermediates: ~10 (G,N)-class arrays + channel planes
        # + the (G,G) identity used by the gather layout flip.
        work = bb * (10 * GP * NP + 2 * CP * NP + 4 * NP + GP * GP) * f
        return in_b + out_b + work <= budget_bytes

    cands = [d for d in range(1, min(B, 8) + 1)
             if B % d == 0 and (d == B or d % 8 == 0)]
    if not cands:
        cands = [B]                        # whole-batch block is always legal
    cands = sorted(set(cands), reverse=True)

    if prefer_two_steps:                   # v7x: keep both TensorCores busy
        two = [d for d in cands if B // d >= 2 and fits(d)]
        if two:
            return two[0]
    for d in cands:
        if fits(d):
            return d
    return cands[-1]


def grouper_by_num_group(coord, feat, offset, num_group, group_size,
                         labels=None, grid_size=None):
    offset = jnp.asarray(offset)
    B = int(offset.shape[0])
    total = int(coord.shape[0])
    if total % B:
        raise ValueError("grouper_by_num_group: total point count must be "
                         "divisible by the number of batches (equal batches).")
    Npts = total // B
    F = int(feat.shape[-1])
    G = int(num_group)
    K = int(group_size)
    C = 3 + F
    OUT_W = _round_up(3 + F + 1, 128)

    # best-effort validation of the equal-sized-batch assumption
    try:
        expected = jnp.arange(1, B + 1, dtype=offset.dtype) * Npts
        if not bool(jnp.all(offset == expected)):
            raise ValueError("grouper_by_num_group kernel assumes equal-sized "
                             "batches (offset = [N, 2N, ...]).")
    except jax.errors.ConcretizationTypeError:
        pass  # traced offsets: caller is responsible for the contract

    c3 = coord.reshape(B, Npts, 3).astype(jnp.float32)
    f3 = feat.reshape(B, Npts, F).astype(jnp.float32)
    coord_fps = jnp.transpose(c3, (2, 0, 1))                      # (3, B, N)
    allcf = jnp.concatenate([jnp.transpose(c3, (0, 2, 1)),
                             jnp.transpose(f3, (0, 2, 1))], axis=1)  # (B, C, N)

    kind = _device_kind()
    limit = _vmem_limit_bytes(kind)
    budget = int(0.6 * (limit if limit is not None else 32 * 2 ** 20))
    Bb = _pick_block_batches(B, C, G, Npts, OUT_W, budget, "v7" in kind)

    kernel = functools.partial(_grouper_kernel, num_group=G, group_size=K,
                               num_feat=F, out_w=OUT_W)

    cp_kwargs = dict(dimension_semantics=("parallel",))
    if limit is not None:
        cp_kwargs["vmem_limit_bytes"] = limit

    slab, sel_local = pl.pallas_call(
        kernel,
        out_shape=(jax.ShapeDtypeStruct((B, G, OUT_W), jnp.float32),
                   jax.ShapeDtypeStruct((B, G), jnp.int32)),
        grid=(B // Bb,),
        in_specs=[pl.BlockSpec((3, Bb, Npts), lambda i: (0, i, 0)),
                  pl.BlockSpec((Bb, C, Npts), lambda i: (i, 0, 0))],
        out_specs=(pl.BlockSpec((Bb, G, OUT_W), lambda i: (i, 0, 0)),
                   pl.BlockSpec((Bb, G), lambda i: (i, 0))),
        compiler_params=pltpu.CompilerParams(**cp_kwargs),
    )(coord_fps, allcf)

    s_xyz = slab[:, :, 0:3].reshape(B * G, 3)
    s_feat = slab[:, :, 3:3 + F].reshape(B * G, F)
    p_curvature = slab[:, :, 3 + F:4 + F].reshape(B * G, 1)
    s_idx = (sel_local
             + jnp.arange(B, dtype=jnp.int32)[:, None] * Npts).reshape(B * G)
    shape_weight = (p_curvature[:, 0] > RADIANS_FIVE_DEG).astype(jnp.int32)
    s_offset = jnp.cumsum(jnp.full((B,), G, dtype=jnp.int32)).astype(jnp.int32)

    result = dict(
        coord=s_xyz,
        offset=s_offset,
        index_back_to_parent=s_idx,
        feat=jnp.concatenate([s_feat, p_curvature], axis=-1),
        shape_weight=shape_weight,
    )
    if grid_size is not None:
        result["grid_size"] = grid_size
    if labels is not None:
        result["labels"] = labels[s_idx]      # glue gather
    return result


# ---------------------------------------------------------------------------
# Pure-numpy reference mirroring the PyTorch semantics (fps + knn + curvature)
# ---------------------------------------------------------------------------
def _reference_numpy(coord, feat, B, Npts, G, K):
    s_idx_l, s_xyz_l, s_feat_l, curv_l = [], [], [], []
    for b in range(B):
        c = coord[b * Npts:(b + 1) * Npts]
        f = feat[b * Npts:(b + 1) * Npts]
        sel, idx = [], 0
        mind = np.full(Npts, 1e10, np.float32)
        for _ in range(G):
            sel.append(idx)
            d = ((c - c[idx]) ** 2).sum(-1)
            mind = np.minimum(mind, d)
            idx = int(np.argmax(mind))
        for i in sel:
            d = ((c - c[i]) ** 2).sum(-1)
            nn = np.argsort(d, kind="stable")[:K]
            a = f[i:i + 1]
            bfe = f[nn]
            a_norm = np.linalg.norm(a, axis=-1, keepdims=True)
            b_norm = np.linalg.norm(bfe, axis=-1, keepdims=True)
            num = np.linalg.norm(a * b_norm - a_norm * bfe, axis=-1)
            den = np.linalg.norm(a * b_norm + a_norm * bfe, axis=-1)
            ang = 2.0 * np.arctan2(num, den)
            curv_l.append(ang[1:].mean())
            s_idx_l.append(b * Npts + i)
            s_xyz_l.append(c[i])
            s_feat_l.append(f[i])
    curv = np.array(curv_l, np.float32).reshape(-1, 1)
    return dict(
        s_idx=np.array(s_idx_l, np.int32),
        s_xyz=np.stack(s_xyz_l).astype(np.float32),
        s_feat=np.stack(s_feat_l).astype(np.float32),
        curv=curv,
        shape_weight=(curv[:, 0] > RADIANS_FIVE_DEG).astype(np.int32),
    )


if __name__ == "__main__":
    B, Npts, F = 2, 128, 4          # two point clouds of 128 points, 4-dim feats
    G, K = 8, 8                     # num_group, group_size

    key = jax.random.PRNGKey(0)
    k1, k2, k3 = jax.random.split(key, 3)
    coord = jax.random.uniform(k1, (B * Npts, 3), dtype=jnp.float32)
    feat = jax.random.normal(k2, (B * Npts, F), dtype=jnp.float32)
    labels = jax.random.randint(k3, (B * Npts,), 0, 10, dtype=jnp.int32)
    offset = jnp.arange(1, B + 1, dtype=jnp.int32) * Npts

    out = grouper_by_num_group(coord, feat, offset, G, K,
                               labels=labels, grid_size=0.02)
    jax.block_until_ready((out["coord"], out["feat"],
                           out["shape_weight"], out["index_back_to_parent"]))

    ref = _reference_numpy(np.asarray(coord), np.asarray(feat), B, Npts, G, K)
    np.testing.assert_array_equal(np.asarray(out["index_back_to_parent"]),
                                  ref["s_idx"])
    np.testing.assert_allclose(np.asarray(out["coord"]), ref["s_xyz"],
                               rtol=1e-6, atol=1e-6)
    np.testing.assert_allclose(np.asarray(out["feat"][:, :F]), ref["s_feat"],
                               rtol=1e-6, atol=1e-6)
    np.testing.assert_allclose(np.asarray(out["feat"][:, F:]), ref["curv"],
                               rtol=2e-4, atol=2e-5)
    np.testing.assert_array_equal(np.asarray(out["shape_weight"]),
                                  ref["shape_weight"])

    print("KERNEL_OK")
</pallas_src>

<mosaic_0001>
module attributes {stable_mosaic.version = 11 : i64} {
  func.func @_grouper_kernel(%arg0: i32, %arg1: memref<3x2x128xf32, #tpu.memory_space<vmem>>, %arg2: memref<2x7x128xf32, #tpu.memory_space<vmem>>, %arg3: memref<2x8x128xf32, #tpu.memory_space<vmem>>, %arg4: memref<2x8xi32, #tpu.memory_space<vmem>>) attributes {dimension_semantics = [#tpu.dimension_semantics<parallel>], iteration_bounds = array<i64: 1>, scalar_prefetch = 0 : i64, scratch_operands = 0 : i64, tpu.core_type = #tpu.core_type<tc>, window_params = [{transform_indices = @transform_0, window_bounds = array<i64: 3, 2, 128>}, {transform_indices = @transform_1, window_bounds = array<i64: 2, 7, 128>}, {transform_indices = @transform_2, window_bounds = array<i64: 2, 8, 128>}, {transform_indices = @transform_3, window_bounds = array<i64: 2, 8>}]} {
    %c0 = arith.constant 0 : index
    %c0_0 = arith.constant 0 : index
    %c0_1 = arith.constant 0 : index
    %0 = vector.load %arg1[%c0, %c0_0, %c0_1] : memref<3x2x128xf32, #tpu.memory_space<vmem>>, vector<1x2x128xf32>
    %1 = vector.shape_cast %0 : vector<1x2x128xf32> to vector<2x128xf32>
    %c1 = arith.constant 1 : index
    %c0_2 = arith.constant 0 : index
    %c0_3 = arith.constant 0 : index
    %2 = vector.load %arg1[%c1, %c0_2, %c0_3] : memref<3x2x128xf32, #tpu.memory_space<vmem>>, vector<1x2x128xf32>
    %3 = vector.shape_cast %2 : vector<1x2x128xf32> to vector<2x128xf32>
    %c2 = arith.constant 2 : index
    %c0_4 = arith.constant 0 : index
    %c0_5 = arith.constant 0 : index
    %4 = vector.load %arg1[%c2, %c0_4, %c0_5] : memref<3x2x128xf32, #tpu.memory_space<vmem>>, vector<1x2x128xf32>
    %5 = vector.shape_cast %4 : vector<1x2x128xf32> to vector<2x128xf32>
    %6 = tpu.iota {dimensions = array<i32: 1>} : vector<1x128xi32>
    %7 = tpu.iota {dimensions = array<i32: 1>} : vector<1x8xi32>
    %c0_i32 = arith.constant 0 : i32
    %8 = vector.broadcast %c0_i32 : i32 to vector<2x1xi32>
    %cst = arith.constant 1.000000e+10 : f32
    %9 = vector.broadcast %cst : f32 to vector<2x128xf32>
    %c0_i32_6 = arith.constant 0 : i32
    %10 = vector.broadcast %c0_i32_6 : i32 to vector<2x8xi32>
    %c0_i32_7 = arith.constant 0 : i32
    %11 = vector.broadcast %c0_i32_7 : i32 to vector<1x8xi32>
    %12 = arith.cmpi eq, %7, %11 : vector<1x8xi32>
    %13 = vector.shape_cast %12 : vector<1x8xi1> to vector<1x8xi1>
    %14 = vector.broadcast %13 : vector<1x8xi1> to vector<2x8xi1>
    %15 = vector.shape_cast %8 : vector<2x1xi32> to vector<2x1xi32>
    %16 = vector.broadcast %15 : vector<2x1xi32> to vector<2x8xi32>
    %17 = arith.select %14, %16, %10 : vector<2x8xi1>, vector<2x8xi32>
    %18 = vector.broadcast %6 : vector<1x128xi32> to vector<2x128xi32>
    %19 = vector.broadcast %8 : vector<2x1xi32> to vector<2x128xi32>
    %20 = arith.cmpi eq, %18, %19 : vector<2x128xi32>
    %cst_8 = arith.constant 0.000000e+00 : f32
    %21 = vector.broadcast %cst_8 : f32 to vector<2x128xf32>
    %22 = arith.select %20, %1, %21 : vector<2x128xi1>, vector<2x128xf32>
    %cst_9 = arith.constant dense<0.000000e+00> : vector<2xf32>
    %23 = vector.multi_reduction <add>, %22, %cst_9 [1] : vector<2x128xf32> to vector<2xf32>
    %24 = vector.shape_cast %23 : vector<2xf32> to vector<2x1xf32>
    %cst_10 = arith.constant 0.000000e+00 : f32
    %25 = vector.broadcast %cst_10 : f32 to vector<2x128xf32>
    %26 = arith.select %20, %3, %25 : vector<2x128xi1>, vector<2x128xf32>
    %cst_11 = arith.constant dense<0.000000e+00> : vector<2xf32>
    %27 = vector.multi_reduction <add>, %26, %cst_11 [1] : vector<2x128xf32> to vector<2xf32>
    %28 = vector.shape_cast %27 : vector<2xf32> to vector<2x1xf32>
    %cst_12 = arith.constant 0.000000e+00 : f32
    %29 = vector.broadcast %cst_12 : f32 to vector<2x128xf32>
    %30 = arith.select %20, %5, %29 : vector<2x128xi1>, vector<2x128xf32>
    %cst_13 = arith.constant dense<0.000000e+00> : vector<2xf32>
    %31 = vector.multi_reduction <add>, %30, %cst_13 [1] : vector<2x128xf32> to vector<2xf32>
    %32 = vector.shape_cast %31 : vector<2xf32> to vector<2x1xf32>
    %33 = vector.broadcast %24 : vector<2x1xf32> to vector<2x128xf32>
    %34 = arith.subf %1, %33 : vector<2x128xf32>
    %35 = vector.broadcast %28 : vector<2x1xf32> to vector<2x128xf32>
    %36 = arith.subf %3, %35 : vector<2x128xf32>
    %37 = vector.broadcast %32 : vector<2x1xf32> to vector<2x128xf32>
    %38 = arith.subf %5, %37 : vector<2x128xf32>
    %39 = arith.mulf %34, %34 : vector<2x128xf32>
    %40 = arith.mulf %36, %36 : vector<2x128xf32>
    %41 = arith.addf %39, %40 : vector<2x128xf32>
    %42 = arith.mulf %38, %38 : vector<2x128xf32>
    %43 = arith.addf %41, %42 : vector<2x128xf32>
    %44 = arith.minimumf %9, %43 : vector<2x128xf32>
    %cst_14 = arith.constant dense<0xFF800000> : vector<2xf32>
    %45 = vector.multi_reduction <maximumf>, %44, %cst_14 [1] : vector<2x128xf32> to vector<2xf32>
    %46 = vector.shape_cast %45 : vector<2xf32> to vector<2x1xf32>
    %47 = vector.broadcast %46 : vector<2x1xf32> to vector<2x128xf32>
    %48 = arith.cmpf oeq, %44, %47 : vector<2x128xf32>
    %c128_i32 = arith.constant 128 : i32
    %49 = vector.shape_cast %6 : vector<1x128xi32> to vector<1x128xi32>
    %50 = vector.broadcast %49 : vector<1x128xi32> to vector<2x128xi32>
    %51 = vector.broadcast %c128_i32 : i32 to vector<2x128xi32>
    %52 = arith.select %48, %50, %51 : vector<2x128xi1>, vector<2x128xi32>
    %cst_15 = arith.constant dense<2147483647> : vector<2xi32>
    %53 = vector.multi_reduction <minsi>, %52, %cst_15 [1] : vector<2x128xi32> to vector<2xi32>
    %54 = vector.shape_cast %53 : vector<2xi32> to vector<2x1xi32>
    %c1_i32 = arith.constant 1 : i32
    %55 = vector.broadcast %c1_i32 : i32 to vector<1x8xi32>
    %56 = arith.cmpi eq, %7, %55 : vector<1x8xi32>
    %57 = vector.shape_cast %56 : vector<1x8xi1> to vector<1x8xi1>
    %58 = vector.broadcast %57 : vector<1x8xi1> to vector<2x8xi1>
    %59 = vector.shape_cast %54 : vector<2x1xi32> to vector<2x1xi32>
    %60 = vector.broadcast %59 : vector<2x1xi32> to vector<2x8xi32>
    %61 = arith.select %58, %60, %17 : vector<2x8xi1>, vector<2x8xi32>
    %62 = vector.broadcast %6 : vector<1x128xi32> to vector<2x128xi32>
    %63 = vector.broadcast %54 : vector<2x1xi32> to vector<2x128xi32>
    %64 = arith.cmpi eq, %62, %63 : vector<2x128xi32>
    %cst_16 = arith.constant 0.000000e+00 : f32
    %65 = vector.broadcast %cst_16 : f32 to vector<2x128xf32>
    %66 = arith.select %64, %1, %65 : vector<2x128xi1>, vector<2x128xf32>
    %cst_17 = arith.constant dense<0.000000e+00> : vector<2xf32>
    %67 = vector.multi_reduction <add>, %66, %cst_17 [1] : vector<2x128xf32> to vector<2xf32>
    %68 = vector.shape_cast %67 : vector<2xf32> to vector<2x1xf32>
    %cst_18 = arith.constant 0.000000e+00 : f32
    %69 = vector.broadcast %cst_18 : f32 to vector<2x128xf32>
    %70 = arith.select %64, %3, %69 : vector<2x128xi1>, vector<2x128xf32>
    %cst_19 = arith.constant dense<0.000000e+00> : vector<2xf32>
    %71 = vector.multi_reduction <add>, %70, %cst_19 [1] : vector<2x128xf32> to vector<2xf32>
    %72 = vector.shape_cast %71 : vector<2xf32> to vector<2x1xf32>
    %cst_20 = arith.constant 0.000000e+00 : f32
    %73 = vector.broadcast %cst_20 : f32 to vector<2x128xf32>
    %74 = arith.select %64, %5, %73 : vector<2x128xi1>, vector<2x128xf32>
    %cst_21 = arith.constant dense<0.000000e+00> : vector<2xf32>
    %75 = vector.multi_reduction <add>, %74, %cst_21 [1] : vector<2x128xf32> to vector<2xf32>
    %76 = vector.shape_cast %75 : vector<2xf32> to vector<2x1xf32>
    %77 = vector.broadcast %68 : vector<2x1xf32> to vector<2x128xf32>
    %78 = arith.subf %1, %77 : vector<2x128xf32>
    %79 = vector.broadcast %72 : vector<2x1xf32> to vector<2x128xf32>
    %80 = arith.subf %3, %79 : vector<2x128xf32>
    %81 = vector.broadcast %76 : vector<2x1xf32> to vector<2x128xf32>
    %82 = arith.subf %5, %81 : vector<2x128xf32>
    %83 = arith.mulf %78, %78 : vector<2x128xf32>
    %84 = arith.mulf %80, %80 : vector<2x128xf32>
    %85 = arith.addf %83, %84 : vector<2x128xf32>
    %86 = arith.mulf %82, %82 : vector<2x128xf32>
    %87 = arith.addf %85, %86 : vector<2x128xf32>
    %88 = arith.minimumf %44, %87 : vector<2x128xf32>
    %cst_22 = arith.constant dense<0xFF800000> : vector<2xf32>
    %89 = vector.multi_reduction <maximumf>, %88, %cst_22 [1] : vector<2x128xf32> to vector<2xf32>
    %90 = vector.shape_cast %89 : vector<2xf32> to vector<2x1xf32>
    %91 = vector.broadcast %90 : vector<2x1xf32> to vector<2x128xf32>
    %92 = arith.cmpf oeq, %88, %91 : vector<2x128xf32>
    %c128_i32_23 = arith.constant 128 : i32
    %93 = vector.shape_cast %6 : vector<1x128xi32> to vector<1x128xi32>
    %94 = vector.broadcast %93 : vector<1x128xi32> to vector<2x128xi32>
    %95 = vector.broadcast %c128_i32_23 : i32 to vector<2x128xi32>
    %96 = arith.select %92, %94, %95 : vector<2x128xi1>, vector<2x128xi32>
    %cst_24 = arith.constant dense<2147483647> : vector<2xi32>
    %97 = vector.multi_reduction <minsi>, %96, %cst_24 [1] : vector<2x128xi32> to vector<2xi32>
    %98 = vector.shape_cast %97 : vector<2xi32> to vector<2x1xi32>
    %c2_i32 = arith.constant 2 : i32
    %99 = vector.broadcast %c2_i32 : i32 to vector<1x8xi32>
    %100 = arith.cmpi eq, %7, %99 : vector<1x8xi32>
    %101 = vector.shape_cast %100 : vector<1x8xi1> to vector<1x8xi1>
    %102 = vector.broadcast %101 : vector<1x8xi1> to vector<2x8xi1>
    %103 = vector.shape_cast %98 : vector<2x1xi32> to vector<2x1xi32>
    %104 = vector.broadcast %103 : vector<2x1xi32> to vector<2x8xi32>
    %105 = arith.select %102, %104, %61 : vector<2x8xi1>, vector<2x8xi32>
    %106 = vector.broadcast %6 : vector<1x128xi32> to vector<2x128xi32>
    %107 = vector.broadcast %98 : vector<2x1xi32> to vector<2x128xi32>
    %108 = arith.cmpi eq, %106, %107 : vector<2x128xi32>
    %cst_25 = arith.constant 0.000000e+00 : f32
    %109 = vector.broadcast %cst_25 : f32 to vector<2x128xf32>
    %110 = arith.select %108, %1, %109 : vector<2x128xi1>, vector<2x128xf32>
    %cst_26 = arith.constant dense<0.000000e+00> : vector<2xf32>
    %111 = vector.multi_reduction <add>, %110, %cst_26 [1] : vector<2x128xf32> to vector<2xf32>
    %112 = vector.shape_cast %111 : vector<2xf32> to vector<2x1xf32>
    %cst_27 = arith.constant 0.000000e+00 : f32
    %113 = vector.broadcast %cst_27 : f32 to vector<2x128xf32>
    %114 = arith.select %108, %3, %113 : vector<2x128xi1>, vector<2x128xf32>
    %cst_28 = arith.constant dense<0.000000e+00> : vector<2xf32>
    %115 = vector.multi_reduction <add>, %114, %cst_28 [1] : vector<2x128xf32> to vector<2xf32>
    %116 = vector.shape_cast %115 : vector<2xf32> to vector<2x1xf32>
    %cst_29 = arith.constant 0.000000e+00 : f32
    %117 = vector.broadcast %cst_29 : f32 to vector<2x128xf32>
    %118 = arith.select %108, %5, %117 : vector<2x128xi1>, vector<2x128xf32>
    %cst_30 = arith.constant dense<0.000000e+00> : vector<2xf32>
    %119 = vector.multi_reduction <add>, %118, %cst_30 [1] : vector<2x128xf32> to vector<2xf32>
    %120 = vector.shape_cast %119 : vector<2xf32> to vector<2x1xf32>
    %121 = vector.broadcast %112 : vector<2x1xf32> to vector<2x128xf32>
    %122 = arith.subf %1, %121 : vector<2x128xf32>
    %123 = vector.broadcast %116 : vector<2x1xf32> to vector<2x128xf32>
    %124 = arith.subf %3, %123 : vector<2x128xf32>
    %125 = vector.broadcast %120 : vector<2x1xf32> to vector<2x128xf32>
    %126 = arith.subf %5, %125 : vector<2x128xf32>
    %127 = arith.mulf %122, %122 : vector<2x128xf32>
    %128 = arith.mulf %124, %124 : vector<2x128xf32>
    %129 = arith.addf %127, %128 : vector<2x128xf32>
    %130 = arith.mulf %126, %126 : vector<2x128xf32>
    %131 = arith.addf %129, %130 : vector<2x128xf32>
    %132 = arith.minimumf %88, %131 : vector<2x128xf32>
    %cst_31 = arith.constant dense<0xFF800000> : vector<2xf32>
    %133 = vector.multi_reduction <maximumf>, %132, %cst_31 [1] : vector<2x128xf32> to vector<2xf32>
    %134 = vector.shape_cast %133 : vector<2xf32> to vector<2x1xf32>
    %135 = vector.broadcast %134 : vector<2x1xf32> to vector<2x128xf32>
    %136 = arith.cmpf oeq, %132, %135 : vector<2x128xf32>
    %c128_i32_32 = arith.constant 128 : i32
    %137 = vector.shape_cast %6 : vector<1x128xi32> to vector<1x128xi32>
    %138 = vector.broadcast %137 : vector<1x128xi32> to vector<2x128xi32>
    %139 = vector.broadcast %c128_i32_32 : i32 to vector<2x128xi32>
    %140 = arith.select %136, %138, %139 : vector<2x128xi1>, vector<2x128xi32>
    %cst_33 = arith.constant dense<2147483647> : vector<2xi32>
    %141 = vector.multi_reduction <minsi>, %140, %cst_33 [1] : vector<2x128xi32> to vector<2xi32>
    %142 = vector.shape_cast %141 : vector<2xi32> to vector<2x1xi32>
    %c3_i32 = arith.constant 3 : i32
    %143 = vector.broadcast %c3_i32 : i32 to vector<1x8xi32>
    %144 = arith.cmpi eq, %7, %143 : vector<1x8xi32>
    %145 = vector.shape_cast %144 : vector<1x8xi1> to vector<1x8xi1>
    %146 = vector.broadcast %145 : vector<1x8xi1> to vector<2x8xi1>
    %147 = vector.shape_cast %142 : vector<2x1xi32> to vector<2x1xi32>
    %148 = vector.broadcast %147 : vector<2x1xi32> to vector<2x8xi32>
    %149 = arith.select %146, %148, %105 : vector<2x8xi1>, vector<2x8xi32>
    %150 = vector.broadcast %6 : vector<1x128xi32> to vector<2x128xi32>
    %151 = vector.broadcast %142 : vector<2x1xi32> to vector<2x128xi32>
    %152 = arith.cmpi eq, %150, %151 : vector<2x128xi32>
    %cst_34 = arith.constant 0.000000e+00 : f32
    %153 = vector.broadcast %cst_34 : f32 to vector<2x128xf32>
    %154 = arith.select %152, %1, %153 : vector<2x128xi1>, vector<2x128xf32>
    %cst_35 = arith.constant dense<0.000000e+00> : vector<2xf32>
    %155 = vector.multi_reduction <add>, %154, %cst_35 [1] : vector<2x128xf32> to vector<2xf32>
    %156 = vector.shape_cast %155 : vector<2xf32> to vector<2x1xf32>
    %cst_36 = arith.constant 0.000000e+00 : f32
    %157 = vector.broadcast %cst_36 : f32 to vector<2x128xf32>
    %158 = arith.select %152, %3, %157 : vector<2x128xi1>, vector<2x128xf32>
    %cst_37 = arith.constant dense<0.000000e+00> : vector<2xf32>
    %159 = vector.multi_reduction <add>, %158, %cst_37 [1] : vector<2x128xf32> to vector<2xf32>
    %160 = vector.shape_cast %159 : vector<2xf32> to vector<2x1xf32>
    %cst_38 = arith.constant 0.000000e+00 : f32
    %161 = vector.broadcast %cst_38 : f32 to vector<2x128xf32>
    %162 = arith.select %152, %5, %161 : vector<2x128xi1>, vector<2x128xf32>
    %cst_39 = arith.constant dense<0.000000e+00> : vector<2xf32>
    %163 = vector.multi_reduction <add>, %162, %cst_39 [1] : vector<2x128xf32> to vector<2xf32>
    %164 = vector.shape_cast %163 : vector<2xf32> to vector<2x1xf32>
    %165 = vector.broadcast %156 : vector<2x1xf32> to vector<2x128xf32>
    %166 = arith.subf %1, %165 : vector<2x128xf32>
    %167 = vector.broadcast %160 : vector<2x1xf32> to vector<2x128xf32>
    %168 = arith.subf %3, %167 : vector<2x128xf32>
    %169 = vector.broadcast %164 : vector<2x1xf32> to vector<2x128xf32>
    %170 = arith.subf %5, %169 : vector<2x128xf32>
    %171 = arith.mulf %166, %166 : vector<2x128xf32>
    %172 = arith.mulf %168, %168 : vector<2x128xf32>
    %173 = arith.addf %171, %172 : vector<2x128xf32>
    %174 = arith.mulf %170, %170 : vector<2x128xf32>
    %175 = arith.addf %173, %174 : vector<2x128xf32>
    %176 = arith.minimumf %132, %175 : vector<2x128xf32>
    %cst_40 = arith.constant dense<0xFF800000> : vector<2xf32>
    %177 = vector.multi_reduction <maximumf>, %176, %cst_40 [1] : vector<2x128xf32> to vector<2xf32>
    %178 = vector.shape_cast %177 : vector<2xf32> to vector<2x1xf32>
    %179 = vector.broadcast %178 : vector<2x1xf32> to vector<2x128xf32>
    %180 = arith.cmpf oeq, %176, %179 : vector<2x128xf32>
    %c128_i32_41 = arith.constant 128 : i32
    %181 = vector.shape_cast %6 : vector<1x128xi32> to vector<1x128xi32>
    %182 = vector.broadcast %181 : vector<1x128xi32> to vector<2x128xi32>
    %183 = vector.broadcast %c128_i32_41 : i32 to vector<2x128xi32>
    %184 = arith.select %180, %182, %183 : vector<2x128xi1>, vector<2x128xi32>
    %cst_42 = arith.constant dense<2147483647> : vector<2xi32>
    %185 = vector.multi_reduction <minsi>, %184, %cst_42 [1] : vector<2x128xi32> to vector<2xi32>
    %186 = vector.shape_cast %185 : vector<2xi32> to vector<2x1xi32>
    %c4_i32 = arith.constant 4 : i32
    %187 = vector.broadcast %c4_i32 : i32 to vector<1x8xi32>
    %188 = arith.cmpi eq, %7, %187 : vector<1x8xi32>
    %189 = vector.shape_cast %188 : vector<1x8xi1> to vector<1x8xi1>
    %190 = vector.broadcast %189 : vector<1x8xi1> to vector<2x8xi1>
    %191 = vector.shape_cast %186 : vector<2x1xi32> to vector<2x1xi32>
    %192 = vector.broadcast %191 : vector<2x1xi32> to vector<2x8xi32>
    %193 = arith.select %190, %192, %149 : vector<2x8xi1>, vector<2x8xi32>
    %194 = vector.broadcast %6 : vector<1x128xi32> to vector<2x128xi32>
    %195 = vector.broadcast %186 : vector<2x1xi32> to vector<2x128xi32>
    %196 = arith.cmpi eq, %194, %195 : vector<2x128xi32>
    %cst_43 = arith.constant 0.000000e+00 : f32
    %197 = vector.broadcast %cst_43 : f32 to vector<2x128xf32>
    %198 = arith.select %196, %1, %197 : vector<2x128xi1>, vector<2x128xf32>
    %cst_44 = arith.constant dense<0.000000e+00> : vector<2xf32>
    %199 = vector.multi_reduction <add>, %198, %cst_44 [1] : vector<2x128xf32> to vector<2xf32>
    %200 = vector.shape_cast %199 : vector<2xf32> to vector<2x1xf32>
    %cst_45 = arith.constant 0.000000e+00 : f32
    %201 = vector.broadcast %cst_45 : f32 to vector<2x128xf32>
    %202 = arith.select %196, %3, %201 : vector<2x128xi1>, vector<2x128xf32>
    %cst_46 = arith.constant dense<0.000000e+00> : vector<2xf32>
    %203 = vector.multi_reduction <add>, %202, %cst_46 [1] : vector<2x128xf32> to vector<2xf32>
    %204 = vector.shape_cast %203 : vector<2xf32> to vector<2x1xf32>
    %cst_47 = arith.constant 0.000000e+00 : f32
    %205 = vector.broadcast %cst_47 : f32 to vector<2x128xf32>
    %206 = arith.select %196, %5, %205 : vector<2x128xi1>, vector<2x128xf32>
    %cst_48 = arith.constant dense<0.000000e+00> : vector<2xf32>
    %207 = vector.multi_reduction <add>, %206, %cst_48 [1] : vector<2x128xf32> to vector<2xf32>
    %208 = vector.shape_cast %207 : vector<2xf32> to vector<2x1xf32>
    %209 = vector.broadcast %200 : vector<2x1xf32> to vector<2x128xf32>
    %210 = arith.subf %1, %209 : vector<2x128xf32>
    %211 = vector.broadcast %204 : vector<2x1xf32> to vector<2x128xf32>
    %212 = arith.subf %3, %211 : vector<2x128xf32>
    %213 = vector.broadcast %208 : vector<2x1xf32> to vector<2x128xf32>
    %214 = arith.subf %5, %213 : vector<2x128xf32>
    %215 = arith.mulf %210, %210 : vector<2x128xf32>
    %216 = arith.mulf %212, %212 : vector<2x128xf32>
    %217 = arith.addf %215, %216 : vector<2x128xf32>
    %218 = arith.mulf %214, %214 : vector<2x128xf32>
    %219 = arith.addf %217, %218 : vector<2x128xf32>
    %220 = arith.minimumf %176, %219 : vector<2x128xf32>
    %cst_49 = arith.constant dense<0xFF800000> : vector<2xf32>
    %221 = vector.multi_reduction <maximumf>, %220, %cst_49 [1] : vector<2x128xf32> to vector<2xf32>
    %222 = vector.shape_cast %221 : vector<2xf32> to vector<2x1xf32>
    %223 = vector.broadcast %222 : vector<2x1xf32> to vector<2x128xf32>
    %224 = arith.cmpf oeq, %220, %223 : vector<2x128xf32>
    %c128_i32_50 = arith.constant 128 : i32
    %225 = vector.shape_cast %6 : vector<1x128xi32> to vector<1x128xi32>
    %226 = vector.broadcast %225 : vector<1x128xi32> to vector<2x128xi32>
    %227 = vector.broadcast %c128_i32_50 : i32 to vector<2x128xi32>
    %228 = arith.select %224, %226, %227 : vector<2x128xi1>, vector<2x128xi32>
    %cst_51 = arith.constant dense<2147483647> : vector<2xi32>
    %229 = vector.multi_reduction <minsi>, %228, %cst_51 [1] : vector<2x128xi32> to vector<2xi32>
    %230 = vector.shape_cast %229 : vector<2xi32> to vector<2x1xi32>
    %c5_i32 = arith.constant 5 : i32
    %231 = vector.broadcast %c5_i32 : i32 to vector<1x8xi32>
    %232 = arith.cmpi eq, %7, %231 : vector<1x8xi32>
    %233 = vector.shape_cast %232 : vector<1x8xi1> to vector<1x8xi1>
    %234 = vector.broadcast %233 : vector<1x8xi1> to vector<2x8xi1>
    %235 = vector.shape_cast %230 : vector<2x1xi32> to vector<2x1xi32>
    %236 = vector.broadcast %235 : vector<2x1xi32> to vector<2x8xi32>
    %237 = arith.select %234, %236, %193 : vector<2x8xi1>, vector<2x8xi32>
    %238 = vector.broadcast %6 : vector<1x128xi32> to vector<2x128xi32>
    %239 = vector.broadcast %230 : vector<2x1xi32> to vector<2x128xi32>
    %240 = arith.cmpi eq, %238, %239 : vector<2x128xi32>
    %cst_52 = arith.constant 0.000000e+00 : f32
    %241 = vector.broadcast %cst_52 : f32 to vector<2x128xf32>
    %242 = arith.select %240, %1, %241 : vector<2x128xi1>, vector<2x128xf32>
    %cst_53 = arith.constant dense<0.000000e+00> : vector<2xf32>
    %243 = vector.multi_reduction <add>, %242, %cst_53 [1] : vector<2x128xf32> to vector<2xf32>
    %244 = vector.shape_cast %243 : vector<2xf32> to vector<2x1xf32>
    %cst_54 = arith.constant 0.000000e+00 : f32
    %245 = vector.broadcast %cst_54 : f32 to vector<2x128xf32>
    %246 = arith.select %240, %3, %245 : vector<2x128xi1>, vector<2x128xf32>
    %cst_55 = arith.constant dense<0.000000e+00> : vector<2xf32>
    %247 = vector.multi_reduction <add>, %246, %cst_55 [1] : vector<2x128xf32> to vector<2xf32>
    %248 = vector.shape_cast %247 : vector<2xf32> to vector<2x1xf32>
    %cst_56 = arith.constant 0.000000e+00 : f32
    %249 = vector.broadcast %cst_56 : f32 to vector<2x128xf32>
    %250 = arith.select %240, %5, %249 : vector<2x128xi1>, vector<2x128xf32>
    %cst_57 = arith.constant dense<0.000000e+00> : vector<2xf32>
    %251 = vector.multi_reduction <add>, %250, %cst_57 [1] : vector<2x128xf32> to vector<2xf32>
    %252 = vector.shape_cast %251 : vector<2xf32> to vector<2x1xf32>
    %253 = vector.broadcast %244 : vector<2x1xf32> to vector<2x128xf32>
    %254 = arith.subf %1, %253 : vector<2x128xf32>
    %255 = vector.broadcast %248 : vector<2x1xf32> to vector<2x128xf32>
    %256 = arith.subf %3, %255 : vector<2x128xf32>
    %257 = vector.broadcast %252 : vector<2x1xf32> to vector<2x128xf32>
    %258 = arith.subf %5, %257 : vector<2x128xf32>
    %259 = arith.mulf %254, %254 : vector<2x128xf32>
    %260 = arith.mulf %256, %256 : vector<2x128xf32>
    %261 = arith.addf %259, %260 : vector<2x128xf32>
    %262 = arith.mulf %258, %258 : vector<2x128xf32>
    %263 = arith.addf %261, %262 : vector<2x128xf32>
    %264 = arith.minimumf %220, %263 : vector<2x128xf32>
    %cst_58 = arith.constant dense<0xFF800000> : vector<2xf32>
    %265 = vector.multi_reduction <maximumf>, %264, %cst_58 [1] : vector<2x128xf32> to vector<2xf32>
    %266 = vector.shape_cast %265 : vector<2xf32> to vector<2x1xf32>
    %267 = vector.broadcast %266 : vector<2x1xf32> to vector<2x128xf32>
    %268 = arith.cmpf oeq, %264, %267 : vector<2x128xf32>
    %c128_i32_59 = arith.constant 128 : i32
    %269 = vector.shape_cast %6 : vector<1x128xi32> to vector<1x128xi32>
    %270 = vector.broadcast %269 : vector<1x128xi32> to vector<2x128xi32>
    %271 = vector.broadcast %c128_i32_59 : i32 to vector<2x128xi32>
    %272 = arith.select %268, %270, %271 : vector<2x128xi1>, vector<2x128xi32>
    %cst_60 = arith.constant dense<2147483647> : vector<2xi32>
    %273 = vector.multi_reduction <minsi>, %272, %cst_60 [1] : vector<2x128xi32> to vector<2xi32>
    %274 = vector.shape_cast %273 : vector<2xi32> to vector<2x1xi32>
    %c6_i32 = arith.constant 6 : i32
    %275 = vector.broadcast %c6_i32 : i32 to vector<1x8xi32>
    %276 = arith.cmpi eq, %7, %275 : vector<1x8xi32>
    %277 = vector.shape_cast %276 : vector<1x8xi1> to vector<1x8xi1>
    %278 = vector.broadcast %277 : vector<1x8xi1> to vector<2x8xi1>
    %279 = vector.shape_cast %274 : vector<2x1xi32> to vector<2x1xi32>
    %280 = vector.broadcast %279 : vector<2x1xi32> to vector<2x8xi32>
    %281 = arith.select %278, %280, %237 : vector<2x8xi1>, vector<2x8xi32>
    %282 = vector.broadcast %6 : vector<1x128xi32> to vector<2x128xi32>
    %283 = vector.broadcast %274 : vector<2x1xi32> to vector<2x128xi32>
    %284 = arith.cmpi eq, %282, %283 : vector<2x128xi32>
    %cst_61 = arith.constant 0.000000e+00 : f32
    %285 = vector.broadcast %cst_61 : f32 to vector<2x128xf32>
    %286 = arith.select %284, %1, %285 : vector<2x128xi1>, vector<2x128xf32>
    %cst_62 = arith.constant dense<0.000000e+00> : vector<2xf32>
    %287 = vector.multi_reduction <add>, %286, %cst_62 [1] : vector<2x128xf32> to vector<2xf32>
    %288 = vector.shape_cast %287 : vector<2xf32> to vector<2x1xf32>
    %cst_63 = arith.constant 0.000000e+00 : f32
    %289 = vector.broadcast %cst_63 : f32 to vector<2x128xf32>
    %290 = arith.select %284, %3, %289 : vector<2x128xi1>, vector<2x128xf32>
    %cst_64 = arith.constant dense<0.000000e+00> : vector<2xf32>
    %291 = vector.multi_reduction <add>, %290, %cst_64 [1] : vector<2x128xf32> to vector<2xf32>
    %292 = vector.shape_cast %291 : vector<2xf32> to vector<2x1xf32>
    %cst_65 = arith.constant 0.000000e+00 : f32
    %293 = vector.broadcast %cst_65 : f32 to vector<2x128xf32>
    %294 = arith.select %284, %5, %293 : vector<2x128xi1>, vector<2x128xf32>
    %cst_66 = arith.constant dense<0.000000e+00> : vector<2xf32>
    %295 = vector.multi_reduction <add>, %294, %cst_66 [1] : vector<2x128xf32> to vector<2xf32>
    %296 = vector.shape_cast %295 : vector<2xf32> to vector<2x1xf32>
    %297 = vector.broadcast %288 : vector<2x1xf32> to vector<2x128xf32>
    %298 = arith.subf %1, %297 : vector<2x128xf32>
    %299 = vector.broadcast %292 : vector<2x1xf32> to vector<2x128xf32>
    %300 = arith.subf %3, %299 : vector<2x128xf32>
    %301 = vector.broadcast %296 : vector<2x1xf32> to vector<2x128xf32>
    %302 = arith.subf %5, %301 : vector<2x128xf32>
    %303 = arith.mulf %298, %298 : vector<2x128xf32>
    %304 = arith.mulf %300, %300 : vector<2x128xf32>
    %305 = arith.addf %303, %304 : vector<2x128xf32>
    %306 = arith.mulf %302, %302 : vector<2x128xf32>
    %307 = arith.addf %305, %306 : vector<2x128xf32>
    %308 = arith.minimumf %264, %307 : vector<2x128xf32>
    %cst_67 = arith.constant dense<0xFF800000> : vector<2xf32>
    %309 = vector.multi_reduction <maximumf>, %308, %cst_67 [1] : vector<2x128xf32> to vector<2xf32>
    %310 = vector.shape_cast %309 : vector<2xf32> to vector<2x1xf32>
    %311 = vector.broadcast %310 : vector<2x1xf32> to vector<2x128xf32>
    %312 = arith.cmpf oeq, %308, %311 : vector<2x128xf32>
    %c128_i32_68 = arith.constant 128 : i32
    %313 = vector.shape_cast %6 : vector<1x128xi32> to vector<1x128xi32>
    %314 = vector.broadcast %313 : vector<1x128xi32> to vector<2x128xi32>
    %315 = vector.broadcast %c128_i32_68 : i32 to vector<2x128xi32>
    %316 = arith.select %312, %314, %315 : vector<2x128xi1>, vector<2x128xi32>
    %cst_69 = arith.constant dense<2147483647> : vector<2xi32>
    %317 = vector.multi_reduction <minsi>, %316, %cst_69 [1] : vector<2x128xi32> to vector<2xi32>
    %318 = vector.shape_cast %317 : vector<2xi32> to vector<2x1xi32>
    %c7_i32 = arith.constant 7 : i32
    %319 = vector.broadcast %c7_i32 : i32 to vector<1x8xi32>
    %320 = arith.cmpi eq, %7, %319 : vector<1x8xi32>
    %321 = vector.shape_cast %320 : vector<1x8xi1> to vector<1x8xi1>
    %322 = vector.broadcast %321 : vector<1x8xi1> to vector<2x8xi1>
    %323 = vector.shape_cast %318 : vector<2x1xi32> to vector<2x1xi32>
    %324 = vector.broadcast %323 : vector<2x1xi32> to vector<2x8xi32>
    %325 = arith.select %322, %324, %281 : vector<2x8xi1>, vector<2x8xi32>
    %326 = vector.broadcast %6 : vector<1x128xi32> to vector<2x128xi32>
    %327 = vector.broadcast %318 : vector<2x1xi32> to vector<2x128xi32>
    %328 = arith.cmpi eq, %326, %327 : vector<2x128xi32>
    %cst_70 = arith.constant 0.000000e+00 : f32
    %329 = vector.broadcast %cst_70 : f32 to vector<2x128xf32>
    %330 = arith.select %328, %1, %329 : vector<2x128xi1>, vector<2x128xf32>
    %cst_71 = arith.constant dense<0.000000e+00> : vector<2xf32>
    %331 = vector.multi_reduction <add>, %330, %cst_71 [1] : vector<2x128xf32> to vector<2xf32>
    %332 = vector.shape_cast %331 : vector<2xf32> to vector<2x1xf32>
    %cst_72 = arith.constant 0.000000e+00 : f32
    %333 = vector.broadcast %cst_72 : f32 to vector<2x128xf32>
    %334 = arith.select %328, %3, %333 : vector<2x128xi1>, vector<2x128xf32>
    %cst_73 = arith.constant dense<0.000000e+00> : vector<2xf32>
    %335 = vector.multi_reduction <add>, %334, %cst_73 [1] : vector<2x128xf32> to vector<2xf32>
    %336 = vector.shape_cast %335 : vector<2xf32> to vector<2x1xf32>
    %cst_74 = arith.constant 0.000000e+00 : f32
    %337 = vector.broadcast %cst_74 : f32 to vector<2x128xf32>
    %338 = arith.select %328, %5, %337 : vector<2x128xi1>, vector<2x128xf32>
    %cst_75 = arith.constant dense<0.000000e+00> : vector<2xf32>
    %339 = vector.multi_reduction <add>, %338, %cst_75 [1] : vector<2x128xf32> to vector<2xf32>
    %340 = vector.shape_cast %339 : vector<2xf32> to vector<2x1xf32>
    %341 = vector.broadcast %332 : vector<2x1xf32> to vector<2x128xf32>
    %342 = arith.subf %1, %341 : vector<2x128xf32>
    %343 = vector.broadcast %336 : vector<2x1xf32> to vector<2x128xf32>
    %344 = arith.subf %3, %343 : vector<2x128xf32>
    %345 = vector.broadcast %340 : vector<2x1xf32> to vector<2x128xf32>
    %346 = arith.subf %5, %345 : vector<2x128xf32>
    %347 = arith.mulf %342, %342 : vector<2x128xf32>
    %348 = arith.mulf %344, %344 : vector<2x128xf32>
    %349 = arith.addf %347, %348 : vector<2x128xf32>
    %350 = arith.mulf %346, %346 : vector<2x128xf32>
    %351 = arith.addf %349, %350 : vector<2x128xf32>
    %352 = arith.minimumf %308, %351 : vector<2x128xf32>
    %cst_76 = arith.constant dense<0xFF800000> : vector<2xf32>
    %353 = vector.multi_reduction <maximumf>, %352, %cst_76 [1] : vector<2x128xf32> to vector<2xf32>
    %354 = vector.shape_cast %353 : vector<2xf32> to vector<2x1xf32>
    %355 = vector.broadcast %354 : vector<2x1xf32> to vector<2x128xf32>
    %356 = arith.cmpf oeq, %352, %355 : vector<2x128xf32>
    %c128_i32_77 = arith.constant 128 : i32
    %357 = vector.shape_cast %6 : vector<1x128xi32> to vector<1x128xi32>
    %358 = vector.broadcast %357 : vector<1x128xi32> to vector<2x128xi32>
    %359 = vector.broadcast %c128_i32_77 : i32 to vector<2x128xi32>
    %360 = arith.select %356, %358, %359 : vector<2x128xi1>, vector<2x128xi32>
    %cst_78 = arith.constant dense<2147483647> : vector<2xi32>
    %361 = vector.multi_reduction <minsi>, %360, %cst_78 [1] : vector<2x128xi32> to vector<2xi32>
    %362 = vector.shape_cast %361 : vector<2xi32> to vector<2x1xi32>
    %c8_i32 = arith.constant 8 : i32
    %c0_79 = arith.constant 0 : index
    %c0_80 = arith.constant 0 : index
    %363 = vector.load %arg4[%c0_79, %c0_80] : memref<2x8xi32, #tpu.memory_space<vmem>>, vector<2x8xi32>
    tpu.vector_store %arg4[%c0_79, %c0_80], %325 {strides = array<i32>} : memref<2x8xi32, #tpu.memory_space<vmem>>, vector<2x8xi32>,
    %364 = tpu.iota {dimensions = array<i32: 0>} : vector<128x1xi32>
    %365 = vector.extract_strided_slice %325 {offsets = [0, 0], sizes = [1, 8], strides = [1, 1]} : vector<2x8xi32> to vector<1x8xi32>
    %366 = vector.broadcast %364 : vector<128x1xi32> to vector<128x8xi32>
    %367 = vector.broadcast %365 : vector<1x8xi32> to vector<128x8xi32>
    %368 = arith.cmpi eq, %366, %367 : vector<128x8xi32>
    %369 = arith.extui %368 : vector<128x8xi1> to vector<128x8xi32>
    %370 = arith.sitofp %369 : vector<128x8xi32> to vector<128x8xf32>
    %371 = vector.shape_cast %370 : vector<128x8xf32> to vector<1x128x8xf32>
    %372 = vector.extract_strided_slice %325 {offsets = [1, 0], sizes = [1, 8], strides = [1, 1]} : vector<2x8xi32> to vector<1x8xi32>
    %373 = vector.broadcast %364 : vector<128x1xi32> to vector<128x8xi32>
    %374 = vector.broadcast %372 : vector<1x8xi32> to vector<128x8xi32>
    %375 = arith.cmpi eq, %373, %374 : vector<128x8xi32>
    %376 = arith.extui %375 : vector<128x8xi1> to vector<128x8xi32>
    %377 = arith.sitofp %376 : vector<128x8xi32> to vector<128x8xf32>
    %378 = vector.shape_cast %377 : vector<128x8xf32> to vector<1x128x8xf32>
    %379 = tpu.concatenate %371, %378 in 0 : vector<1x128x8xf32>, vector<1x128x8xf32> -> vector<2x128x8xf32>
    %c0_81 = arith.constant 0 : index
    %c0_82 = arith.constant 0 : index
    %c0_83 = arith.constant 0 : index
    %380 = vector.load %arg2[%c0_81, %c0_82, %c0_83] : memref<2x7x128xf32, #tpu.memory_space<vmem>>, vector<2x7x128xf32>
    "tpu.trace_start"() <{level = 10 : i32, message = "bcn,bng->bcg"}> : () -> ()
    %cst_84 = arith.constant dense<0.000000e+00> : vector<2x7x8xf32>
    %381 = tpu.matmul %380, %379, %cst_84 {dimension_numbers = #tpu.dot_dimension_numbers<[2], [1], [1], [2], [0, 0, 0, 1, 1, 2], [0], [0]>, precision = #tpu.contract_precision<fp32>} : vector<2x7x128xf32>, vector<2x128x8xf32>, vector<2x7x8xf32> -> vector<2x7x8xf32>
    "tpu.trace_stop"() : () -> ()
    %382 = tpu.iota {dimensions = array<i32: 1>} : vector<2x8x8xi32>
    %383 = tpu.iota {dimensions = array<i32: 2>} : vector<2x8x8xi32>
    %384 = arith.cmpi eq, %382, %383 : vector<2x8x8xi32>
    %385 = arith.extui %384 : vector<2x8x8xi1> to vector<2x8x8xi32>
    %386 = arith.sitofp %385 : vector<2x8x8xi32> to vector<2x8x8xf32>
    "tpu.trace_start"() <{level = 10 : i32, message = "bgm,bcm->bgc"}> : () -> ()
    %cst_85 = arith.constant dense<0.000000e+00> : vector<2x8x7xf32>
    %387 = tpu.matmul %386, %381, %cst_85 {dimension_numbers = #tpu.dot_dimension_numbers<[2], [2], [1], [1], [0, 0, 0, 1, 1, 1], [0], [0]>, precision = #tpu.contract_precision<fp32>} : vector<2x8x8xf32>, vector<2x7x8xf32>, vector<2x8x7xf32> -> vector<2x8x7xf32>
    "tpu.trace_stop"() : () -> ()
    %388 = tpu.iota {dimensions = array<i32: 2>} : vector<1x1x128xi32>
    %389 = vector.extract_strided_slice %380 {offsets = [0, 0, 0], sizes = [2, 1, 128], strides = [1, 1, 1]} : vector<2x7x128xf32> to vector<2x1x128xf32>
    %390 = vector.extract_strided_slice %387 {offsets = [0, 0, 0], sizes = [2, 8, 1], strides = [1, 1, 1]} : vector<2x8x7xf32> to vector<2x8x1xf32>
    %391 = vector.broadcast %389 : vector<2x1x128xf32> to vector<2x8x128xf32>
    %392 = vector.broadcast %390 : vector<2x8x1xf32> to vector<2x8x128xf32>
    %393 = arith.subf %391, %392 : vector<2x8x128xf32>
    %394 = arith.mulf %393, %393 : vector<2x8x128xf32>
    %395 = vector.extract_strided_slice %380 {offsets = [0, 1, 0], sizes = [2, 1, 128], strides = [1, 1, 1]} : vector<2x7x128xf32> to vector<2x1x128xf32>
    %396 = vector.extract_strided_slice %387 {offsets = [0, 0, 1], sizes = [2, 8, 1], strides = [1, 1, 1]} : vector<2x8x7xf32> to vector<2x8x1xf32>
    %397 = vector.broadcast %395 : vector<2x1x128xf32> to vector<2x8x128xf32>
    %398 = vector.broadcast %396 : vector<2x8x1xf32> to vector<2x8x128xf32>
    %399 = arith.subf %397, %398 : vector<2x8x128xf32>
    %400 = arith.mulf %399, %399 : vector<2x8x128xf32>
    %401 = arith.addf %394, %400 : vector<2x8x128xf32>
    %402 = vector.extract_strided_slice %380 {offsets = [0, 2, 0], sizes = [2, 1, 128], strides = [1, 1, 1]} : vector<2x7x128xf32> to vector<2x1x128xf32>
    %403 = vector.extract_strided_slice %387 {offsets = [0, 0, 2], sizes = [2, 8, 1], strides = [1, 1, 1]} : vector<2x8x7xf32> to vector<2x8x1xf32>
    %404 = vector.broadcast %402 : vector<2x1x128xf32> to vector<2x8x128xf32>
    %405 = vector.broadcast %403 : vector<2x8x1xf32> to vector<2x8x128xf32>
    %406 = arith.subf %404, %405 : vector<2x8x128xf32>
    %407 = arith.mulf %406, %406 : vector<2x8x128xf32>
    %408 = arith.addf %401, %407 : vector<2x8x128xf32>
    %409 = vector.extract_strided_slice %380 {offsets = [0, 3, 0], sizes = [2, 1, 128], strides = [1, 1, 1]} : vector<2x7x128xf32> to vector<2x1x128xf32>
    %410 = vector.extract_strided_slice %387 {offsets = [0, 0, 3], sizes = [2, 8, 1], strides = [1, 1, 1]} : vector<2x8x7xf32> to vector<2x8x1xf32>
    %411 = vector.broadcast %410 : vector<2x8x1xf32> to vector<2x8x128xf32>
    %412 = vector.broadcast %409 : vector<2x1x128xf32> to vector<2x8x128xf32>
    %413 = arith.mulf %411, %412 : vector<2x8x128xf32>
    %414 = arith.mulf %409, %409 : vector<2x1x128xf32>
    %415 = arith.mulf %410, %410 : vector<2x8x1xf32>
    %416 = vector.extract_strided_slice %380 {offsets = [0, 4, 0], sizes = [2, 1, 128], strides = [1, 1, 1]} : vector<2x7x128xf32> to vector<2x1x128xf32>
    %417 = vector.extract_strided_slice %387 {offsets = [0, 0, 4], sizes = [2, 8, 1], strides = [1, 1, 1]} : vector<2x8x7xf32> to vector<2x8x1xf32>
    %418 = vector.broadcast %417 : vector<2x8x1xf32> to vector<2x8x128xf32>
    %419 = vector.broadcast %416 : vector<2x1x128xf32> to vector<2x8x128xf32>
    %420 = arith.mulf %418, %419 : vector<2x8x128xf32>
    %421 = arith.mulf %416, %416 : vector<2x1x128xf32>
    %422 = arith.mulf %417, %417 : vector<2x8x1xf32>
    %423 = arith.addf %413, %420 : vector<2x8x128xf32>
    %424 = arith.addf %414, %421 : vector<2x1x128xf32>
    %425 = arith.addf %415, %422 : vector<2x8x1xf32>
    %426 = vector.extract_strided_slice %380 {offsets = [0, 5, 0], sizes = [2, 1, 128], strides = [1, 1, 1]} : vector<2x7x128xf32> to vector<2x1x128xf32>
    %427 = vector.extract_strided_slice %387 {offsets = [0, 0, 5], sizes = [2, 8, 1], strides = [1, 1, 1]} : vector<2x8x7xf32> to vector<2x8x1xf32>
    %428 = vector.broadcast %427 : vector<2x8x1xf32> to vector<2x8x128xf32>
    %429 = vector.broadcast %426 : vector<2x1x128xf32> to vector<2x8x128xf32>
    %430 = arith.mulf %428, %429 : vector<2x8x128xf32>
    %431 = arith.mulf %426, %426 : vector<2x1x128xf32>
    %432 = arith.mulf %427, %427 : vector<2x8x1xf32>
    %433 = arith.addf %423, %430 : vector<2x8x128xf32>
    %434 = arith.addf %424, %431 : vector<2x1x128xf32>
    %435 = arith.addf %425, %432 : vector<2x8x1xf32>
    %436 = vector.extract_strided_slice %380 {offsets = [0, 6, 0], sizes = [2, 1, 128], strides = [1, 1, 1]} : vector<2x7x128xf32> to vector<2x1x128xf32>
    %437 = vector.extract_strided_slice %387 {offsets = [0, 0, 6], sizes = [2, 8, 1], strides = [1, 1, 1]} : vector<2x8x7xf32> to vector<2x8x1xf32>
    %438 = vector.broadcast %437 : vector<2x8x1xf32> to vector<2x8x128xf32>
    %439 = vector.broadcast %436 : vector<2x1x128xf32> to vector<2x8x128xf32>
    %440 = arith.mulf %438, %439 : vector<2x8x128xf32>
    %441 = arith.mulf %436, %436 : vector<2x1x128xf32>
    %442 = arith.mulf %437, %437 : vector<2x8x1xf32>
    %443 = arith.addf %433, %440 : vector<2x8x128xf32>
    %444 = arith.addf %434, %441 : vector<2x1x128xf32>
    %445 = arith.addf %435, %442 : vector<2x8x1xf32>
    %446 = math.sqrt %445 : vector<2x8x1xf32>
    %447 = math.sqrt %444 : vector<2x1x128xf32>
    %448 = vector.broadcast %446 : vector<2x8x1xf32> to vector<2x8x128xf32>
    %449 = vector.broadcast %447 : vector<2x1x128xf32> to vector<2x8x128xf32>
    %450 = arith.mulf %448, %449 : vector<2x8x128xf32>
    %cst_86 = arith.constant 2.000000e+00 : f32
    %451 = vector.broadcast %cst_86 : f32 to vector<2x8x128xf32>
    %452 = arith.mulf %451, %450 : vector<2x8x128xf32>
    %453 = arith.subf %450, %443 : vector<2x8x128xf32>
    %454 = arith.mulf %452, %453 : vector<2x8x128xf32>
    %cst_87 = arith.constant 0.000000e+00 : f32
    %455 = vector.broadcast %cst_87 : f32 to vector<2x8x128xf32>
    %456 = arith.maximumf %454, %455 : vector<2x8x128xf32>
    %cst_88 = arith.constant 2.000000e+00 : f32
    %457 = vector.broadcast %cst_88 : f32 to vector<2x8x128xf32>
    %458 = arith.mulf %457, %450 : vector<2x8x128xf32>
    %459 = arith.addf %450, %443 : vector<2x8x128xf32>
    %460 = arith.mulf %458, %459 : vector<2x8x128xf32>
    %cst_89 = arith.constant 0.000000e+00 : f32
    %461 = vector.broadcast %cst_89 : f32 to vector<2x8x128xf32>
    %462 = arith.maximumf %460, %461 : vector<2x8x128xf32>
    %cst_90 = arith.constant 0.000000e+00 : f32
    %463 = vector.broadcast %cst_90 : f32 to vector<2x8x128xf32>
    %464 = arith.cmpf ogt, %462, %463 : vector<2x8x128xf32>
    %465 = math.sqrt %456 : vector<2x8x128xf32>
    %cst_91 = arith.constant 1.000000e+00 : f32
    %466 = vector.broadcast %cst_91 : f32 to vector<2x8x128xf32>
    %467 = arith.select %464, %462, %466 : vector<2x8x128xi1>, vector<2x8x128xf32>
    %468 = math.rsqrt %467 : vector<2x8x128xf32>
    %469 = arith.mulf %465, %468 : vector<2x8x128xf32>
    %cst_92 = arith.constant 2.41421366 : f32
    %470 = vector.broadcast %cst_92 : f32 to vector<2x8x128xf32>
    %471 = arith.cmpf ogt, %469, %470 : vector<2x8x128xf32>
    %cst_93 = arith.constant 0.414213568 : f32
    %472 = vector.broadcast %cst_93 : f32 to vector<2x8x128xf32>
    %473 = arith.cmpf ogt, %469, %472 : vector<2x8x128xf32>
    %cst_94 = arith.constant dense<true> : vector<2x8x128xi1>
    %474 = arith.xori %471, %cst_94 : vector<2x8x128xi1>
    %475 = arith.andi %473, %474 : vector<2x8x128xi1>
    %cst_95 = arith.constant 1.000000e+00 : f32
    %476 = vector.broadcast %cst_95 : f32 to vector<2x8x128xf32>
    %477 = arith.addf %469, %476 : vector<2x8x128xf32>
    %478 = arith.select %471, %469, %477 : vector<2x8x128xi1>, vector<2x8x128xf32>
    %cst_96 = arith.constant 1.000000e+00 : f32
    %479 = vector.broadcast %cst_96 : f32 to vector<2x8x128xf32>
    %480 = arith.divf %479, %478 : vector<2x8x128xf32>
    %cst_97 = arith.constant 0.000000e+00 : f32
    %481 = vector.broadcast %cst_97 : f32 to vector<2x8x128xf32>
    %482 = arith.subf %481, %480 : vector<2x8x128xf32>
    %cst_98 = arith.constant 1.000000e+00 : f32
    %483 = vector.broadcast %cst_98 : f32 to vector<2x8x128xf32>
    %484 = arith.subf %469, %483 : vector<2x8x128xf32>
    %485 = arith.mulf %484, %480 : vector<2x8x128xf32>
    %486 = arith.select %475, %485, %469 : vector<2x8x128xi1>, vector<2x8x128xf32>
    %487 = arith.select %471, %482, %486 : vector<2x8x128xi1>, vector<2x8x128xf32>
    %cst_99 = arith.constant 0.785398185 : f32
    %cst_100 = arith.constant 0.000000e+00 : f32
    %488 = vector.broadcast %cst_99 : f32 to vector<2x8x128xf32>
    %489 = vector.broadcast %cst_100 : f32 to vector<2x8x128xf32>
    %490 = arith.select %475, %488, %489 : vector<2x8x128xi1>, vector<2x8x128xf32>
    %cst_101 = arith.constant 1.57079637 : f32
    %491 = vector.broadcast %cst_101 : f32 to vector<2x8x128xf32>
    %492 = arith.select %471, %491, %490 : vector<2x8x128xi1>, vector<2x8x128xf32>
    %493 = arith.mulf %487, %487 : vector<2x8x128xf32>
    %cst_102 = arith.constant 0.0805374458 : f32
    %494 = vector.broadcast %cst_102 : f32 to vector<2x8x128xf32>
    %495 = arith.mulf %494, %493 : vector<2x8x128xf32>
    %cst_103 = arith.constant 0.138776854 : f32
    %496 = vector.broadcast %cst_103 : f32 to vector<2x8x128xf32>
    %497 = arith.subf %495, %496 : vector<2x8x128xf32>
    %498 = arith.mulf %497, %493 : vector<2x8x128xf32>
    %cst_104 = arith.constant 0.199777111 : f32
    %499 = vector.broadcast %cst_104 : f32 to vector<2x8x128xf32>
    %500 = arith.addf %498, %499 : vector<2x8x128xf32>
    %501 = arith.mulf %500, %493 : vector<2x8x128xf32>
    %cst_105 = arith.constant 0.333329499 : f32
    %502 = vector.broadcast %cst_105 : f32 to vector<2x8x128xf32>
    %503 = arith.subf %501, %502 : vector<2x8x128xf32>
    %504 = arith.mulf %503, %493 : vector<2x8x128xf32>
    %505 = arith.mulf %504, %487 : vector<2x8x128xf32>
    %506 = arith.addf %505, %487 : vector<2x8x128xf32>
    %507 = arith.addf %492, %506 : vector<2x8x128xf32>
    %cst_106 = arith.constant 0.000000e+00 : f32
    %508 = vector.broadcast %cst_106 : f32 to vector<2x8x128xf32>
    %509 = arith.cmpf ogt, %456, %508 : vector<2x8x128xf32>
    %cst_107 = arith.constant 1.57079637 : f32
    %cst_108 = arith.constant 0.000000e+00 : f32
    %510 = vector.broadcast %cst_107 : f32 to vector<2x8x128xf32>
    %511 = vector.broadcast %cst_108 : f32 to vector<2x8x128xf32>
    %512 = arith.select %509, %510, %511 : vector<2x8x128xi1>, vector<2x8x128xf32>
    %513 = arith.select %464, %507, %512 : vector<2x8x128xi1>, vector<2x8x128xf32>
    %cst_109 = arith.constant 2.000000e+00 : f32
    %514 = vector.broadcast %cst_109 : f32 to vector<2x8x128xf32>
    %515 = arith.mulf %514, %513 : vector<2x8x128xf32>
    %cst_110 = arith.constant 0.000000e+00 : f32
    %516 = vector.broadcast %cst_110 : f32 to vector<2x8x1xf32>
    %c0_i32_111 = arith.constant 0 : i32
    %cst_112 = arith.constant dense<0x7F800000> : vector<2x8xf32>
    %517 = vector.multi_reduction <minimumf>, %408, %cst_112 [2] : vector<2x8x128xf32> to vector<2x8xf32>
    %518 = vector.shape_cast %517 : vector<2x8xf32> to vector<2x8x1xf32>
    %519 = vector.broadcast %518 : vector<2x8x1xf32> to vector<2x8x128xf32>
    %520 = arith.cmpf oeq, %408, %519 : vector<2x8x128xf32>
    %c128_i32_113 = arith.constant 128 : i32
    %521 = vector.shape_cast %388 : vector<1x1x128xi32> to vector<1x1x128xi32>
    %522 = vector.broadcast %521 : vector<1x1x128xi32> to vector<2x8x128xi32>
    %523 = vector.broadcast %c128_i32_113 : i32 to vector<2x8x128xi32>
    %524 = arith.select %520, %522, %523 : vector<2x8x128xi1>, vector<2x8x128xi32>
    %cst_114 = arith.constant dense<2147483647> : vector<2x8xi32>
    %525 = vector.multi_reduction <minsi>, %524, %cst_114 [2] : vector<2x8x128xi32> to vector<2x8xi32>
    %526 = vector.shape_cast %525 : vector<2x8xi32> to vector<2x8x1xi32>
    %527 = vector.broadcast %388 : vector<1x1x128xi32> to vector<2x8x128xi32>
    %528 = vector.broadcast %526 : vector<2x8x1xi32> to vector<2x8x128xi32>
    %529 = arith.cmpi eq, %527, %528 : vector<2x8x128xi32>
    %cst_115 = arith.constant 0.000000e+00 : f32
    %530 = vector.broadcast %cst_115 : f32 to vector<2x8x128xf32>
    %531 = arith.select %529, %515, %530 : vector<2x8x128xi1>, vector<2x8x128xf32>
    %cst_116 = arith.constant dense<0.000000e+00> : vector<2x8xf32>
    %532 = vector.multi_reduction <add>, %531, %cst_116 [2] : vector<2x8x128xf32> to vector<2x8xf32>
    %533 = vector.shape_cast %532 : vector<2x8xf32> to vector<2x8x1xf32>
    %c1_i32_117 = arith.constant 1 : i32
    %534 = arith.cmpi sge, %c0_i32_111, %c1_i32_117 : i32
    %cst_118 = arith.constant 0.000000e+00 : f32
    %535 = vector.broadcast %cst_118 : f32 to vector<2x8x1xf32>
    %536 = arith.select %534, %533, %535 : vector<2x8x1xf32>
    %537 = arith.addf %516, %536 : vector<2x8x1xf32>
    %cst_119 = arith.constant 0x7F800000 : f32
    %538 = vector.broadcast %cst_119 : f32 to vector<2x8x128xf32>
    %539 = arith.select %529, %538, %408 : vector<2x8x128xi1>, vector<2x8x128xf32>
    %c1_i32_120 = arith.constant 1 : i32
    %cst_121 = arith.constant dense<0x7F800000> : vector<2x8xf32>
    %540 = vector.multi_reduction <minimumf>, %539, %cst_121 [2] : vector<2x8x128xf32> to vector<2x8xf32>
    %541 = vector.shape_cast %540 : vector<2x8xf32> to vector<2x8x1xf32>
    %542 = vector.broadcast %541 : vector<2x8x1xf32> to vector<2x8x128xf32>
    %543 = arith.cmpf oeq, %539, %542 : vector<2x8x128xf32>
    %c128_i32_122 = arith.constant 128 : i32
    %544 = vector.shape_cast %388 : vector<1x1x128xi32> to vector<1x1x128xi32>
    %545 = vector.broadcast %544 : vector<1x1x128xi32> to vector<2x8x128xi32>
    %546 = vector.broadcast %c128_i32_122 : i32 to vector<2x8x128xi32>
    %547 = arith.select %543, %545, %546 : vector<2x8x128xi1>, vector<2x8x128xi32>
    %cst_123 = arith.constant dense<2147483647> : vector<2x8xi32>
    %548 = vector.multi_reduction <minsi>, %547, %cst_123 [2] : vector<2x8x128xi32> to vector<2x8xi32>
    %549 = vector.shape_cast %548 : vector<2x8xi32> to vector<2x8x1xi32>
    %550 = vector.broadcast %388 : vector<1x1x128xi32> to vector<2x8x128xi32>
    %551 = vector.broadcast %549 : vector<2x8x1xi32> to vector<2x8x128xi32>
    %552 = arith.cmpi eq, %550, %551 : vector<2x8x128xi32>
    %cst_124 = arith.constant 0.000000e+00 : f32
    %553 = vector.broadcast %cst_124 : f32 to vector<2x8x128xf32>
    %554 = arith.select %552, %515, %553 : vector<2x8x128xi1>, vector<2x8x128xf32>
    %cst_125 = arith.constant dense<0.000000e+00> : vector<2x8xf32>
    %555 = vector.multi_reduction <add>, %554, %cst_125 [2] : vector<2x8x128xf32> to vector<2x8xf32>
    %556 = vector.shape_cast %555 : vector<2x8xf32> to vector<2x8x1xf32>
    %c1_i32_126 = arith.constant 1 : i32
    %557 = arith.cmpi sge, %c1_i32_120, %c1_i32_126 : i32
    %cst_127 = arith.constant 0.000000e+00 : f32
    %558 = vector.broadcast %cst_127 : f32 to vector<2x8x1xf32>
    %559 = arith.select %557, %556, %558 : vector<2x8x1xf32>
    %560 = arith.addf %537, %559 : vector<2x8x1xf32>
    %cst_128 = arith.constant 0x7F800000 : f32
    %561 = vector.broadcast %cst_128 : f32 to vector<2x8x128xf32>
    %562 = arith.select %552, %561, %539 : vector<2x8x128xi1>, vector<2x8x128xf32>
    %c2_i32_129 = arith.constant 2 : i32
    %cst_130 = arith.constant dense<0x7F800000> : vector<2x8xf32>
    %563 = vector.multi_reduction <minimumf>, %562, %cst_130 [2] : vector<2x8x128xf32> to vector<2x8xf32>
    %564 = vector.shape_cast %563 : vector<2x8xf32> to vector<2x8x1xf32>
    %565 = vector.broadcast %564 : vector<2x8x1xf32> to vector<2x8x128xf32>
    %566 = arith.cmpf oeq, %562, %565 : vector<2x8x128xf32>
    %c128_i32_131 = arith.constant 128 : i32
    %567 = vector.shape_cast %388 : vector<1x1x128xi32> to vector<1x1x128xi32>
    %568 = vector.broadcast %567 : vector<1x1x128xi32> to vector<2x8x128xi32>
    %569 = vector.broadcast %c128_i32_131 : i32 to vector<2x8x128xi32>
    %570 = arith.select %566, %568, %569 : vector<2x8x128xi1>, vector<2x8x128xi32>
    %cst_132 = arith.constant dense<2147483647> : vector<2x8xi32>
    %571 = vector.multi_reduction <minsi>, %570, %cst_132 [2] : vector<2x8x128xi32> to vector<2x8xi32>
    %572 = vector.shape_cast %571 : vector<2x8xi32> to vector<2x8x1xi32>
    %573 = vector.broadcast %388 : vector<1x1x128xi32> to vector<2x8x128xi32>
    %574 = vector.broadcast %572 : vector<2x8x1xi32> to vector<2x8x128xi32>
    %575 = arith.cmpi eq, %573, %574 : vector<2x8x128xi32>
    %cst_133 = arith.constant 0.000000e+00 : f32
    %576 = vector.broadcast %cst_133 : f32 to vector<2x8x128xf32>
    %577 = arith.select %575, %515, %576 : vector<2x8x128xi1>, vector<2x8x128xf32>
    %cst_134 = arith.constant dense<0.000000e+00> : vector<2x8xf32>
    %578 = vector.multi_reduction <add>, %577, %cst_134 [2] : vector<2x8x128xf32> to vector<2x8xf32>
    %579 = vector.shape_cast %578 : vector<2x8xf32> to vector<2x8x1xf32>
    %c1_i32_135 = arith.constant 1 : i32
    %580 = arith.cmpi sge, %c2_i32_129, %c1_i32_135 : i32
    %cst_136 = arith.constant 0.000000e+00 : f32
    %581 = vector.broadcast %cst_136 : f32 to vector<2x8x1xf32>
    %582 = arith.select %580, %579, %581 : vector<2x8x1xf32>
    %583 = arith.addf %560, %582 : vector<2x8x1xf32>
    %cst_137 = arith.constant 0x7F800000 : f32
    %584 = vector.broadcast %cst_137 : f32 to vector<2x8x128xf32>
    %585 = arith.select %575, %584, %562 : vector<2x8x128xi1>, vector<2x8x128xf32>
    %c3_i32_138 = arith.constant 3 : i32
    %cst_139 = arith.constant dense<0x7F800000> : vector<2x8xf32>
    %586 = vector.multi_reduction <minimumf>, %585, %cst_139 [2] : vector<2x8x128xf32> to vector<2x8xf32>
    %587 = vector.shape_cast %586 : vector<2x8xf32> to vector<2x8x1xf32>
    %588 = vector.broadcast %587 : vector<2x8x1xf32> to vector<2x8x128xf32>
    %589 = arith.cmpf oeq, %585, %588 : vector<2x8x128xf32>
    %c128_i32_140 = arith.constant 128 : i32
    %590 = vector.shape_cast %388 : vector<1x1x128xi32> to vector<1x1x128xi32>
    %591 = vector.broadcast %590 : vector<1x1x128xi32> to vector<2x8x128xi32>
    %592 = vector.broadcast %c128_i32_140 : i32 to vector<2x8x128xi32>
    %593 = arith.select %589, %591, %592 : vector<2x8x128xi1>, vector<2x8x128xi32>
    %cst_141 = arith.constant dense<2147483647> : vector<2x8xi32>
    %594 = vector.multi_reduction <minsi>, %593, %cst_141 [2] : vector<2x8x128xi32> to vector<2x8xi32>
    %595 = vector.shape_cast %594 : vector<2x8xi32> to vector<2x8x1xi32>
    %596 = vector.broadcast %388 : vector<1x1x128xi32> to vector<2x8x128xi32>
    %597 = vector.broadcast %595 : vector<2x8x1xi32> to vector<2x8x128xi32>
    %598 = arith.cmpi eq, %596, %597 : vector<2x8x128xi32>
    %cst_142 = arith.constant 0.000000e+00 : f32
    %599 = vector.broadcast %cst_142 : f32 to vector<2x8x128xf32>
    %600 = arith.select %598, %515, %599 : vector<2x8x128xi1>, vector<2x8x128xf32>
    %cst_143 = arith.constant dense<0.000000e+00> : vector<2x8xf32>
    %601 = vector.multi_reduction <add>, %600, %cst_143 [2] : vector<2x8x128xf32> to vector<2x8xf32>
    %602 = vector.shape_cast %601 : vector<2x8xf32> to vector<2x8x1xf32>
    %c1_i32_144 = arith.constant 1 : i32
    %603 = arith.cmpi sge, %c3_i32_138, %c1_i32_144 : i32
    %cst_145 = arith.constant 0.000000e+00 : f32
    %604 = vector.broadcast %cst_145 : f32 to vector<2x8x1xf32>
    %605 = arith.select %603, %602, %604 : vector<2x8x1xf32>
    %606 = arith.addf %583, %605 : vector<2x8x1xf32>
    %cst_146 = arith.constant 0x7F800000 : f32
    %607 = vector.broadcast %cst_146 : f32 to vector<2x8x128xf32>
    %608 = arith.select %598, %607, %585 : vector<2x8x128xi1>, vector<2x8x128xf32>
    %c4_i32_147 = arith.constant 4 : i32
    %cst_148 = arith.constant dense<0x7F800000> : vector<2x8xf32>
    %609 = vector.multi_reduction <minimumf>, %608, %cst_148 [2] : vector<2x8x128xf32> to vector<2x8xf32>
    %610 = vector.shape_cast %609 : vector<2x8xf32> to vector<2x8x1xf32>
    %611 = vector.broadcast %610 : vector<2x8x1xf32> to vector<2x8x128xf32>
    %612 = arith.cmpf oeq, %608, %611 : vector<2x8x128xf32>
    %c128_i32_149 = arith.constant 128 : i32
    %613 = vector.shape_cast %388 : vector<1x1x128xi32> to vector<1x1x128xi32>
    %614 = vector.broadcast %613 : vector<1x1x128xi32> to vector<2x8x128xi32>
    %615 = vector.broadcast %c128_i32_149 : i32 to vector<2x8x128xi32>
    %616 = arith.select %612, %614, %615 : vector<2x8x128xi1>, vector<2x8x128xi32>
    %cst_150 = arith.constant dense<2147483647> : vector<2x8xi32>
    %617 = vector.multi_reduction <minsi>, %616, %cst_150 [2] : vector<2x8x128xi32> to vector<2x8xi32>
    %618 = vector.shape_cast %617 : vector<2x8xi32> to vector<2x8x1xi32>
    %619 = vector.broadcast %388 : vector<1x1x128xi32> to vector<2x8x128xi32>
    %620 = vector.broadcast %618 : vector<2x8x1xi32> to vector<2x8x128xi32>
    %621 = arith.cmpi eq, %619, %620 : vector<2x8x128xi32>
    %cst_151 = arith.constant 0.000000e+00 : f32
    %622 = vector.broadcast %cst_151 : f32 to vector<2x8x128xf32>
    %623 = arith.select %621, %515, %622 : vector<2x8x128xi1>, vector<2x8x128xf32>
    %cst_152 = arith.constant dense<0.000000e+00> : vector<2x8xf32>
    %624 = vector.multi_reduction <add>, %623, %cst_152 [2] : vector<2x8x128xf32> to vector<2x8xf32>
    %625 = vector.shape_cast %624 : vector<2x8xf32> to vector<2x8x1xf32>
    %c1_i32_153 = arith.constant 1 : i32
    %626 = arith.cmpi sge, %c4_i32_147, %c1_i32_153 : i32
    %cst_154 = arith.constant 0.000000e+00 : f32
    %627 = vector.broadcast %cst_154 : f32 to vector<2x8x1xf32>
    %628 = arith.select %626, %625, %627 : vector<2x8x1xf32>
    %629 = arith.addf %606, %628 : vector<2x8x1xf32>
    %cst_155 = arith.constant 0x7F800000 : f32
    %630 = vector.broadcast %cst_155 : f32 to vector<2x8x128xf32>
    %631 = arith.select %621, %630, %608 : vector<2x8x128xi1>, vector<2x8x128xf32>
    %c5_i32_156 = arith.constant 5 : i32
    %cst_157 = arith.constant dense<0x7F800000> : vector<2x8xf32>
    %632 = vector.multi_reduction <minimumf>, %631, %cst_157 [2] : vector<2x8x128xf32> to vector<2x8xf32>
    %633 = vector.shape_cast %632 : vector<2x8xf32> to vector<2x8x1xf32>
    %634 = vector.broadcast %633 : vector<2x8x1xf32> to vector<2x8x128xf32>
    %635 = arith.cmpf oeq, %631, %634 : vector<2x8x128xf32>
    %c128_i32_158 = arith.constant 128 : i32
    %636 = vector.shape_cast %388 : vector<1x1x128xi32> to vector<1x1x128xi32>
    %637 = vector.broadcast %636 : vector<1x1x128xi32> to vector<2x8x128xi32>
    %638 = vector.broadcast %c128_i32_158 : i32 to vector<2x8x128xi32>
    %639 = arith.select %635, %637, %638 : vector<2x8x128xi1>, vector<2x8x128xi32>
    %cst_159 = arith.constant dense<2147483647> : vector<2x8xi32>
    %640 = vector.multi_reduction <minsi>, %639, %cst_159 [2] : vector<2x8x128xi32> to vector<2x8xi32>
    %641 = vector.shape_cast %640 : vector<2x8xi32> to vector<2x8x1xi32>
    %642 = vector.broadcast %388 : vector<1x1x128xi32> to vector<2x8x128xi32>
    %643 = vector.broadcast %641 : vector<2x8x1xi32> to vector<2x8x128xi32>
    %644 = arith.cmpi eq, %642, %643 : vector<2x8x128xi32>
    %cst_160 = arith.constant 0.000000e+00 : f32
    %645 = vector.broadcast %cst_160 : f32 to vector<2x8x128xf32>
    %646 = arith.select %644, %515, %645 : vector<2x8x128xi1>, vector<2x8x128xf32>
    %cst_161 = arith.constant dense<0.000000e+00> : vector<2x8xf32>
    %647 = vector.multi_reduction <add>, %646, %cst_161 [2] : vector<2x8x128xf32> to vector<2x8xf32>
    %648 = vector.shape_cast %647 : vector<2x8xf32> to vector<2x8x1xf32>
    %c1_i32_162 = arith.constant 1 : i32
    %649 = arith.cmpi sge, %c5_i32_156, %c1_i32_162 : i32
    %cst_163 = arith.constant 0.000000e+00 : f32
    %650 = vector.broadcast %cst_163 : f32 to vector<2x8x1xf32>
    %651 = arith.select %649, %648, %650 : vector<2x8x1xf32>
    %652 = arith.addf %629, %651 : vector<2x8x1xf32>
    %cst_164 = arith.constant 0x7F800000 : f32
    %653 = vector.broadcast %cst_164 : f32 to vector<2x8x128xf32>
    %654 = arith.select %644, %653, %631 : vector<2x8x128xi1>, vector<2x8x128xf32>
    %c6_i32_165 = arith.constant 6 : i32
    %cst_166 = arith.constant dense<0x7F800000> : vector<2x8xf32>
    %655 = vector.multi_reduction <minimumf>, %654, %cst_166 [2] : vector<2x8x128xf32> to vector<2x8xf32>
    %656 = vector.shape_cast %655 : vector<2x8xf32> to vector<2x8x1xf32>
    %657 = vector.broadcast %656 : vector<2x8x1xf32> to vector<2x8x128xf32>
    %658 = arith.cmpf oeq, %654, %657 : vector<2x8x128xf32>
    %c128_i32_167 = arith.constant 128 : i32
    %659 = vector.shape_cast %388 : vector<1x1x128xi32> to vector<1x1x128xi32>
    %660 = vector.broadcast %659 : vector<1x1x128xi32> to vector<2x8x128xi32>
    %661 = vector.broadcast %c128_i32_167 : i32 to vector<2x8x128xi32>
    %662 = arith.select %658, %660, %661 : vector<2x8x128xi1>, vector<2x8x128xi32>
    %cst_168 = arith.constant dense<2147483647> : vector<2x8xi32>
    %663 = vector.multi_reduction <minsi>, %662, %cst_168 [2] : vector<2x8x128xi32> to vector<2x8xi32>
    %664 = vector.shape_cast %663 : vector<2x8xi32> to vector<2x8x1xi32>
    %665 = vector.broadcast %388 : vector<1x1x128xi32> to vector<2x8x128xi32>
    %666 = vector.broadcast %664 : vector<2x8x1xi32> to vector<2x8x128xi32>
    %667 = arith.cmpi eq, %665, %666 : vector<2x8x128xi32>
    %cst_169 = arith.constant 0.000000e+00 : f32
    %668 = vector.broadcast %cst_169 : f32 to vector<2x8x128xf32>
    %669 = arith.select %667, %515, %668 : vector<2x8x128xi1>, vector<2x8x128xf32>
    %cst_170 = arith.constant dense<0.000000e+00> : vector<2x8xf32>
    %670 = vector.multi_reduction <add>, %669, %cst_170 [2] : vector<2x8x128xf32> to vector<2x8xf32>
    %671 = vector.shape_cast %670 : vector<2x8xf32> to vector<2x8x1xf32>
    %c1_i32_171 = arith.constant 1 : i32
    %672 = arith.cmpi sge, %c6_i32_165, %c1_i32_171 : i32
    %cst_172 = arith.constant 0.000000e+00 : f32
    %673 = vector.broadcast %cst_172 : f32 to vector<2x8x1xf32>
    %674 = arith.select %672, %671, %673 : vector<2x8x1xf32>
    %675 = arith.addf %652, %674 : vector<2x8x1xf32>
    %cst_173 = arith.constant 0x7F800000 : f32
    %676 = vector.broadcast %cst_173 : f32 to vector<2x8x128xf32>
    %677 = arith.select %667, %676, %654 : vector<2x8x128xi1>, vector<2x8x128xf32>
    %c7_i32_174 = arith.constant 7 : i32
    %cst_175 = arith.constant dense<0x7F800000> : vector<2x8xf32>
    %678 = vector.multi_reduction <minimumf>, %677, %cst_175 [2] : vector<2x8x128xf32> to vector<2x8xf32>
    %679 = vector.shape_cast %678 : vector<2x8xf32> to vector<2x8x1xf32>
    %680 = vector.broadcast %679 : vector<2x8x1xf32> to vector<2x8x128xf32>
    %681 = arith.cmpf oeq, %677, %680 : vector<2x8x128xf32>
    %c128_i32_176 = arith.constant 128 : i32
    %682 = vector.shape_cast %388 : vector<1x1x128xi32> to vector<1x1x128xi32>
    %683 = vector.broadcast %682 : vector<1x1x128xi32> to vector<2x8x128xi32>
    %684 = vector.broadcast %c128_i32_176 : i32 to vector<2x8x128xi32>
    %685 = arith.select %681, %683, %684 : vector<2x8x128xi1>, vector<2x8x128xi32>
    %cst_177 = arith.constant dense<2147483647> : vector<2x8xi32>
    %686 = vector.multi_reduction <minsi>, %685, %cst_177 [2] : vector<2x8x128xi32> to vector<2x8xi32>
    %687 = vector.shape_cast %686 : vector<2x8xi32> to vector<2x8x1xi32>
    %688 = vector.broadcast %388 : vector<1x1x128xi32> to vector<2x8x128xi32>
    %689 = vector.broadcast %687 : vector<2x8x1xi32> to vector<2x8x128xi32>
    %690 = arith.cmpi eq, %688, %689 : vector<2x8x128xi32>
    %cst_178 = arith.constant 0.000000e+00 : f32
    %691 = vector.broadcast %cst_178 : f32 to vector<2x8x128xf32>
    %692 = arith.select %690, %515, %691 : vector<2x8x128xi1>, vector<2x8x128xf32>
    %cst_179 = arith.constant dense<0.000000e+00> : vector<2x8xf32>
    %693 = vector.multi_reduction <add>, %692, %cst_179 [2] : vector<2x8x128xf32> to vector<2x8xf32>
    %694 = vector.shape_cast %693 : vector<2x8xf32> to vector<2x8x1xf32>
    %c1_i32_180 = arith.constant 1 : i32
    %695 = arith.cmpi sge, %c7_i32_174, %c1_i32_180 : i32
    %cst_181 = arith.constant 0.000000e+00 : f32
    %696 = vector.broadcast %cst_181 : f32 to vector<2x8x1xf32>
    %697 = arith.select %695, %694, %696 : vector<2x8x1xf32>
    %698 = arith.addf %675, %697 : vector<2x8x1xf32>
    %cst_182 = arith.constant 0x7F800000 : f32
    %699 = vector.broadcast %cst_182 : f32 to vector<2x8x128xf32>
    %700 = arith.select %690, %699, %677 : vector<2x8x128xi1>, vector<2x8x128xf32>
    %c8_i32_183 = arith.constant 8 : i32
    %cst_184 = arith.constant 0.142857149 : f32
    %701 = vector.broadcast %cst_184 : f32 to vector<2x8x1xf32>
    %702 = arith.mulf %698, %701 : vector<2x8x1xf32>
    %cst_185 = arith.constant 0.000000e+00 : f32
    %703 = vector.broadcast %cst_185 : f32 to vector<2x8x120xf32>
    %704 = tpu.concatenate %387, %702, %703 in 2 : vector<2x8x7xf32>, vector<2x8x1xf32>, vector<2x8x120xf32> -> vector<2x8x128xf32>
    %c0_186 = arith.constant 0 : index
    %c0_187 = arith.constant 0 : index
    %c0_188 = arith.constant 0 : index
    %705 = vector.load %arg3[%c0_186, %c0_187, %c0_188] : memref<2x8x128xf32, #tpu.memory_space<vmem>>, vector<2x8x128xf32>
    tpu.vector_store %arg3[%c0_186, %c0_187, %c0_188], %704 {strides = array<i32>} : memref<2x8x128xf32, #tpu.memory_space<vmem>>, vector<2x8x128xf32>,
    return
  }
  func.func @transform_0(%arg0: i32) -> (i32, i32, i32) {
    %c0_i32 = arith.constant 0 : i32
    %c0_i32_0 = arith.constant 0 : i32
    %c0_i32_1 = arith.constant 0 : i32
    return %c0_i32, %arg0, %c0_i32_0 : i32, i32, i32
  }
  func.func @transform_1(%arg0: i32) -> (i32, i32, i32) {
    %c0_i32 = arith.constant 0 : i32
    %c0_i32_0 = arith.constant 0 : i32
    %c0_i32_1 = arith.constant 0 : i32
    return %arg0, %c0_i32, %c0_i32_0 : i32, i32, i32
  }
  func.func @transform_2(%arg0: i32) -> (i32, i32, i32) {
    %c0_i32 = arith.constant 0 : i32
    %c0_i32_0 = arith.constant 0 : i32
    %c0_i32_1 = arith.constant 0 : i32
    return %arg0, %c0_i32, %c0_i32_0 : i32, i32, i32
  }
  func.func @transform_3(%arg0: i32) -> (i32, i32) {
    %c0_i32 = arith.constant 0 : i32
    %c0_i32_0 = arith.constant 0 : i32
    return %arg0, %c0_i32 : i32, i32
  }
}

</mosaic_0001>

<llo_original>
// kernel: tpu_custom_call.1
$region0: #{tpu_custom_call.1}
  #allocation0 [shape = 'u32[]', space=smem, size = 0x4, offset = 0x4, fixed_abs, tag = 'smem constant byte address 0x4 - core index']
  #allocation1 [shape = 'u32[144,128]{1,0:T(1,128)}', space=vmem, size = 0x12000, scoped, tag = 'internal scratch']
  %s0 = inlined_call_operand.vmem [shape: f32[3,2,128], index: 0, kind: input, shape index: {}]
  %s1 = inlined_call_operand.vmem [shape: f32[2,7,128], index: 1, kind: input, shape index: {}]
  %s2 = inlined_call_operand.hbm [shape: f32[2,8,128], index: 2, kind: output, shape index: {0}]
  %s3 = inlined_call_operand.hbm [shape: s32[2,8], index: 3, kind: output, shape index: {1}]
  %4 = xla_tuple %s2, %s3
  %s5 = sld [smem:[#allocation0]]
  $region26: #{tpu_custom_call.1} parent=0
    _
  %s7 = ssub.s32 1, %s5
  %s8 = scalar_select 0, %s7, %s5
  $region1: #{tpu_custom_call.1} parent=0
    #allocation2 [shape = 'u8[8192]{0}', space=vmem, size = 0x2000, scoped, tag = 'output window, operand 0, single buffered']
    #allocation3 [shape = 's32[1]{0}', space=sflag, size = 0x4, scoped, tag = 'scoped memory for tpu_custom_call.1']
    #allocation4 [shape = 'u8[1024]{0}', space=vmem, size = 0x400, scoped, tag = 'output window, operand 1, single buffered']
    #allocation5 [shape = 's32[1]{0}', space=sflag, size = 0x4, scoped, tag = 'scoped memory for tpu_custom_call.1']
    %9 = vsyncpa [#allocation3], 0
    %10 = vsyncpa [#allocation5], 0
    // Predicated region
    $region2: #{tpu_custom_call.1} parent=1 // pred_check
      _
    $region3: #{tpu_custom_call.1} parent=1 // pred_check_branch
      %12 = sbr.rel (0) target = $region5
    $region4: #{tpu_custom_call.1} parent=1 // pred_region
      _
    $region5: #{tpu_custom_call.1} parent=1 // pred_fallthru
      _
    // Predicated region
    $region6: #{tpu_custom_call.1} parent=1 // pred_check
      _
    $region7: #{tpu_custom_call.1} parent=1 // pred_check_branch
      %14 = sbr.rel (0) target = $region9
    $region8: #{tpu_custom_call.1} parent=1 // pred_region
      _
    $region9: #{tpu_custom_call.1} parent=1 // pred_fallthru
      _
    %v15 = vld [vmem:[%s0] sm:$0x3]
    %s16 = scalar_lea.vmem %s0, 2
    %v17 = vld [vmem:[%s16] sm:$0x3]
    %s18 = scalar_lea.vmem %s0, 4
    %v19 = vld [vmem:[%s18] sm:$0x3]
    %v20 = vlaneseq
    %v21 = vand.u32 %v20, 127
    %vm22 = vcmp.eq.s32.totalorder %v21, 0
    %v23 = vsel %vm22, %v15, 0.0
    %vm24 = vcmask 1041408
    %v25 = vsel %vm24, %v23, 0.0
    %26 = vadd.xlane.f32.xlu0 %v25
    %v27 = vpop.xlane.xlu0 %26
    %v28 = vsel %vm22, %v17, 0.0
    %v29 = vsel %vm24, %v28, 0.0
    %30 = vadd.xlane.f32.xlu0 %v29
    %v31 = vpop.xlane.xlu0 %30
    %v32 = vsel %vm22, %v19, 0.0
    %v33 = vsel %vm24, %v32, 0.0
    %34 = vadd.xlane.f32.xlu0 %v33
    %v35 = vpop.xlane.xlu0 %34
    %v36 = vsub.f32 %v15, %v27
    %v37 = vsub.f32 %v17, %v31
    %v38 = vsub.f32 %v19, %v35
    %v39 = vmul.f32 %v36, %v36
    %v40 = vmul.f32 %v37, %v37
    %v41 = vadd.f32 %v39, %v40
    %v42 = vmul.f32 %v38, %v38
    %v43 = vadd.f32 %v41, %v42
    %v44 = vmin.f32 %v43, 1e+10
    %v45 = vsel %vm24, %v44, -inf
    %46 = vmax.xlane.f32.xlu0 %v45
    %v47 = vpop.xlane.xlu0 %46
    %vm48 = vcmp.eq.f32.partialorder %v44, %v47
    %v49 = vsel %vm48, %v21, 128
    %v50 = vsel %vm24, %v49, 2147483647
    %v51 = vand.u32 %v50, 65535
    %v52 = vshra.s32 %v50, 16
    %v53 = vcvt.s32.f32 %v51
    %v54 = vcvt.s32.f32 %v52
    %55 = vmin.xlane.f32.xlu0 %v54
    %v56 = vpop.xlane.xlu0 %55
    %vm57 = vcmp.eq.f32.partialorder %v54, %v56
    %v58 = vsel %vm57, %v53, inf
    %59 = vmin.xlane.f32.xlu0 %v58
    %v60 = vpop.xlane.xlu0 %59
    %v61 = vcvt.f32.s32 %v60
    %v62 = vcvt.f32.s32 %v56
    %v63 = vshll.u32 %v62, 16
    %v64 = vadd.s32 %v63, %v61
    %vm65 = vcmp.eq.s32.totalorder %v21, 1
    %v66 = vsel %vm65, 1, 0
    %vm67 = vcmp.eq.s32.totalorder %v66, 1
    %v68 = vsel %vm67, %v64, 0
    %vm69 = vcmp.eq.s32.totalorder %v21, %v64
    %v70 = vsel %vm69, %v15, 0.0
    %v71 = vsel %vm24, %v70, 0.0
    %72 = vadd.xlane.f32.xlu0 %v71
    %v73 = vpop.xlane.xlu0 %72
    %v74 = vsel %vm69, %v17, 0.0
    %v75 = vsel %vm24, %v74, 0.0
    %76 = vadd.xlane.f32.xlu0 %v75
    %v77 = vpop.xlane.xlu0 %76
    %v78 = vsel %vm69, %v19, 0.0
    %v79 = vsel %vm24, %v78, 0.0
    %80 = vadd.xlane.f32.xlu0 %v79
    %v81 = vpop.xlane.xlu0 %80
    %v82 = vsub.f32 %v15, %v73
    %v83 = vsub.f32 %v17, %v77
    %v84 = vsub.f32 %v19, %v81
    %v85 = vmul.f32 %v82, %v82
    %v86 = vmul.f32 %v83, %v83
    %v87 = vadd.f32 %v85, %v86
    %v88 = vmul.f32 %v84, %v84
    %v89 = vadd.f32 %v87, %v88
    %v90 = vmin.f32 %v44, %v89
    %v91 = vsel %vm24, %v90, -inf
    %92 = vmax.xlane.f32.xlu0 %v91
    %v93 = vpop.xlane.xlu0 %92
    %vm94 = vcmp.eq.f32.partialorder %v90, %v93
    %v95 = vsel %vm94, %v21, 128
    %v96 = vsel %vm24, %v95, 2147483647
    %v97 = vand.u32 %v96, 65535
    %v98 = vshra.s32 %v96, 16
    %v99 = vcvt.s32.f32 %v97
    %v100 = vcvt.s32.f32 %v98
    %101 = vmin.xlane.f32.xlu0 %v100
    %v102 = vpop.xlane.xlu0 %101
    %vm103 = vcmp.eq.f32.partialorder %v100, %v102
    %v104 = vsel %vm103, %v99, inf
    %105 = vmin.xlane.f32.xlu0 %v104
    %v106 = vpop.xlane.xlu0 %105
    %v107 = vcvt.f32.s32 %v106
    %v108 = vcvt.f32.s32 %v102
    %v109 = vshll.u32 %v108, 16
    %v110 = vadd.s32 %v109, %v107
    %vm111 = vcmp.eq.s32.totalorder %v21, 2
    %v112 = vsel %vm111, 1, 0
    %vm113 = vcmp.eq.s32.totalorder %v112, 1
    %v114 = vsel %vm113, %v110, %v68
    %vm115 = vcmp.eq.s32.totalorder %v21, %v110
    %v116 = vsel %vm115, %v15, 0.0
    %v117 = vsel %vm24, %v116, 0.0
    %118 = vadd.xlane.f32.xlu0 %v117
    %v119 = vpop.xlane.xlu0 %118
    %v120 = vsel %vm115, %v17, 0.0
    %v121 = vsel %vm24, %v120, 0.0
    %122 = vadd.xlane.f32.xlu0 %v121
    %v123 = vpop.xlane.xlu0 %122
    %v124 = vsel %vm115, %v19, 0.0
    %v125 = vsel %vm24, %v124, 0.0
    %126 = vadd.xlane.f32.xlu0 %v125
    %v127 = vpop.xlane.xlu0 %126
    %v128 = vsub.f32 %v15, %v119
    %v129 = vsub.f32 %v17, %v123
    %v130 = vsub.f32 %v19, %v127
    %v131 = vmul.f32 %v128, %v128
    %v132 = vmul.f32 %v129, %v129
    %v133 = vadd.f32 %v131, %v132
    %v134 = vmul.f32 %v130, %v130
    %v135 = vadd.f32 %v133, %v134
    %v136 = vmin.f32 %v90, %v135
    %v137 = vsel %vm24, %v136, -inf
    %138 = vmax.xlane.f32.xlu0 %v137
    %v139 = vpop.xlane.xlu0 %138
    %vm140 = vcmp.eq.f32.partialorder %v136, %v139
    %v141 = vsel %vm140, %v21, 128
    %v142 = vsel %vm24, %v141, 2147483647
    %v143 = vand.u32 %v142, 65535
    %v144 = vshra.s32 %v142, 16
    %v145 = vcvt.s32.f32 %v143
    %v146 = vcvt.s32.f32 %v144
    %147 = vmin.xlane.f32.xlu0 %v146
    %v148 = vpop.xlane.xlu0 %147
    %vm149 = vcmp.eq.f32.partialorder %v146, %v148
    %v150 = vsel %vm149, %v145, inf
    %151 = vmin.xlane.f32.xlu0 %v150
    %v152 = vpop.xlane.xlu0 %151
    %v153 = vcvt.f32.s32 %v152
    %v154 = vcvt.f32.s32 %v148
    %v155 = vshll.u32 %v154, 16
    %v156 = vadd.s32 %v155, %v153
    %vm157 = vcmp.eq.s32.totalorder %v21, 3
    %v158 = vsel %vm157, 1, 0
    %vm159 = vcmp.eq.s32.totalorder %v158, 1
    %v160 = vsel %vm159, %v156, %v114
    %vm161 = vcmp.eq.s32.totalorder %v21, %v156
    %v162 = vsel %vm161, %v15, 0.0
    %v163 = vsel %vm24, %v162, 0.0
    %164 = vadd.xlane.f32.xlu0 %v163
    %v165 = vpop.xlane.xlu0 %164
    %v166 = vsel %vm161, %v17, 0.0
    %v167 = vsel %vm24, %v166, 0.0
    %168 = vadd.xlane.f32.xlu0 %v167
    %v169 = vpop.xlane.xlu0 %168
    %v170 = vsel %vm161, %v19, 0.0
    %v171 = vsel %vm24, %v170, 0.0
    %172 = vadd.xlane.f32.xlu0 %v171
    %v173 = vpop.xlane.xlu0 %172
    %v174 = vsub.f32 %v15, %v165
    %v175 = vsub.f32 %v17, %v169
    %v176 = vsub.f32 %v19, %v173
    %v177 = vmul.f32 %v174, %v174
    %v178 = vmul.f32 %v175, %v175
    %v179 = vadd.f32 %v177, %v178
    %v180 = vmul.f32 %v176, %v176
    %v181 = vadd.f32 %v179, %v180
    %v182 = vmin.f32 %v136, %v181
    %v183 = vsel %vm24, %v182, -inf
    %184 = vmax.xlane.f32.xlu0 %v183
    %v185 = vpop.xlane.xlu0 %184
    %vm186 = vcmp.eq.f32.partialorder %v182, %v185
    %v187 = vsel %vm186, %v21, 128
    %v188 = vsel %vm24, %v187, 2147483647
    %v189 = vand.u32 %v188, 65535
    %v190 = vshra.s32 %v188, 16
    %v191 = vcvt.s32.f32 %v189
    %v192 = vcvt.s32.f32 %v190
    %193 = vmin.xlane.f32.xlu0 %v192
    %v194 = vpop.xlane.xlu0 %193
    %vm195 = vcmp.eq.f32.partialorder %v192, %v194
    %v196 = vsel %vm195, %v191, inf
    %197 = vmin.xlane.f32.xlu0 %v196
    %v198 = vpop.xlane.xlu0 %197
    %v199 = vcvt.f32.s32 %v198
    %v200 = vcvt.f32.s32 %v194
    %v201 = vshll.u32 %v200, 16
    %v202 = vadd.s32 %v201, %v199
    %vm203 = vcmp.eq.s32.totalorder %v21, 4
    %v204 = vsel %vm203, 1, 0
    %vm205 = vcmp.eq.s32.totalorder %v204, 1
    %v206 = vsel %vm205, %v202, %v160
    %vm207 = vcmp.eq.s32.totalorder %v21, %v202
    %v208 = vsel %vm207, %v15, 0.0
    %v209 = vsel %vm24, %v208, 0.0
    %210 = vadd.xlane.f32.xlu0 %v209
    %v211 = vpop.xlane.xlu0 %210
    %v212 = vsel %vm207, %v17, 0.0
    %v213 = vsel %vm24, %v212, 0.0
    %214 = vadd.xlane.f32.xlu0 %v213
    %v215 = vpop.xlane.xlu0 %214
    %v216 = vsel %vm207, %v19, 0.0
    %v217 = vsel %vm24, %v216, 0.0
    %218 = vadd.xlane.f32.xlu0 %v217
    %v219 = vpop.xlane.xlu0 %218
    %v220 = vsub.f32 %v15, %v211
    %v221 = vsub.f32 %v17, %v215
    %v222 = vsub.f32 %v19, %v219
    %v223 = vmul.f32 %v220, %v220
    %v224 = vmul.f32 %v221, %v221
    %v225 = vadd.f32 %v223, %v224
    %v226 = vmul.f32 %v222, %v222
    %v227 = vadd.f32 %v225, %v226
    %v228 = vmin.f32 %v182, %v227
    %v229 = vsel %vm24, %v228, -inf
    %230 = vmax.xlane.f32.xlu0 %v229
    %v231 = vpop.xlane.xlu0 %230
    %vm232 = vcmp.eq.f32.partialorder %v228, %v231
    %v233 = vsel %vm232, %v21, 128
    %v234 = vsel %vm24, %v233, 2147483647
    %v235 = vand.u32 %v234, 65535
    %v236 = vshra.s32 %v234, 16
    %v237 = vcvt.s32.f32 %v235
    %v238 = vcvt.s32.f32 %v236
    %239 = vmin.xlane.f32.xlu0 %v238
    %v240 = vpop.xlane.xlu0 %239
    %vm241 = vcmp.eq.f32.partialorder %v238, %v240
    %v242 = vsel %vm241, %v237, inf
    %243 = vmin.xlane.f32.xlu0 %v242
    %v244 = vpop.xlane.xlu0 %243
    %v245 = vcvt.f32.s32 %v244
    %v246 = vcvt.f32.s32 %v240
    %v247 = vshll.u32 %v246, 16
    %v248 = vadd.s32 %v247, %v245
    %vm249 = vcmp.eq.s32.totalorder %v21, 5
    %v250 = vsel %vm249, 1, 0
    %vm251 = vcmp.eq.s32.totalorder %v250, 1
    %v252 = vsel %vm251, %v248, %v206
    %vm253 = vcmp.eq.s32.totalorder %v21, %v248
    %v254 = vsel %vm253, %v15, 0.0
    %v255 = vsel %vm24, %v254, 0.0
    %256 = vadd.xlane.f32.xlu0 %v255
    %v257 = vpop.xlane.xlu0 %256
    %v258 = vsel %vm253, %v17, 0.0
    %v259 = vsel %vm24, %v258, 0.0
    %260 = vadd.xlane.f32.xlu0 %v259
    %v261 = vpop.xlane.xlu0 %260
    %v262 = vsel %vm253, %v19, 0.0
    %v263 = vsel %vm24, %v262, 0.0
    %264 = vadd.xlane.f32.xlu0 %v263
    %v265 = vpop.xlane.xlu0 %264
    %v266 = vsub.f32 %v15, %v257
    %v267 = vsub.f32 %v17, %v261
    %v268 = vsub.f32 %v19, %v265
    %v269 = vmul.f32 %v266, %v266
    %v270 = vmul.f32 %v267, %v267
    %v271 = vadd.f32 %v269, %v270
    %v272 = vmul.f32 %v268, %v268
    %v273 = vadd.f32 %v271, %v272
    %v274 = vmin.f32 %v228, %v273
    %v275 = vsel %vm24, %v274, -inf
    %276 = vmax.xlane.f32.xlu0 %v275
    %v277 = vpop.xlane.xlu0 %276
    %vm278 = vcmp.eq.f32.partialorder %v274, %v277
    %v279 = vsel %vm278, %v21, 128
    %v280 = vsel %vm24, %v279, 2147483647
    %v281 = vand.u32 %v280, 65535
    %v282 = vshra.s32 %v280, 16
    %v283 = vcvt.s32.f32 %v281
    %v284 = vcvt.s32.f32 %v282
    %285 = vmin.xlane.f32.xlu0 %v284
    %v286 = vpop.xlane.xlu0 %285
    %vm287 = vcmp.eq.f32.partialorder %v284, %v286
    %v288 = vsel %vm287, %v283, inf
    %289 = vmin.xlane.f32.xlu0 %v288
    %v290 = vpop.xlane.xlu0 %289
    %v291 = vcvt.f32.s32 %v290
    %v292 = vcvt.f32.s32 %v286
    %v293 = vshll.u32 %v292, 16
    %v294 = vadd.s32 %v293, %v291
    %vm295 = vcmp.eq.s32.totalorder %v21, 6
    %v296 = vsel %vm295, 1, 0
    %vm297 = vcmp.eq.s32.totalorder %v296, 1
    %v298 = vsel %vm297, %v294, %v252
    %vm299 = vcmp.eq.s32.totalorder %v21, %v294
    %v300 = vsel %vm299, %v15, 0.0
    %v301 = vsel %vm24, %v300, 0.0
    %302 = vadd.xlane.f32.xlu0 %v301
    %v303 = vpop.xlane.xlu0 %302
    %v304 = vsel %vm299, %v17, 0.0
    %v305 = vsel %vm24, %v304, 0.0
    %306 = vadd.xlane.f32.xlu0 %v305
    %v307 = vpop.xlane.xlu0 %306
    %v308 = vsel %vm299, %v19, 0.0
    %v309 = vsel %vm24, %v308, 0.0
    %310 = vadd.xlane.f32.xlu0 %v309
    %v311 = vpop.xlane.xlu0 %310
    %v312 = vsub.f32 %v15, %v303
    %v313 = vsub.f32 %v17, %v307
    %v314 = vsub.f32 %v19, %v311
    %v315 = vmul.f32 %v312, %v312
    %v316 = vmul.f32 %v313, %v313
    %v317 = vadd.f32 %v315, %v316
    %v318 = vmul.f32 %v314, %v314
    %v319 = vadd.f32 %v317, %v318
    %v320 = vmin.f32 %v274, %v319
    %v321 = vsel %vm24, %v320, -inf
    %322 = vmax.xlane.f32.xlu0 %v321
    %v323 = vpop.xlane.xlu0 %322
    %vm324 = vcmp.eq.f32.partialorder %v320, %v323
    %v325 = vsel %vm324, %v21, 128
    %v326 = vsel %vm24, %v325, 2147483647
    %v327 = vand.u32 %v326, 65535
    %v328 = vshra.s32 %v326, 16
    %v329 = vcvt.s32.f32 %v327
    %v330 = vcvt.s32.f32 %v328
    %331 = vmin.xlane.f32.xlu0 %v330
    %v332 = vpop.xlane.xlu0 %331
    %vm333 = vcmp.eq.f32.partialorder %v330, %v332
    %v334 = vsel %vm333, %v329, inf
    %335 = vmin.xlane.f32.xlu0 %v334
    %v336 = vpop.xlane.xlu0 %335
    %v337 = vcvt.f32.s32 %v336
    %v338 = vcvt.f32.s32 %v332
    %v339 = vshll.u32 %v338, 16
    %v340 = vadd.s32 %v339, %v337
    %vm341 = vcmp.eq.s32.totalorder %v21, 7
    %v342 = vsel %vm341, 1, 0
    %vm343 = vcmp.eq.s32.totalorder %v342, 1
    %v344 = vsel %vm343, %v340, %v298
    %vm345 = vcmask 58368
    %346 = vst.msk [vmem:[#allocation4] sm:$0x3] %vm345, %v344
    %v347 = vlaneseq
    %v348 = vshrl.u32 %v347, 7
    %v349 = vadd.s32 %v348, 8
    %v350 = vadd.s32 %v348, 16
    %v351 = vadd.s32 %v348, 24
    %v352 = vadd.s32 %v348, 32
    %v353 = vadd.s32 %v348, 40
    %v354 = vadd.s32 %v348, 48
    %v355 = vadd.s32 %v348, 56
    %v356 = vadd.s32 %v348, 64
    %v357 = vadd.s32 %v348, 72
    %v358 = vadd.s32 %v348, 80
    %v359 = vadd.s32 %v348, 88
    %v360 = vadd.s32 %v348, 96
    %v361 = vadd.s32 %v348, 104
    %v362 = vadd.s32 %v348, 112
    %v363 = vadd.s32 %v348, 120
    %v364 = vlaneseq
    %v365 = vshrl.u32 %v364, 7
    %v366 = vsub.s32 0, %v365
    %v367 = vrot.slane %v344, %v366
    %vm368 = vcmp.eq.s32.totalorder %v348, %v367
    %vm369 = vcmp.eq.s32.totalorder %v349, %v367
    %vm370 = vcmp.eq.s32.totalorder %v350, %v367
    %vm371 = vcmp.eq.s32.totalorder %v351, %v367
    %vm372 = vcmp.eq.s32.totalorder %v352, %v367
    %vm373 = vcmp.eq.s32.totalorder %v353, %v367
    %vm374 = vcmp.eq.s32.totalorder %v354, %v367
    %vm375 = vcmp.eq.s32.totalorder %v355, %v367
    %vm376 = vcmp.eq.s32.totalorder %v356, %v367
    %vm377 = vcmp.eq.s32.totalorder %v357, %v367
    %vm378 = vcmp.eq.s32.totalorder %v358, %v367
    %vm379 = vcmp.eq.s32.totalorder %v359, %v367
    %vm380 = vcmp.eq.s32.totalorder %v360, %v367
    %vm381 = vcmp.eq.s32.totalorder %v361, %v367
    %vm382 = vcmp.eq.s32.totalorder %v362, %v367
    %vm383 = vcmp.eq.s32.totalorder %v363, %v367
    %v384 = vsel %vm368, 1, 0
    %v385 = vsel %vm369, 1, 0
    %v386 = vsel %vm370, 1, 0
    %v387 = vsel %vm371, 1, 0
    %v388 = vsel %vm372, 1, 0
    %v389 = vsel %vm373, 1, 0
    %v390 = vsel %vm374, 1, 0
    %v391 = vsel %vm375, 1, 0
    %v392 = vsel %vm376, 1, 0
    %v393 = vsel %vm377, 1, 0
    %v394 = vsel %vm378, 1, 0
    %v395 = vsel %vm379, 1, 0
    %v396 = vsel %vm380, 1, 0
    %v397 = vsel %vm381, 1, 0
    %v398 = vsel %vm382, 1, 0
    %v399 = vsel %vm383, 1, 0
    %v400 = vcvt.s32.f32 %v384
    %v401 = vcvt.s32.f32 %v385
    %v402 = vcvt.s32.f32 %v386
    %v403 = vcvt.s32.f32 %v387
    %v404 = vcvt.s32.f32 %v388
    %v405 = vcvt.s32.f32 %v389
    %v406 = vcvt.s32.f32 %v390
    %v407 = vcvt.s32.f32 %v391
    %v408 = vcvt.s32.f32 %v392
    %v409 = vcvt.s32.f32 %v393
    %v410 = vcvt.s32.f32 %v394
    %v411 = vcvt.s32.f32 %v395
    %v412 = vcvt.s32.f32 %v396
    %v413 = vcvt.s32.f32 %v397
    %v414 = vcvt.s32.f32 %v398
    %v415 = vcvt.s32.f32 %v399
    %v416 = vlaneseq
    %v417 = vshrl.u32 %v416, 7
    %v418 = vsub.s32 1, %v417
    %v419 = vrot.slane %v344, %v418
    %vm420 = vcmp.eq.s32.totalorder %v348, %v419
    %vm421 = vcmp.eq.s32.totalorder %v349, %v419
    %vm422 = vcmp.eq.s32.totalorder %v350, %v419
    %vm423 = vcmp.eq.s32.totalorder %v351, %v419
    %vm424 = vcmp.eq.s32.totalorder %v352, %v419
    %vm425 = vcmp.eq.s32.totalorder %v353, %v419
    %vm426 = vcmp.eq.s32.totalorder %v354, %v419
    %vm427 = vcmp.eq.s32.totalorder %v355, %v419
    %vm428 = vcmp.eq.s32.totalorder %v356, %v419
    %vm429 = vcmp.eq.s32.totalorder %v357, %v419
    %vm430 = vcmp.eq.s32.totalorder %v358, %v419
    %vm431 = vcmp.eq.s32.totalorder %v359, %v419
    %vm432 = vcmp.eq.s32.totalorder %v360, %v419
    %vm433 = vcmp.eq.s32.totalorder %v361, %v419
    %vm434 = vcmp.eq.s32.totalorder %v362, %v419
    %vm435 = vcmp.eq.s32.totalorder %v363, %v419
    %v436 = vsel %vm420, 1, 0
    %v437 = vsel %vm421, 1, 0
    %v438 = vsel %vm422, 1, 0
    %v439 = vsel %vm423, 1, 0
    %v440 = vsel %vm424, 1, 0
    %v441 = vsel %vm425, 1, 0
    %v442 = vsel %vm426, 1, 0
    %v443 = vsel %vm427, 1, 0
    %v444 = vsel %vm428, 1, 0
    %v445 = vsel %vm429, 1, 0
    %v446 = vsel %vm430, 1, 0
    %v447 = vsel %vm431, 1, 0
    %v448 = vsel %vm432, 1, 0
    %v449 = vsel %vm433, 1, 0
    %v450 = vsel %vm434, 1, 0
    %v451 = vsel %vm435, 1, 0
    %v452 = vcvt.s32.f32 %v436
    %v453 = vcvt.s32.f32 %v437
    %v454 = vcvt.s32.f32 %v438
    %v455 = vcvt.s32.f32 %v439
    %v456 = vcvt.s32.f32 %v440
    %v457 = vcvt.s32.f32 %v441
    %v458 = vcvt.s32.f32 %v442
    %v459 = vcvt.s32.f32 %v443
    %v460 = vcvt.s32.f32 %v444
    %v461 = vcvt.s32.f32 %v445
    %v462 = vcvt.s32.f32 %v446
    %v463 = vcvt.s32.f32 %v447
    %v464 = vcvt.s32.f32 %v448
    %v465 = vcvt.s32.f32 %v449
    %v466 = vcvt.s32.f32 %v450
    %v467 = vcvt.s32.f32 %v451
    %v468 = vld [vmem:[%s1] sm:$0x7f]
    %v469 = vld [vmem:[%s1 + $0x8] sm:$0x7f]
    %470 = vmatprep.subr.mxu0 0.0
    %v471 = vand.u32 %v400, 4294901760
    %472 = vmatpush1.msra.mxu0 %v471
    %473 = vmatprep.subr.mxu0 0.0
    %v474 = vand.u32 %v401, 4294901760
    %475 = vmatpush1.msra.mxu0 %v474
    %476 = vmatprep.subr.mxu0 0.0
    %v477 = vand.u32 %v402, 4294901760
    %478 = vmatpush1.msra.mxu0 %v477
    %479 = vmatprep.subr.mxu0 0.0
    %v480 = vand.u32 %v403, 4294901760
    %481 = vmatpush1.msra.mxu0 %v480
    %482 = vmatprep.subr.mxu0 0.0
    %v483 = vand.u32 %v404, 4294901760
    %484 = vmatpush1.msra.mxu0 %v483
    %485 = vmatprep.subr.mxu0 0.0
    %v486 = vand.u32 %v405, 4294901760
    %487 = vmatpush1.msra.mxu0 %v486
    %488 = vmatprep.subr.mxu0 0.0
    %v489 = vand.u32 %v406, 4294901760
    %490 = vmatpush1.msra.mxu0 %v489
    %491 = vmatprep.subr.mxu0 0.0
    %v492 = vand.u32 %v407, 4294901760
    %493 = vmatpush1.msra.mxu0 %v492
    %494 = vmatprep.subr.mxu0 0.0
    %v495 = vand.u32 %v408, 4294901760
    %496 = vmatpush1.msra.mxu0 %v495
    %497 = vmatprep.subr.mxu0 0.0
    %v498 = vand.u32 %v409, 4294901760
    %499 = vmatpush1.msra.mxu0 %v498
    %500 = vmatprep.subr.mxu0 0.0
    %v501 = vand.u32 %v410, 4294901760
    %502 = vmatpush1.msra.mxu0 %v501
    %503 = vmatprep.subr.mxu0 0.0
    %v504 = vand.u32 %v411, 4294901760
    %505 = vmatpush1.msra.mxu0 %v504
    %506 = vmatprep.subr.mxu0 0.0
    %v507 = vand.u32 %v412, 4294901760
    %508 = vmatpush1.msra.mxu0 %v507
    %509 = vmatprep.subr.mxu0 0.0
    %v510 = vand.u32 %v413, 4294901760
    %511 = vmatpush1.msra.mxu0 %v510
    %512 = vmatprep.subr.mxu0 0.0
    %v513 = vand.u32 %v414, 4294901760
    %514 = vmatpush1.msra.mxu0 %v513
    %515 = vmatprep.subr.mxu0 0.0
    %v516 = vand.u32 %v415, 4294901760
    %517 = vmatpush1.msra.mxu0 %v516
    %518 = vmatprep.subr.mxu0 0.0
    %519 = vmatpush1.msra.mxu0 0.0
    %520 = vmatprep.subr.mxu0 0.0
    %521 = vmatpush1.msra.mxu0 0.0
    %522 = vmatprep.subr.mxu0 0.0
    %523 = vmatpush1.msra.mxu0 0.0
    %524 = vmatprep.subr.mxu0 0.0
    %525 = vmatpush1.msra.mxu0 0.0
    %526 = vmatprep.subr.mxu0 0.0
    %527 = vmatpush1.msra.mxu0 0.0
    %528 = vmatprep.subr.mxu0 0.0
    %529 = vmatpush1.msra.mxu0 0.0
    %530 = vmatprep.subr.mxu0 0.0
    %531 = vmatpush1.msra.mxu0 0.0
    %532 = vmatprep.subr.mxu0 0.0
    %533 = vmatpush1.msra.mxu0 0.0
    %534 = vmatprep.subr.mxu0 0.0
    %535 = vmatpush1.msra.mxu0 0.0
    %536 = vmatprep.subr.mxu0 0.0
    %537 = vmatpush1.msra.mxu0 0.0
    %538 = vmatprep.subr.mxu0 0.0
    %539 = vmatpush1.msra.mxu0 0.0
    %540 = vmatprep.subr.mxu0 0.0
    %541 = vmatpush1.msra.mxu0 0.0
    %542 = vmatprep.subr.mxu0 0.0
    %543 = vmatpush1.msra.mxu0 0.0
    %544 = vmatprep.subr.mxu0 0.0
    %545 = vmatpush1.msra.mxu0 0.0
    %546 = vmatprep.subr.mxu0 0.0
    %547 = vmatpush1.msra.mxu0 0.0
    %548 = vmatprep.subr.mxu0 0.0
    %549 = vmatpush1.msra.mxu0 0.0
    %550 = vmatprep.mubr.f32.mxu0 0.0
    %v551 = vand.u32 %v468, 4294901760
    %v552 = vsub.f32 %v468, %v551
    %v553 = vand.u32 %v552, 4294901760
    %v554 = vsub.f32 %v552, %v553
    %v555 = vand.u32 %v554, 4294901760
    %556 = vmatmul.mubr.f32.gmra.mrb[0].mxu0 %v555
    %v557 = vpop.f32.mrb[0].mxu0
    %v558 = vadd.f32 0.0, %v557
    %v559 = vpop.f32.mrb[0].mxu0
    %560 = vdwg.mxu0
    %561 = vmatprep.subr.mxu0 0.0
    %v562 = vand.u32 %v400, 4294901760
    %v563 = vsub.f32 %v400, %v562
    %v564 = vand.u32 %v563, 4294901760
    %v565 = vsub.f32 %v563, %v564
    %v566 = vand.u32 %v565, 4294901760
    %567 = vmatpush1.msra.mxu0 %v566
    %568 = vmatprep.subr.mxu0 0.0
    %v569 = vand.u32 %v401, 4294901760
    %v570 = vsub.f32 %v401, %v569
    %v571 = vand.u32 %v570, 4294901760
    %v572 = vsub.f32 %v570, %v571
    %v573 = vand.u32 %v572, 4294901760
    %574 = vmatpush1.msra.mxu0 %v573
    %575 = vmatprep.subr.mxu0 0.0
    %v576 = vand.u32 %v402, 4294901760
    %v577 = vsub.f32 %v402, %v576
    %v578 = vand.u32 %v577, 4294901760
    %v579 = vsub.f32 %v577, %v578
    %v580 = vand.u32 %v579, 4294901760
    %581 = vmatpush1.msra.mxu0 %v580
    %582 = vmatprep.subr.mxu0 0.0
    %v583 = vand.u32 %v403, 4294901760
    %v584 = vsub.f32 %v403, %v583
    %v585 = vand.u32 %v584, 4294901760
    %v586 = vsub.f32 %v584, %v585
    %v587 = vand.u32 %v586, 4294901760
    %588 = vmatpush1.msra.mxu0 %v587
    %589 = vmatprep.subr.mxu0 0.0
    %v590 = vand.u32 %v404, 4294901760
    %v591 = vsub.f32 %v404, %v590
    %v592 = vand.u32 %v591, 4294901760
    %v593 = vsub.f32 %v591, %v592
    %v594 = vand.u32 %v593, 4294901760
    %595 = vmatpush1.msra.mxu0 %v594
    %596 = vmatprep.subr.mxu0 0.0
    %v597 = vand.u32 %v405, 4294901760
    %v598 = vsub.f32 %v405, %v597
    %v599 = vand.u32 %v598, 4294901760
    %v600 = vsub.f32 %v598, %v599
    %v601 = vand.u32 %v600, 4294901760
    %602 = vmatpush1.msra.mxu0 %v601
    %603 = vmatprep.subr.mxu0 0.0
    %v604 = vand.u32 %v406, 4294901760
    %v605 = vsub.f32 %v406, %v604
    %v606 = vand.u32 %v605, 4294901760
    %v607 = vsub.f32 %v605, %v606
    %v608 = vand.u32 %v607, 4294901760
    %609 = vmatpush1.msra.mxu0 %v608
    %610 = vmatprep.subr.mxu0 0.0
    %v611 = vand.u32 %v407, 4294901760
    %v612 = vsub.f32 %v407, %v611
    %v613 = vand.u32 %v612, 4294901760
    %v614 = vsub.f32 %v612, %v613
    %v615 = vand.u32 %v614, 4294901760
    %616 = vmatpush1.msra.mxu0 %v615
    %617 = vmatprep.subr.mxu0 0.0
    %v618 = vand.u32 %v408, 4294901760
    %v619 = vsub.f32 %v408, %v618
    %v620 = vand.u32 %v619, 4294901760
    %v621 = vsub.f32 %v619, %v620
    %v622 = vand.u32 %v621, 4294901760
    %623 = vmatpush1.msra.mxu0 %v622
    %624 = vmatprep.subr.mxu0 0.0
    %v625 = vand.u32 %v409, 4294901760
    %v626 = vsub.f32 %v409, %v625
    %v627 = vand.u32 %v626, 4294901760
    %v628 = vsub.f32 %v626, %v627
    %v629 = vand.u32 %v628, 4294901760
    %630 = vmatpush1.msra.mxu0 %v629
    %631 = vmatprep.subr.mxu0 0.0
    %v632 = vand.u32 %v410, 4294901760
    %v633 = vsub.f32 %v410, %v632
    %v634 = vand.u32 %v633, 4294901760
    %v635 = vsub.f32 %v633, %v634
    %v636 = vand.u32 %v635, 4294901760
    %637 = vmatpush1.msra.mxu0 %v636
    %638 = vmatprep.subr.mxu0 0.0
    %v639 = vand.u32 %v411, 4294901760
    %v640 = vsub.f32 %v411, %v639
    %v641 = vand.u32 %v640, 4294901760
    %v642 = vsub.f32 %v640, %v641
    %v643 = vand.u32 %v642, 4294901760
    %644 = vmatpush1.msra.mxu0 %v643
    %645 = vmatprep.subr.mxu0 0.0
    %v646 = vand.u32 %v412, 4294901760
    %v647 = vsub.f32 %v412, %v646
    %v648 = vand.u32 %v647, 4294901760
    %v649 = vsub.f32 %v647, %v648
    %v650 = vand.u32 %v649, 4294901760
    %651 = vmatpush1.msra.mxu0 %v650
    %652 = vmatprep.subr.mxu0 0.0
    %v653 = vand.u32 %v413, 4294901760
    %v654 = vsub.f32 %v413, %v653
    %v655 = vand.u32 %v654, 4294901760
    %v656 = vsub.f32 %v654, %v655
    %v657 = vand.u32 %v656, 4294901760
    %658 = vmatpush1.msra.mxu0 %v657
    %659 = vmatprep.subr.mxu0 0.0
    %v660 = vand.u32 %v414, 4294901760
    %v661 = vsub.f32 %v414, %v660
    %v662 = vand.u32 %v661, 4294901760
    %v663 = vsub.f32 %v661, %v662
    %v664 = vand.u32 %v663, 4294901760
    %665 = vmatpush1.msra.mxu0 %v664
    %666 = vmatprep.subr.mxu0 0.0
    %v667 = vand.u32 %v415, 4294901760
    %v668 = vsub.f32 %v415, %v667
    %v669 = vand.u32 %v668, 4294901760
    %v670 = vsub.f32 %v668, %v669
    %v671 = vand.u32 %v670, 4294901760
    %672 = vmatpush1.msra.mxu0 %v671
    %673 = vmatprep.subr.mxu0 0.0
    %674 = vmatpush1.msra.mxu0 0.0
    %675 = vmatprep.subr.mxu0 0.0
    %676 = vmatpush1.msra.mxu0 0.0
    %677 = vmatprep.subr.mxu0 0.0
    %678 = vmatpush1.msra.mxu0 0.0
    %679 = vmatprep.subr.mxu0 0.0
    %680 = vmatpush1.msra.mxu0 0.0
    %681 = vmatprep.subr.mxu0 0.0
    %682 = vmatpush1.msra.mxu0 0.0
    %683 = vmatprep.subr.mxu0 0.0
    %684 = vmatpush1.msra.mxu0 0.0
    %685 = vmatprep.subr.mxu0 0.0
    %686 = vmatpush1.msra.mxu0 0.0
    %687 = vmatprep.subr.mxu0 0.0
    %688 = vmatpush1.msra.mxu0 0.0
    %689 = vmatprep.subr.mxu0 0.0
    %690 = vmatpush1.msra.mxu0 0.0
    %691 = vmatprep.subr.mxu0 0.0
    %692 = vmatpush1.msra.mxu0 0.0
    %693 = vmatprep.subr.mxu0 0.0
    %694 = vmatpush1.msra.mxu0 0.0
    %695 = vmatprep.subr.mxu0 0.0
    %696 = vmatpush1.msra.mxu0 0.0
    %697 = vmatprep.subr.mxu0 0.0
    %698 = vmatpush1.msra.mxu0 0.0
    %699 = vmatprep.subr.mxu0 0.0
    %700 = vmatpush1.msra.mxu0 0.0
    %701 = vmatprep.subr.mxu0 0.0
    %702 = vmatpush1.msra.mxu0 0.0
    %703 = vmatprep.subr.mxu0 0.0
    %704 = vmatpush1.msra.mxu0 0.0
    %705 = vmatprep.mubr.f32.mxu0 0.0
    %v706 = vand.u32 %v468, 4294901760
    %707 = vmatmul.mubr.f32.gmra.mrb[0].mxu0 %v706
    %v708 = vpop.f32.mrb[0].mxu0
    %v709 = vadd.f32 %v558, %v708
    %v710 = vpop.f32.mrb[0].mxu0
    %711 = vdwg.mxu0
    %712 = vmatprep.subr.mxu0 0.0
    %v713 = vand.u32 %v400, 4294901760
    %v714 = vsub.f32 %v400, %v713
    %715 = vmatpush1.msra.mxu0 %v714
    %716 = vmatprep.subr.mxu0 0.0
    %v717 = vand.u32 %v401, 4294901760
    %v718 = vsub.f32 %v401, %v717
    %719 = vmatpush1.msra.mxu0 %v718
    %720 = vmatprep.subr.mxu0 0.0
    %v721 = vand.u32 %v402, 4294901760
    %v722 = vsub.f32 %v402, %v721
    %723 = vmatpush1.msra.mxu0 %v722
    %724 = vmatprep.subr.mxu0 0.0
    %v725 = vand.u32 %v403, 4294901760
    %v726 = vsub.f32 %v403, %v725
    %727 = vmatpush1.msra.mxu0 %v726
    %728 = vmatprep.subr.mxu0 0.0
    %v729 = vand.u32 %v404, 4294901760
    %v730 = vsub.f32 %v404, %v729
    %731 = vmatpush1.msra.mxu0 %v730
    %732 = vmatprep.subr.mxu0 0.0
    %v733 = vand.u32 %v405, 4294901760
    %v734 = vsub.f32 %v405, %v733
    %735 = vmatpush1.msra.mxu0 %v734
    %736 = vmatprep.subr.mxu0 0.0
    %v737 = vand.u32 %v406, 4294901760
    %v738 = vsub.f32 %v406, %v737
    %739 = vmatpush1.msra.mxu0 %v738
    %740 = vmatprep.subr.mxu0 0.0
    %v741 = vand.u32 %v407, 4294901760
    %v742 = vsub.f32 %v407, %v741
    %743 = vmatpush1.msra.mxu0 %v742
    %744 = vmatprep.subr.mxu0 0.0
    %v745 = vand.u32 %v408, 4294901760
    %v746 = vsub.f32 %v408, %v745
    %747 = vmatpush1.msra.mxu0 %v746
    %748 = vmatprep.subr.mxu0 0.0
    %v749 = vand.u32 %v409, 4294901760
    %v750 = vsub.f32 %v409, %v749
    %751 = vmatpush1.msra.mxu0 %v750
    %752 = vmatprep.subr.mxu0 0.0
    %v753 = vand.u32 %v410, 4294901760
    %v754 = vsub.f32 %v410, %v753
    %755 = vmatpush1.msra.mxu0 %v754
    %756 = vmatprep.subr.mxu0 0.0
    %v757 = vand.u32 %v411, 4294901760
    %v758 = vsub.f32 %v411, %v757
    %759 = vmatpush1.msra.mxu0 %v758
    %760 = vmatprep.subr.mxu0 0.0
    %v761 = vand.u32 %v412, 4294901760
    %v762 = vsub.f32 %v412, %v761
    %763 = vmatpush1.msra.mxu0 %v762
    %764 = vmatprep.subr.mxu0 0.0
    %v765 = vand.u32 %v413, 4294901760
    %v766 = vsub.f32 %v413, %v765
    %767 = vmatpush1.msra.mxu0 %v766
    %768 = vmatprep.subr.mxu0 0.0
    %v769 = vand.u32 %v414, 4294901760
    %v770 = vsub.f32 %v414, %v769
    %771 = vmatpush1.msra.mxu0 %v770
    %772 = vmatprep.subr.mxu0 0.0
    %v773 = vand.u32 %v415, 4294901760
    %v774 = vsub.f32 %v415, %v773
    %775 = vmatpush1.msra.mxu0 %v774
    %776 = vmatprep.subr.mxu0 0.0
    %777 = vmatpush1.msra.mxu0 0.0
    %778 = vmatprep.subr.mxu0 0.0
    %779 = vmatpush1.msra.mxu0 0.0
    %780 = vmatprep.subr.mxu0 0.0
    %781 = vmatpush1.msra.mxu0 0.0
    %782 = vmatprep.subr.mxu0 0.0
    %783 = vmatpush1.msra.mxu0 0.0
    %784 = vmatprep.subr.mxu0 0.0
    %785 = vmatpush1.msra.mxu0 0.0
    %786 = vmatprep.subr.mxu0 0.0
    %787 = vmatpush1.msra.mxu0 0.0
    %788 = vmatprep.subr.mxu0 0.0
    %789 = vmatpush1.msra.mxu0 0.0
    %790 = vmatprep.subr.mxu0 0.0
    %791 = vmatpush1.msra.mxu0 0.0
    %792 = vmatprep.subr.mxu0 0.0
    %793 = vmatpush1.msra.mxu0 0.0
    %794 = vmatprep.subr.mxu0 0.0
    %795 = vmatpush1.msra.mxu0 0.0
    %796 = vmatprep.subr.mxu0 0.0
    %797 = vmatpush1.msra.mxu0 0.0
    %798 = vmatprep.subr.mxu0 0.0
    %799 = vmatpush1.msra.mxu0 0.0
    %800 = vmatprep.subr.mxu0 0.0
    %801 = vmatpush1.msra.mxu0 0.0
    %802 = vmatprep.subr.mxu0 0.0
    %803 = vmatpush1.msra.mxu0 0.0
    %804 = vmatprep.subr.mxu0 0.0
    %805 = vmatpush1.msra.mxu0 0.0
    %806 = vmatprep.subr.mxu0 0.0
    %807 = vmatpush1.msra.mxu0 0.0
    %808 = vmatprep.mubr.f32.mxu0 0.0
    %v809 = vand.u32 %v468, 4294901760
    %v810 = vsub.f32 %v468, %v809
    %811 = vmatmul.mubr.f32.gmra.mrb[0].mxu0 %v810
    %v812 = vpop.f32.mrb[0].mxu0
    %v813 = vadd.f32 %v709, %v812
    %v814 = vpop.f32.mrb[0].mxu0
    %815 = vdwg.mxu0
    %816 = vmatprep.subr.mxu0 0.0
    %v817 = vand.u32 %v400, 4294901760
    %818 = vmatpush1.msra.mxu0 %v817
    %819 = vmatprep.subr.mxu0 0.0
    %v820 = vand.u32 %v401, 4294901760
    %821 = vmatpush1.msra.mxu0 %v820
    %822 = vmatprep.subr.mxu0 0.0
    %v823 = vand.u32 %v402, 4294901760
    %824 = vmatpush1.msra.mxu0 %v823
    %825 = vmatprep.subr.mxu0 0.0
    %v826 = vand.u32 %v403, 4294901760
    %827 = vmatpush1.msra.mxu0 %v826
    %828 = vmatprep.subr.mxu0 0.0
    %v829 = vand.u32 %v404, 4294901760
    %830 = vmatpush1.msra.mxu0 %v829
    %831 = vmatprep.subr.mxu0 0.0
    %v832 = vand.u32 %v405, 4294901760
    %833 = vmatpush1.msra.mxu0 %v832
    %834 = vmatprep.subr.mxu0 0.0
    %v835 = vand.u32 %v406, 4294901760
    %836 = vmatpush1.msra.mxu0 %v835
    %837 = vmatprep.subr.mxu0 0.0
    %v838 = vand.u32 %v407, 4294901760
    %839 = vmatpush1.msra.mxu0 %v838
    %840 = vmatprep.subr.mxu0 0.0
    %v841 = vand.u32 %v408, 4294901760
    %842 = vmatpush1.msra.mxu0 %v841
    %843 = vmatprep.subr.mxu0 0.0
    %v844 = vand.u32 %v409, 4294901760
    %845 = vmatpush1.msra.mxu0 %v844
    %846 = vmatprep.subr.mxu0 0.0
    %v847 = vand.u32 %v410, 4294901760
    %848 = vmatpush1.msra.mxu0 %v847
    %849 = vmatprep.subr.mxu0 0.0
    %v850 = vand.u32 %v411, 4294901760
    %851 = vmatpush1.msra.mxu0 %v850
    %852 = vmatprep.subr.mxu0 0.0
    %v853 = vand.u32 %v412, 4294901760
    %854 = vmatpush1.msra.mxu0 %v853
    %855 = vmatprep.subr.mxu0 0.0
    %v856 = vand.u32 %v413, 4294901760
    %857 = vmatpush1.msra.mxu0 %v856
    %858 = vmatprep.subr.mxu0 0.0
    %v859 = vand.u32 %v414, 4294901760
    %860 = vmatpush1.msra.mxu0 %v859
    %861 = vmatprep.subr.mxu0 0.0
    %v862 = vand.u32 %v415, 4294901760
    %863 = vmatpush1.msra.mxu0 %v862
    %864 = vmatprep.subr.mxu0 0.0
    %865 = vmatpush1.msra.mxu0 0.0
    %866 = vmatprep.subr.mxu0 0.0
    %867 = vmatpush1.msra.mxu0 0.0
    %868 = vmatprep.subr.mxu0 0.0
    %869 = vmatpush1.msra.mxu0 0.0
    %870 = vmatprep.subr.mxu0 0.0
    %871 = vmatpush1.msra.mxu0 0.0
    %872 = vmatprep.subr.mxu0 0.0
    %873 = vmatpush1.msra.mxu0 0.0
    %874 = vmatprep.subr.mxu0 0.0
    %875 = vmatpush1.msra.mxu0 0.0
    %876 = vmatprep.subr.mxu0 0.0
    %877 = vmatpush1.msra.mxu0 0.0
    %878 = vmatprep.subr.mxu0 0.0
    %879 = vmatpush1.msra.mxu0 0.0
    %880 = vmatprep.subr.mxu0 0.0
    %881 = vmatpush1.msra.mxu0 0.0
    %882 = vmatprep.subr.mxu0 0.0
    %883 = vmatpush1.msra.mxu0 0.0
    %884 = vmatprep.subr.mxu0 0.0
    %885 = vmatpush1.msra.mxu0 0.0
    %886 = vmatprep.subr.mxu0 0.0
    %887 = vmatpush1.msra.mxu0 0.0
    %888 = vmatprep.subr.mxu0 0.0
    %889 = vmatpush1.msra.mxu0 0.0
    %890 = vmatprep.subr.mxu0 0.0
    %891 = vmatpush1.msra.mxu0 0.0
    %892 = vmatprep.subr.mxu0 0.0
    %893 = vmatpush1.msra.mxu0 0.0
    %894 = vmatprep.subr.mxu0 0.0
    %895 = vmatpush1.msra.mxu0 0.0
    %896 = vmatprep.mubr.f32.mxu0 0.0
    %v897 = vand.u32 %v468, 4294901760
    %v898 = vsub.f32 %v468, %v897
    %v899 = vand.u32 %v898, 4294901760
    %900 = vmatmul.mubr.f32.gmra.mrb[0].mxu0 %v899
    %v901 = vpop.f32.mrb[0].mxu0
    %v902 = vadd.f32 %v813, %v901
    %v903 = vpop.f32.mrb[0].mxu0
    %904 = vdwg.mxu0
    %905 = vmatprep.subr.mxu0 0.0
    %v906 = vand.u32 %v400, 4294901760
    %v907 = vsub.f32 %v400, %v906
    %v908 = vand.u32 %v907, 4294901760
    %909 = vmatpush1.msra.mxu0 %v908
    %910 = vmatprep.subr.mxu0 0.0
    %v911 = vand.u32 %v401, 4294901760
    %v912 = vsub.f32 %v401, %v911
    %v913 = vand.u32 %v912, 4294901760
    %914 = vmatpush1.msra.mxu0 %v913
    %915 = vmatprep.subr.mxu0 0.0
    %v916 = vand.u32 %v402, 4294901760
    %v917 = vsub.f32 %v402, %v916
    %v918 = vand.u32 %v917, 4294901760
    %919 = vmatpush1.msra.mxu0 %v918
    %920 = vmatprep.subr.mxu0 0.0
    %v921 = vand.u32 %v403, 4294901760
    %v922 = vsub.f32 %v403, %v921
    %v923 = vand.u32 %v922, 4294901760
    %924 = vmatpush1.msra.mxu0 %v923
    %925 = vmatprep.subr.mxu0 0.0
    %v926 = vand.u32 %v404, 4294901760
    %v927 = vsub.f32 %v404, %v926
    %v928 = vand.u32 %v927, 4294901760
    %929 = vmatpush1.msra.mxu0 %v928
    %930 = vmatprep.subr.mxu0 0.0
    %v931 = vand.u32 %v405, 4294901760
    %v932 = vsub.f32 %v405, %v931
    %v933 = vand.u32 %v932, 4294901760
    %934 = vmatpush1.msra.mxu0 %v933
    %935 = vmatprep.subr.mxu0 0.0
    %v936 = vand.u32 %v406, 4294901760
    %v937 = vsub.f32 %v406, %v936
    %v938 = vand.u32 %v937, 4294901760
    %939 = vmatpush1.msra.mxu0 %v938
    %940 = vmatprep.subr.mxu0 0.0
    %v941 = vand.u32 %v407, 4294901760
    %v942 = vsub.f32 %v407, %v941
    %v943 = vand.u32 %v942, 4294901760
    %944 = vmatpush1.msra.mxu0 %v943
    %945 = vmatprep.subr.mxu0 0.0
    %v946 = vand.u32 %v408, 4294901760
    %v947 = vsub.f32 %v408, %v946
    %v948 = vand.u32 %v947, 4294901760
    %949 = vmatpush1.msra.mxu0 %v948
    %950 = vmatprep.subr.mxu0 0.0
    %v951 = vand.u32 %v409, 4294901760
    %v952 = vsub.f32 %v409, %v951
    %v953 = vand.u32 %v952, 4294901760
    %954 = vmatpush1.msra.mxu0 %v953
    %955 = vmatprep.subr.mxu0 0.0
    %v956 = vand.u32 %v410, 4294901760
    %v957 = vsub.f32 %v410, %v956
    %v958 = vand.u32 %v957, 4294901760
    %959 = vmatpush1.msra.mxu0 %v958
    %960 = vmatprep.subr.mxu0 0.0
    %v961 = vand.u32 %v411, 4294901760
    %v962 = vsub.f32 %v411, %v961
    %v963 = vand.u32 %v962, 4294901760
    %964 = vmatpush1.msra.mxu0 %v963
    %965 = vmatprep.subr.mxu0 0.0
    %v966 = vand.u32 %v412, 4294901760
    %v967 = vsub.f32 %v412, %v966
    %v968 = vand.u32 %v967, 4294901760
    %969 = vmatpush1.msra.mxu0 %v968
    %970 = vmatprep.subr.mxu0 0.0
    %v971 = vand.u32 %v413, 4294901760
    %v972 = vsub.f32 %v413, %v971
    %v973 = vand.u32 %v972, 4294901760
    %974 = vmatpush1.msra.mxu0 %v973
    %975 = vmatprep.subr.mxu0 0.0
    %v976 = vand.u32 %v414, 4294901760
    %v977 = vsub.f32 %v414, %v976
    %v978 = vand.u32 %v977, 4294901760
    %979 = vmatpush1.msra.mxu0 %v978
    %980 = vmatprep.subr.mxu0 0.0
    %v981 = vand.u32 %v415, 4294901760
    %v982 = vsub.f32 %v415, %v981
    %v983 = vand.u32 %v982, 4294901760
    %984 = vmatpush1.msra.mxu0 %v983
    %985 = vmatprep.subr.mxu0 0.0
    %986 = vmatpush1.msra.mxu0 0.0
    %987 = vmatprep.subr.mxu0 0.0
    %988 = vmatpush1.msra.mxu0 0.0
    %989 = vmatprep.subr.mxu0 0.0
    %990 = vmatpush1.msra.mxu0 0.0
    %991 = vmatprep.subr.mxu0 0.0
    %992 = vmatpush1.msra.mxu0 0.0
    %993 = vmatprep.subr.mxu0 0.0
    %994 = vmatpush1.msra.mxu0 0.0
    %995 = vmatprep.subr.mxu0 0.0
    %996 = vmatpush1.msra.mxu0 0.0
    %997 = vmatprep.subr.mxu0 0.0
    %998 = vmatpush1.msra.mxu0 0.0
    %999 = vmatprep.subr.mxu0 0.0
    %1000 = vmatpush1.msra.mxu0 0.0
    %1001 = vmatprep.subr.mxu0 0.0
    %1002 = vmatpush1.msra.mxu0 0.0
    %1003 = vmatprep.subr.mxu0 0.0
    %1004 = vmatpush1.msra.mxu0 0.0
    %1005 = vmatprep.subr.mxu0 0.0
    %1006 = vmatpush1.msra.mxu0 0.0
    %1007 = vmatprep.subr.mxu0 0.0
    %1008 = vmatpush1.msra.mxu0 0.0
    %1009 = vmatprep.subr.mxu0 0.0
    %1010 = vmatpush1.msra.mxu0 0.0
    %1011 = vmatprep.subr.mxu0 0.0
    %1012 = vmatpush1.msra.mxu0 0.0
    %1013 = vmatprep.subr.mxu0 0.0
    %1014 = vmatpush1.msra.mxu0 0.0
    %1015 = vmatprep.subr.mxu0 0.0
    %1016 = vmatpush1.msra.mxu0 0.0
    %1017 = vmatprep.mubr.f32.mxu0 0.0
    %v1018 = vand.u32 %v468, 4294901760
    %1019 = vmatmul.mubr.f32.gmra.mrb[0].mxu0 %v1018
    %v1020 = vpop.f32.mrb[0].mxu0
    %v1021 = vadd.f32 %v902, %v1020
    %v1022 = vpop.f32.mrb[0].mxu0
    %1023 = vdwg.mxu0
    %1024 = vmatprep.subr.mxu0 0.0
    %v1025 = vand.u32 %v400, 4294901760
    %1026 = vmatpush1.msra.mxu0 %v1025
    %1027 = vmatprep.subr.mxu0 0.0
    %v1028 = vand.u32 %v401, 4294901760
    %1029 = vmatpush1.msra.mxu0 %v1028
    %1030 = vmatprep.subr.mxu0 0.0
    %v1031 = vand.u32 %v402, 4294901760
    %1032 = vmatpush1.msra.mxu0 %v1031
    %1033 = vmatprep.subr.mxu0 0.0
    %v1034 = vand.u32 %v403, 4294901760
    %1035 = vmatpush1.msra.mxu0 %v1034
    %1036 = vmatprep.subr.mxu0 0.0
    %v1037 = vand.u32 %v404, 4294901760
    %1038 = vmatpush1.msra.mxu0 %v1037
    %1039 = vmatprep.subr.mxu0 0.0
    %v1040 = vand.u32 %v405, 4294901760
    %1041 = vmatpush1.msra.mxu0 %v1040
    %1042 = vmatprep.subr.mxu0 0.0
    %v1043 = vand.u32 %v406, 4294901760
    %1044 = vmatpush1.msra.mxu0 %v1043
    %1045 = vmatprep.subr.mxu0 0.0
    %v1046 = vand.u32 %v407, 4294901760
    %1047 = vmatpush1.msra.mxu0 %v1046
    %1048 = vmatprep.subr.mxu0 0.0
    %v1049 = vand.u32 %v408, 4294901760
    %1050 = vmatpush1.msra.mxu0 %v1049
    %1051 = vmatprep.subr.mxu0 0.0
    %v1052 = vand.u32 %v409, 4294901760
    %1053 = vmatpush1.msra.mxu0 %v1052
    %1054 = vmatprep.subr.mxu0 0.0
    %v1055 = vand.u32 %v410, 4294901760
    %1056 = vmatpush1.msra.mxu0 %v1055
    %1057 = vmatprep.subr.mxu0 0.0
    %v1058 = vand.u32 %v411, 4294901760
    %1059 = vmatpush1.msra.mxu0 %v1058
    %1060 = vmatprep.subr.mxu0 0.0
    %v1061 = vand.u32 %v412, 4294901760
    %1062 = vmatpush1.msra.mxu0 %v1061
    %1063 = vmatprep.subr.mxu0 0.0
    %v1064 = vand.u32 %v413, 4294901760
    %1065 = vmatpush1.msra.mxu0 %v1064
    %1066 = vmatprep.subr.mxu0 0.0
    %v1067 = vand.u32 %v414, 4294901760
    %1068 = vmatpush1.msra.mxu0 %v1067
    %1069 = vmatprep.subr.mxu0 0.0
    %v1070 = vand.u32 %v415, 4294901760
    %1071 = vmatpush1.msra.mxu0 %v1070
    %1072 = vmatprep.subr.mxu0 0.0
    %1073 = vmatpush1.msra.mxu0 0.0
    %1074 = vmatprep.subr.mxu0 0.0
    %1075 = vmatpush1.msra.mxu0 0.0
    %1076 = vmatprep.subr.mxu0 0.0
    %1077 = vmatpush1.msra.mxu0 0.0
    %1078 = vmatprep.subr.mxu0 0.0
    %1079 = vmatpush1.msra.mxu0 0.0
    %1080 = vmatprep.subr.mxu0 0.0
    %1081 = vmatpush1.msra.mxu0 0.0
    %1082 = vmatprep.subr.mxu0 0.0
    %1083 = vmatpush1.msra.mxu0 0.0
    %1084 = vmatprep.subr.mxu0 0.0
    %1085 = vmatpush1.msra.mxu0 0.0
    %1086 = vmatprep.subr.mxu0 0.0
    %1087 = vmatpush1.msra.mxu0 0.0
    %1088 = vmatprep.subr.mxu0 0.0
    %1089 = vmatpush1.msra.mxu0 0.0
    %1090 = vmatprep.subr.mxu0 0.0
    %1091 = vmatpush1.msra.mxu0 0.0
    %1092 = vmatprep.subr.mxu0 0.0
    %1093 = vmatpush1.msra.mxu0 0.0
    %1094 = vmatprep.subr.mxu0 0.0
    %1095 = vmatpush1.msra.mxu0 0.0
    %1096 = vmatprep.subr.mxu0 0.0
    %1097 = vmatpush1.msra.mxu0 0.0
    %1098 = vmatprep.subr.mxu0 0.0
    %1099 = vmatpush1.msra.mxu0 0.0
    %1100 = vmatprep.subr.mxu0 0.0
    %1101 = vmatpush1.msra.mxu0 0.0
    %1102 = vmatprep.subr.mxu0 0.0
    %1103 = vmatpush1.msra.mxu0 0.0
    %1104 = vmatprep.mubr.f32.mxu0 0.0
    %v1105 = vand.u32 %v468, 4294901760
    %1106 = vmatmul.mubr.f32.gmra.mrb[0].mxu0 %v1105
    %v1107 = vpop.f32.mrb[0].mxu0
    %v1108 = vadd.f32 %v1021, %v1107
    %v1109 = vpop.f32.mrb[0].mxu0
    %1110 = vdwg.mxu0
    %1111 = vmatprep.subr.mxu0 0.0
    %v1112 = vand.u32 %v452, 4294901760
    %1113 = vmatpush1.msra.mxu0 %v1112
    %1114 = vmatprep.subr.mxu0 0.0
    %v1115 = vand.u32 %v453, 4294901760
    %1116 = vmatpush1.msra.mxu0 %v1115
    %1117 = vmatprep.subr.mxu0 0.0
    %v1118 = vand.u32 %v454, 4294901760
    %1119 = vmatpush1.msra.mxu0 %v1118
    %1120 = vmatprep.subr.mxu0 0.0
    %v1121 = vand.u32 %v455, 4294901760
    %1122 = vmatpush1.msra.mxu0 %v1121
    %1123 = vmatprep.subr.mxu0 0.0
    %v1124 = vand.u32 %v456, 4294901760
    %1125 = vmatpush1.msra.mxu0 %v1124
    %1126 = vmatprep.subr.mxu0 0.0
    %v1127 = vand.u32 %v457, 4294901760
    %1128 = vmatpush1.msra.mxu0 %v1127
    %1129 = vmatprep.subr.mxu0 0.0
    %v1130 = vand.u32 %v458, 4294901760
    %1131 = vmatpush1.msra.mxu0 %v1130
    %1132 = vmatprep.subr.mxu0 0.0
    %v1133 = vand.u32 %v459, 4294901760
    %1134 = vmatpush1.msra.mxu0 %v1133
    %1135 = vmatprep.subr.mxu0 0.0
    %v1136 = vand.u32 %v460, 4294901760
    %1137 = vmatpush1.msra.mxu0 %v1136
    %1138 = vmatprep.subr.mxu0 0.0
    %v1139 = vand.u32 %v461, 4294901760
    %1140 = vmatpush1.msra.mxu0 %v1139
    %1141 = vmatprep.subr.mxu0 0.0
    %v1142 = vand.u32 %v462, 4294901760
    %1143 = vmatpush1.msra.mxu0 %v1142
    %1144 = vmatprep.subr.mxu0 0.0
    %v1145 = vand.u32 %v463, 4294901760
    %1146 = vmatpush1.msra.mxu0 %v1145
    %1147 = vmatprep.subr.mxu0 0.0
    %v1148 = vand.u32 %v464, 4294901760
    %1149 = vmatpush1.msra.mxu0 %v1148
    %1150 = vmatprep.subr.mxu0 0.0
    %v1151 = vand.u32 %v465, 4294901760
    %1152 = vmatpush1.msra.mxu0 %v1151
    %1153 = vmatprep.subr.mxu0 0.0
    %v1154 = vand.u32 %v466, 4294901760
    %1155 = vmatpush1.msra.mxu0 %v1154
    %1156 = vmatprep.subr.mxu0 0.0
    %v1157 = vand.u32 %v467, 4294901760
    %1158 = vmatpush1.msra.mxu0 %v1157
    %1159 = vmatprep.subr.mxu0 0.0
    %1160 = vmatpush1.msra.mxu0 0.0
    %1161 = vmatprep.subr.mxu0 0.0
    %1162 = vmatpush1.msra.mxu0 0.0
    %1163 = vmatprep.subr.mxu0 0.0
    %1164 = vmatpush1.msra.mxu0 0.0
    %1165 = vmatprep.subr.mxu0 0.0
    %1166 = vmatpush1.msra.mxu0 0.0
    %1167 = vmatprep.subr.mxu0 0.0
    %1168 = vmatpush1.msra.mxu0 0.0
    %1169 = vmatprep.subr.mxu0 0.0
    %1170 = vmatpush1.msra.mxu0 0.0
    %1171 = vmatprep.subr.mxu0 0.0
    %1172 = vmatpush1.msra.mxu0 0.0
    %1173 = vmatprep.subr.mxu0 0.0
    %1174 = vmatpush1.msra.mxu0 0.0
    %1175 = vmatprep.subr.mxu0 0.0
    %1176 = vmatpush1.msra.mxu0 0.0
    %1177 = vmatprep.subr.mxu0 0.0
    %1178 = vmatpush1.msra.mxu0 0.0
    %1179 = vmatprep.subr.mxu0 0.0
    %1180 = vmatpush1.msra.mxu0 0.0
    %1181 = vmatprep.subr.mxu0 0.0
    %1182 = vmatpush1.msra.mxu0 0.0
    %1183 = vmatprep.subr.mxu0 0.0
    %1184 = vmatpush1.msra.mxu0 0.0
    %1185 = vmatprep.subr.mxu0 0.0
    %1186 = vmatpush1.msra.mxu0 0.0
    %1187 = vmatprep.subr.mxu0 0.0
    %1188 = vmatpush1.msra.mxu0 0.0
    %1189 = vmatprep.subr.mxu0 0.0
    %1190 = vmatpush1.msra.mxu0 0.0
    %1191 = vmatprep.mubr.f32.mxu0 0.0
    %v1192 = vand.u32 %v469, 4294901760
    %v1193 = vsub.f32 %v469, %v1192
    %v1194 = vand.u32 %v1193, 4294901760
    %v1195 = vsub.f32 %v1193, %v1194
    %v1196 = vand.u32 %v1195, 4294901760
    %1197 = vmatmul.mubr.f32.gmra.mrb[0].mxu0 %v1196
    %v1198 = vpop.f32.mrb[0].mxu0
    %v1199 = vadd.f32 0.0, %v1198
    %v1200 = vpop.f32.mrb[0].mxu0
    %1201 = vdwg.mxu0
    %1202 = vmatprep.subr.mxu0 0.0
    %v1203 = vand.u32 %v452, 4294901760
    %v1204 = vsub.f32 %v452, %v1203
    %v1205 = vand.u32 %v1204, 4294901760
    %v1206 = vsub.f32 %v1204, %v1205
    %v1207 = vand.u32 %v1206, 4294901760
    %1208 = vmatpush1.msra.mxu0 %v1207
    %1209 = vmatprep.subr.mxu0 0.0
    %v1210 = vand.u32 %v453, 4294901760
    %v1211 = vsub.f32 %v453, %v1210
    %v1212 = vand.u32 %v1211, 4294901760
    %v1213 = vsub.f32 %v1211, %v1212
    %v1214 = vand.u32 %v1213, 4294901760
    %1215 = vmatpush1.msra.mxu0 %v1214
    %1216 = vmatprep.subr.mxu0 0.0
    %v1217 = vand.u32 %v454, 4294901760
    %v1218 = vsub.f32 %v454, %v1217
    %v1219 = vand.u32 %v1218, 4294901760
    %v1220 = vsub.f32 %v1218, %v1219
    %v1221 = vand.u32 %v1220, 4294901760
    %1222 = vmatpush1.msra.mxu0 %v1221
    %1223 = vmatprep.subr.mxu0 0.0
    %v1224 = vand.u32 %v455, 4294901760
    %v1225 = vsub.f32 %v455, %v1224
    %v1226 = vand.u32 %v1225, 4294901760
    %v1227 = vsub.f32 %v1225, %v1226
    %v1228 = vand.u32 %v1227, 4294901760
    %1229 = vmatpush1.msra.mxu0 %v1228
    %1230 = vmatprep.subr.mxu0 0.0
    %v1231 = vand.u32 %v456, 4294901760
    %v1232 = vsub.f32 %v456, %v1231
    %v1233 = vand.u32 %v1232, 4294901760
    %v1234 = vsub.f32 %v1232, %v1233
    %v1235 = vand.u32 %v1234, 4294901760
    %1236 = vmatpush1.msra.mxu0 %v1235
    %1237 = vmatprep.subr.mxu0 0.0
    %v1238 = vand.u32 %v457, 4294901760
    %v1239 = vsub.f32 %v457, %v1238
    %v1240 = vand.u32 %v1239, 4294901760
    %v1241 = vsub.f32 %v1239, %v1240
    %v1242 = vand.u32 %v1241, 4294901760
    %1243 = vmatpush1.msra.mxu0 %v1242
    %1244 = vmatprep.subr.mxu0 0.0
    %v1245 = vand.u32 %v458, 4294901760
    %v1246 = vsub.f32 %v458, %v1245
    %v1247 = vand.u32 %v1246, 4294901760
    %v1248 = vsub.f32 %v1246, %v1247
    %v1249 = vand.u32 %v1248, 4294901760
    %1250 = vmatpush1.msra.mxu0 %v1249
    %1251 = vmatprep.subr.mxu0 0.0
    %v1252 = vand.u32 %v459, 4294901760
    %v1253 = vsub.f32 %v459, %v1252
    %v1254 = vand.u32 %v1253, 4294901760
    %v1255 = vsub.f32 %v1253, %v1254
    %v1256 = vand.u32 %v1255, 4294901760
    %1257 = vmatpush1.msra.mxu0 %v1256
    %1258 = vmatprep.subr.mxu0 0.0
    %v1259 = vand.u32 %v460, 4294901760
    %v1260 = vsub.f32 %v460, %v1259
    %v1261 = vand.u32 %v1260, 4294901760
    %v1262 = vsub.f32 %v1260, %v1261
    %v1263 = vand.u32 %v1262, 4294901760
    %1264 = vmatpush1.msra.mxu0 %v1263
    %1265 = vmatprep.subr.mxu0 0.0
    %v1266 = vand.u32 %v461, 4294901760
    %v1267 = vsub.f32 %v461, %v1266
    %v1268 = vand.u32 %v1267, 4294901760
    %v1269 = vsub.f32 %v1267, %v1268
    %v1270 = vand.u32 %v1269, 4294901760
    %1271 = vmatpush1.msra.mxu0 %v1270
    %1272 = vmatprep.subr.mxu0 0.0
    %v1273 = vand.u32 %v462, 4294901760
    %v1274 = vsub.f32 %v462, %v1273
    %v1275 = vand.u32 %v1274, 4294901760
    %v1276 = vsub.f32 %v1274, %v1275
    %v1277 = vand.u32 %v1276, 4294901760
    %1278 = vmatpush1.msra.mxu0 %v1277
    %1279 = vmatprep.subr.mxu0 0.0
    %v1280 = vand.u32 %v463, 4294901760
    %v1281 = vsub.f32 %v463, %v1280
    %v1282 = vand.u32 %v1281, 4294901760
    %v1283 = vsub.f32 %v1281, %v1282
    %v1284 = vand.u32 %v1283, 4294901760
    %1285 = vmatpush1.msra.mxu0 %v1284
    %1286 = vmatprep.subr.mxu0 0.0
    %v1287 = vand.u32 %v464, 4294901760
    %v1288 = vsub.f32 %v464, %v1287
    %v1289 = vand.u32 %v1288, 4294901760
    %v1290 = vsub.f32 %v1288, %v1289
    %v1291 = vand.u32 %v1290, 4294901760
    %1292 = vmatpush1.msra.mxu0 %v1291
    %1293 = vmatprep.subr.mxu0 0.0
    %v1294 = vand.u32 %v465, 4294901760
    %v1295 = vsub.f32 %v465, %v1294
    %v1296 = vand.u32 %v1295, 4294901760
    %v1297 = vsub.f32 %v1295, %v1296
    %v1298 = vand.u32 %v1297, 4294901760
    %1299 = vmatpush1.msra.mxu0 %v1298
    %1300 = vmatprep.subr.mxu0 0.0
    %v1301 = vand.u32 %v466, 4294901760
    %v1302 = vsub.f32 %v466, %v1301
    %v1303 = vand.u32 %v1302, 4294901760
    %v1304 = vsub.f32 %v1302, %v1303
    %v1305 = vand.u32 %v1304, 4294901760
    %1306 = vmatpush1.msra.mxu0 %v1305
    %1307 = vmatprep.subr.mxu0 0.0
    %v1308 = vand.u32 %v467, 4294901760
    %v1309 = vsub.f32 %v467, %v1308
    %v1310 = vand.u32 %v1309, 4294901760
    %v1311 = vsub.f32 %v1309, %v1310
    %v1312 = vand.u32 %v1311, 4294901760
    %1313 = vmatpush1.msra.mxu0 %v1312
    %1314 = vmatprep.subr.mxu0 0.0
    %1315 = vmatpush1.msra.mxu0 0.0
    %1316 = vmatprep.subr.mxu0 0.0
    %1317 = vmatpush1.msra.mxu0 0.0
    %1318 = vmatprep.subr.mxu0 0.0
    %1319 = vmatpush1.msra.mxu0 0.0
    %1320 = vmatprep.subr.mxu0 0.0
    %1321 = vmatpush1.msra.mxu0 0.0
    %1322 = vmatprep.subr.mxu0 0.0
    %1323 = vmatpush1.msra.mxu0 0.0
    %1324 = vmatprep.subr.mxu0 0.0
    %1325 = vmatpush1.msra.mxu0 0.0
    %1326 = vmatprep.subr.mxu0 0.0
    %1327 = vmatpush1.msra.mxu0 0.0
    %1328 = vmatprep.subr.mxu0 0.0
    %1329 = vmatpush1.msra.mxu0 0.0
    %1330 = vmatprep.subr.mxu0 0.0
    %1331 = vmatpush1.msra.mxu0 0.0
    %1332 = vmatprep.subr.mxu0 0.0
    %1333 = vmatpush1.msra.mxu0 0.0
    %1334 = vmatprep.subr.mxu0 0.0
    %1335 = vmatpush1.msra.mxu0 0.0
    %1336 = vmatprep.subr.mxu0 0.0
    %1337 = vmatpush1.msra.mxu0 0.0
    %1338 = vmatprep.subr.mxu0 0.0
    %1339 = vmatpush1.msra.mxu0 0.0
    %1340 = vmatprep.subr.mxu0 0.0
    %1341 = vmatpush1.msra.mxu0 0.0
    %1342 = vmatprep.subr.mxu0 0.0
    %1343 = vmatpush1.msra.mxu0 0.0
    %1344 = vmatprep.subr.mxu0 0.0
    %1345 = vmatpush1.msra.mxu0 0.0
    %1346 = vmatprep.mubr.f32.mxu0 0.0
    %v1347 = vand.u32 %v469, 4294901760
    %1348 = vmatmul.mubr.f32.gmra.mrb[0].mxu0 %v1347
    %v1349 = vpop.f32.mrb[0].mxu0
    %v1350 = vadd.f32 %v1199, %v1349
    %v1351 = vpop.f32.mrb[0].mxu0
    %1352 = vdwg.mxu0
    %1353 = vmatprep.subr.mxu0 0.0
    %v1354 = vand.u32 %v452, 4294901760
    %v1355 = vsub.f32 %v452, %v1354
    %1356 = vmatpush1.msra.mxu0 %v1355
    %1357 = vmatprep.subr.mxu0 0.0
    %v1358 = vand.u32 %v453, 4294901760
    %v1359 = vsub.f32 %v453, %v1358
    %1360 = vmatpush1.msra.mxu0 %v1359
    %1361 = vmatprep.subr.mxu0 0.0
    %v1362 = vand.u32 %v454, 4294901760
    %v1363 = vsub.f32 %v454, %v1362
    %1364 = vmatpush1.msra.mxu0 %v1363
    %1365 = vmatprep.subr.mxu0 0.0
    %v1366 = vand.u32 %v455, 4294901760
    %v1367 = vsub.f32 %v455, %v1366
    %1368 = vmatpush1.msra.mxu0 %v1367
    %1369 = vmatprep.subr.mxu0 0.0
    %v1370 = vand.u32 %v456, 4294901760
    %v1371 = vsub.f32 %v456, %v1370
    %1372 = vmatpush1.msra.mxu0 %v1371
    %1373 = vmatprep.subr.mxu0 0.0
    %v1374 = vand.u32 %v457, 4294901760
    %v1375 = vsub.f32 %v457, %v1374
    %1376 = vmatpush1.msra.mxu0 %v1375
    %1377 = vmatprep.subr.mxu0 0.0
    %v1378 = vand.u32 %v458, 4294901760
    %v1379 = vsub.f32 %v458, %v1378
    %1380 = vmatpush1.msra.mxu0 %v1379
    %1381 = vmatprep.subr.mxu0 0.0
    %v1382 = vand.u32 %v459, 4294901760
    %v1383 = vsub.f32 %v459, %v1382
    %1384 = vmatpush1.msra.mxu0 %v1383
    %1385 = vmatprep.subr.mxu0 0.0
    %v1386 = vand.u32 %v460, 4294901760
    %v1387 = vsub.f32 %v460, %v1386
    %1388 = vmatpush1.msra.mxu0 %v1387
    %1389 = vmatprep.subr.mxu0 0.0
    %v1390 = vand.u32 %v461, 4294901760
    %v1391 = vsub.f32 %v461, %v1390
    %1392 = vmatpush1.msra.mxu0 %v1391
    %1393 = vmatprep.subr.mxu0 0.0
    %v1394 = vand.u32 %v462, 4294901760
    %v1395 = vsub.f32 %v462, %v1394
    %1396 = vmatpush1.msra.mxu0 %v1395
    %1397 = vmatprep.subr.mxu0 0.0
    %v1398 = vand.u32 %v463, 4294901760
    %v1399 = vsub.f32 %v463, %v1398
    %1400 = vmatpush1.msra.mxu0 %v1399
    %1401 = vmatprep.subr.mxu0 0.0
    %v1402 = vand.u32 %v464, 4294901760
    %v1403 = vsub.f32 %v464, %v1402
    %1404 = vmatpush1.msra.mxu0 %v1403
    %1405 = vmatprep.subr.mxu0 0.0
    %v1406 = vand.u32 %v465, 4294901760
    %v1407 = vsub.f32 %v465, %v1406
    %1408 = vmatpush1.msra.mxu0 %v1407
    %1409 = vmatprep.subr.mxu0 0.0
    %v1410 = vand.u32 %v466, 4294901760
    %v1411 = vsub.f32 %v466, %v1410
    %1412 = vmatpush1.msra.mxu0 %v1411
    %1413 = vmatprep.subr.mxu0 0.0
    %v1414 = vand.u32 %v467, 4294901760
    %v1415 = vsub.f32 %v467, %v1414
    %1416 = vmatpush1.msra.mxu0 %v1415
    %1417 = vmatprep.subr.mxu0 0.0
    %1418 = vmatpush1.msra.mxu0 0.0
    %1419 = vmatprep.subr.mxu0 0.0
    %1420 = vmatpush1.msra.mxu0 0.0
    %1421 = vmatprep.subr.mxu0 0.0
    %1422 = vmatpush1.msra.mxu0 0.0
    %1423 = vmatprep.subr.mxu0 0.0
    %1424 = vmatpush1.msra.mxu0 0.0
    %1425 = vmatprep.subr.mxu0 0.0
    %1426 = vmatpush1.msra.mxu0 0.0
    %1427 = vmatprep.subr.mxu0 0.0
    %1428 = vmatpush1.msra.mxu0 0.0
    %1429 = vmatprep.subr.mxu0 0.0
    %1430 = vmatpush1.msra.mxu0 0.0
    %1431 = vmatprep.subr.mxu0 0.0
    %1432 = vmatpush1.msra.mxu0 0.0
    %1433 = vmatprep.subr.mxu0 0.0
    %1434 = vmatpush1.msra.mxu0 0.0
    %1435 = vmatprep.subr.mxu0 0.0
    %1436 = vmatpush1.msra.mxu0 0.0
    %1437 = vmatprep.subr.mxu0 0.0
    %1438 = vmatpush1.msra.mxu0 0.0
    %1439 = vmatprep.subr.mxu0 0.0
    %1440 = vmatpush1.msra.mxu0 0.0
    %1441 = vmatprep.subr.mxu0 0.0
    %1442 = vmatpush1.msra.mxu0 0.0
    %1443 = vmatprep.subr.mxu0 0.0
    %1444 = vmatpush1.msra.mxu0 0.0
    %1445 = vmatprep.subr.mxu0 0.0
    %1446 = vmatpush1.msra.mxu0 0.0
    %1447 = vmatprep.subr.mxu0 0.0
    %1448 = vmatpush1.msra.mxu0 0.0
    %1449 = vmatprep.mubr.f32.mxu0 0.0
    %v1450 = vand.u32 %v469, 4294901760
    %v1451 = vsub.f32 %v469, %v1450
    %1452 = vmatmul.mubr.f32.gmra.mrb[0].mxu0 %v1451
    %v1453 = vpop.f32.mrb[0].mxu0
    %v1454 = vadd.f32 %v1350, %v1453
    %v1455 = vpop.f32.mrb[0].mxu0
    %1456 = vdwg.mxu0
    %1457 = vmatprep.subr.mxu0 0.0
    %v1458 = vand.u32 %v452, 4294901760
    %1459 = vmatpush1.msra.mxu0 %v1458
    %1460 = vmatprep.subr.mxu0 0.0
    %v1461 = vand.u32 %v453, 4294901760
    %1462 = vmatpush1.msra.mxu0 %v1461
    %1463 = vmatprep.subr.mxu0 0.0
    %v1464 = vand.u32 %v454, 4294901760
    %1465 = vmatpush1.msra.mxu0 %v1464
    %1466 = vmatprep.subr.mxu0 0.0
    %v1467 = vand.u32 %v455, 4294901760
    %1468 = vmatpush1.msra.mxu0 %v1467
    %1469 = vmatprep.subr.mxu0 0.0
    %v1470 = vand.u32 %v456, 4294901760
    %1471 = vmatpush1.msra.mxu0 %v1470
    %1472 = vmatprep.subr.mxu0 0.0
    %v1473 = vand.u32 %v457, 4294901760
    %1474 = vmatpush1.msra.mxu0 %v1473
    %1475 = vmatprep.subr.mxu0 0.0
    %v1476 = vand.u32 %v458, 4294901760
    %1477 = vmatpush1.msra.mxu0 %v1476
    %1478 = vmatprep.subr.mxu0 0.0
    %v1479 = vand.u32 %v459, 4294901760
    %1480 = vmatpush1.msra.mxu0 %v1479
    %1481 = vmatprep.subr.mxu0 0.0
    %v1482 = vand.u32 %v460, 4294901760
    %1483 = vmatpush1.msra.mxu0 %v1482
    %1484 = vmatprep.subr.mxu0 0.0
    %v1485 = vand.u32 %v461, 4294901760
    %1486 = vmatpush1.msra.mxu0 %v1485
    %1487 = vmatprep.subr.mxu0 0.0
    %v1488 = vand.u32 %v462, 4294901760
    %1489 = vmatpush1.msra.mxu0 %v1488
    %1490 = vmatprep.subr.mxu0 0.0
    %v1491 = vand.u32 %v463, 4294901760
    %1492 = vmatpush1.msra.mxu0 %v1491
    %1493 = vmatprep.subr.mxu0 0.0
    %v1494 = vand.u32 %v464, 4294901760
    %1495 = vmatpush1.msra.mxu0 %v1494
    %1496 = vmatprep.subr.mxu0 0.0
    %v1497 = vand.u32 %v465, 4294901760
    %1498 = vmatpush1.msra.mxu0 %v1497
    %1499 = vmatprep.subr.mxu0 0.0
    %v1500 = vand.u32 %v466, 4294901760
    %1501 = vmatpush1.msra.mxu0 %v1500
    %1502 = vmatprep.subr.mxu0 0.0
    %v1503 = vand.u32 %v467, 4294901760
    %1504 = vmatpush1.msra.mxu0 %v1503
    %1505 = vmatprep.subr.mxu0 0.0
    %1506 = vmatpush1.msra.mxu0 0.0
    %1507 = vmatprep.subr.mxu0 0.0
    %1508 = vmatpush1.msra.mxu0 0.0
    %1509 = vmatprep.subr.mxu0 0.0
    %1510 = vmatpush1.msra.mxu0 0.0
    %1511 = vmatprep.subr.mxu0 0.0
    %1512 = vmatpush1.msra.mxu0 0.0
    %1513 = vmatprep.subr.mxu0 0.0
    %1514 = vmatpush1.msra.mxu0 0.0
    %1515 = vmatprep.subr.mxu0 0.0
    %1516 = vmatpush1.msra.mxu0 0.0
    %1517 = vmatprep.subr.mxu0 0.0
    %1518 = vmatpush1.msra.mxu0 0.0
    %1519 = vmatprep.subr.mxu0 0.0
    %1520 = vmatpush1.msra.mxu0 0.0
    %1521 = vmatprep.subr.mxu0 0.0
    %1522 = vmatpush1.msra.mxu0 0.0
    %1523 = vmatprep.subr.mxu0 0.0
    %1524 = vmatpush1.msra.mxu0 0.0
    %1525 = vmatprep.subr.mxu0 0.0
    %1526 = vmatpush1.msra.mxu0 0.0
    %1527 = vmatprep.subr.mxu0 0.0
    %1528 = vmatpush1.msra.mxu0 0.0
    %1529 = vmatprep.subr.mxu0 0.0
    %1530 = vmatpush1.msra.mxu0 0.0
    %1531 = vmatprep.subr.mxu0 0.0
    %1532 = vmatpush1.msra.mxu0 0.0
    %1533 = vmatprep.subr.mxu0 0.0
    %1534 = vmatpush1.msra.mxu0 0.0
    %1535 = vmatprep.subr.mxu0 0.0
    %1536 = vmatpush1.msra.mxu0 0.0
    %1537 = vmatprep.mubr.f32.mxu0 0.0
    %v1538 = vand.u32 %v469, 4294901760
    %v1539 = vsub.f32 %v469, %v1538
    %v1540 = vand.u32 %v1539, 4294901760
    %1541 = vmatmul.mubr.f32.gmra.mrb[0].mxu0 %v1540
    %v1542 = vpop.f32.mrb[0].mxu0
    %v1543 = vadd.f32 %v1454, %v1542
    %v1544 = vpop.f32.mrb[0].mxu0
    %1545 = vdwg.mxu0
    %1546 = vmatprep.subr.mxu0 0.0
    %v1547 = vand.u32 %v452, 4294901760
    %v1548 = vsub.f32 %v452, %v1547
    %v1549 = vand.u32 %v1548, 4294901760
    %1550 = vmatpush1.msra.mxu0 %v1549
    %1551 = vmatprep.subr.mxu0 0.0
    %v1552 = vand.u32 %v453, 4294901760
    %v1553 = vsub.f32 %v453, %v1552
    %v1554 = vand.u32 %v1553, 4294901760
    %1555 = vmatpush1.msra.mxu0 %v1554
    %1556 = vmatprep.subr.mxu0 0.0
    %v1557 = vand.u32 %v454, 4294901760
    %v1558 = vsub.f32 %v454, %v1557
    %v1559 = vand.u32 %v1558, 4294901760
    %1560 = vmatpush1.msra.mxu0 %v1559
    %1561 = vmatprep.subr.mxu0 0.0
    %v1562 = vand.u32 %v455, 4294901760
    %v1563 = vsub.f32 %v455, %v1562
    %v1564 = vand.u32 %v1563, 4294901760
    %1565 = vmatpush1.msra.mxu0 %v1564
    %1566 = vmatprep.subr.mxu0 0.0
    %v1567 = vand.u32 %v456, 4294901760
    %v1568 = vsub.f32 %v456, %v1567
    %v1569 = vand.u32 %v1568, 4294901760
    %1570 = vmatpush1.msra.mxu0 %v1569
    %1571 = vmatprep.subr.mxu0 0.0
    %v1572 = vand.u32 %v457, 4294901760
    %v1573 = vsub.f32 %v457, %v1572
    %v1574 = vand.u32 %v1573, 4294901760
    %1575 = vmatpush1.msra.mxu0 %v1574
    %1576 = vmatprep.subr.mxu0 0.0
    %v1577 = vand.u32 %v458, 4294901760
    %v1578 = vsub.f32 %v458, %v1577
    %v1579 = vand.u32 %v1578, 4294901760
    %1580 = vmatpush1.msra.mxu0 %v1579
    %1581 = vmatprep.subr.mxu0 0.0
    %v1582 = vand.u32 %v459, 4294901760
    %v1583 = vsub.f32 %v459, %v1582
    %v1584 = vand.u32 %v1583, 4294901760
    %1585 = vmatpush1.msra.mxu0 %v1584
    %1586 = vmatprep.subr.mxu0 0.0
    %v1587 = vand.u32 %v460, 4294901760
    %v1588 = vsub.f32 %v460, %v1587
    %v1589 = vand.u32 %v1588, 4294901760
    %1590 = vmatpush1.msra.mxu0 %v1589
    %1591 = vmatprep.subr.mxu0 0.0
    %v1592 = vand.u32 %v461, 4294901760
    %v1593 = vsub.f32 %v461, %v1592
    %v1594 = vand.u32 %v1593, 4294901760
    %1595 = vmatpush1.msra.mxu0 %v1594
    %1596 = vmatprep.subr.mxu0 0.0
    %v1597 = vand.u32 %v462, 4294901760
    %v1598 = vsub.f32 %v462, %v1597
    %v1599 = vand.u32 %v1598, 4294901760
    %1600 = vmatpush1.msra.mxu0 %v1599
    %1601 = vmatprep.subr.mxu0 0.0
    %v1602 = vand.u32 %v463, 4294901760
    %v1603 = vsub.f32 %v463, %v1602
    %v1604 = vand.u32 %v1603, 4294901760
    %1605 = vmatpush1.msra.mxu0 %v1604
    %1606 = vmatprep.subr.mxu0 0.0
    %v1607 = vand.u32 %v464, 4294901760
    %v1608 = vsub.f32 %v464, %v1607
    %v1609 = vand.u32 %v1608, 4294901760
    %1610 = vmatpush1.msra.mxu0 %v1609
    %1611 = vmatprep.subr.mxu0 0.0
    %v1612 = vand.u32 %v465, 4294901760
    %v1613 = vsub.f32 %v465, %v1612
    %v1614 = vand.u32 %v1613, 4294901760
    %1615 = vmatpush1.msra.mxu0 %v1614
    %1616 = vmatprep.subr.mxu0 0.0
    %v1617 = vand.u32 %v466, 4294901760
    %v1618 = vsub.f32 %v466, %v1617
    %v1619 = vand.u32 %v1618, 4294901760
    %1620 = vmatpush1.msra.mxu0 %v1619
    %1621 = vmatprep.subr.mxu0 0.0
    %v1622 = vand.u32 %v467, 4294901760
    %v1623 = vsub.f32 %v467, %v1622
    %v1624 = vand.u32 %v1623, 4294901760
    %1625 = vmatpush1.msra.mxu0 %v1624
    %1626 = vmatprep.subr.mxu0 0.0
    %1627 = vmatpush1.msra.mxu0 0.0
    %1628 = vmatprep.subr.mxu0 0.0
    %1629 = vmatpush1.msra.mxu0 0.0
    %1630 = vmatprep.subr.mxu0 0.0
    %1631 = vmatpush1.msra.mxu0 0.0
    %1632 = vmatprep.subr.mxu0 0.0
    %1633 = vmatpush1.msra.mxu0 0.0
    %1634 = vmatprep.subr.mxu0 0.0
    %1635 = vmatpush1.msra.mxu0 0.0
    %1636 = vmatprep.subr.mxu0 0.0
    %1637 = vmatpush1.msra.mxu0 0.0
    %1638 = vmatprep.subr.mxu0 0.0
    %1639 = vmatpush1.msra.mxu0 0.0
    %1640 = vmatprep.subr.mxu0 0.0
    %1641 = vmatpush1.msra.mxu0 0.0
    %1642 = vmatprep.subr.mxu0 0.0
    %1643 = vmatpush1.msra.mxu0 0.0
    %1644 = vmatprep.subr.mxu0 0.0
    %1645 = vmatpush1.msra.mxu0 0.0
    %1646 = vmatprep.subr.mxu0 0.0
    %1647 = vmatpush1.msra.mxu0 0.0
    %1648 = vmatprep.subr.mxu0 0.0
    %1649 = vmatpush1.msra.mxu0 0.0
    %1650 = vmatprep.subr.mxu0 0.0
    %1651 = vmatpush1.msra.mxu0 0.0
    %1652 = vmatprep.subr.mxu0 0.0
    %1653 = vmatpush1.msra.mxu0 0.0
    %1654 = vmatprep.subr.mxu0 0.0
    %1655 = vmatpush1.msra.mxu0 0.0
    %1656 = vmatprep.subr.mxu0 0.0
    %1657 = vmatpush1.msra.mxu0 0.0
    %1658 = vmatprep.mubr.f32.mxu0 0.0
    %v1659 = vand.u32 %v469, 4294901760
    %1660 = vmatmul.mubr.f32.gmra.mrb[0].mxu0 %v1659
    %v1661 = vpop.f32.mrb[0].mxu0
    %v1662 = vadd.f32 %v1543, %v1661
    %v1663 = vpop.f32.mrb[0].mxu0
    %1664 = vdwg.mxu0
    %1665 = vmatprep.subr.mxu0 0.0
    %v1666 = vand.u32 %v452, 4294901760
    %1667 = vmatpush1.msra.mxu0 %v1666
    %1668 = vmatprep.subr.mxu0 0.0
    %v1669 = vand.u32 %v453, 4294901760
    %1670 = vmatpush1.msra.mxu0 %v1669
    %1671 = vmatprep.subr.mxu0 0.0
    %v1672 = vand.u32 %v454, 4294901760
    %1673 = vmatpush1.msra.mxu0 %v1672
    %1674 = vmatprep.subr.mxu0 0.0
    %v1675 = vand.u32 %v455, 4294901760
    %1676 = vmatpush1.msra.mxu0 %v1675
    %1677 = vmatprep.subr.mxu0 0.0
    %v1678 = vand.u32 %v456, 4294901760
    %1679 = vmatpush1.msra.mxu0 %v1678
    %1680 = vmatprep.subr.mxu0 0.0
    %v1681 = vand.u32 %v457, 4294901760
    %1682 = vmatpush1.msra.mxu0 %v1681
    %1683 = vmatprep.subr.mxu0 0.0
    %v1684 = vand.u32 %v458, 4294901760
    %1685 = vmatpush1.msra.mxu0 %v1684
    %1686 = vmatprep.subr.mxu0 0.0
    %v1687 = vand.u32 %v459, 4294901760
    %1688 = vmatpush1.msra.mxu0 %v1687
    %1689 = vmatprep.subr.mxu0 0.0
    %v1690 = vand.u32 %v460, 4294901760
    %1691 = vmatpush1.msra.mxu0 %v1690
    %1692 = vmatprep.subr.mxu0 0.0
    %v1693 = vand.u32 %v461, 4294901760
    %1694 = vmatpush1.msra.mxu0 %v1693
    %1695 = vmatprep.subr.mxu0 0.0
    %v1696 = vand.u32 %v462, 4294901760
    %1697 = vmatpush1.msra.mxu0 %v1696
    %1698 = vmatprep.subr.mxu0 0.0
    %v1699 = vand.u32 %v463, 4294901760
    %1700 = vmatpush1.msra.mxu0 %v1699
    %1701 = vmatprep.subr.mxu0 0.0
    %v1702 = vand.u32 %v464, 4294901760
    %1703 = vmatpush1.msra.mxu0 %v1702
    %1704 = vmatprep.subr.mxu0 0.0
    %v1705 = vand.u32 %v465, 4294901760
    %1706 = vmatpush1.msra.mxu0 %v1705
    %1707 = vmatprep.subr.mxu0 0.0
    %v1708 = vand.u32 %v466, 4294901760
    %1709 = vmatpush1.msra.mxu0 %v1708
    %1710 = vmatprep.subr.mxu0 0.0
    %v1711 = vand.u32 %v467, 4294901760
    %1712 = vmatpush1.msra.mxu0 %v1711
    %1713 = vmatprep.subr.mxu0 0.0
    %1714 = vmatpush1.msra.mxu0 0.0
    %1715 = vmatprep.subr.mxu0 0.0
    %1716 = vmatpush1.msra.mxu0 0.0
    %1717 = vmatprep.subr.mxu0 0.0
    %1718 = vmatpush1.msra.mxu0 0.0
    %1719 = vmatprep.subr.mxu0 0.0
    %1720 = vmatpush1.msra.mxu0 0.0
    %1721 = vmatprep.subr.mxu0 0.0
    %1722 = vmatpush1.msra.mxu0 0.0
    %1723 = vmatprep.subr.mxu0 0.0
    %1724 = vmatpush1.msra.mxu0 0.0
    %1725 = vmatprep.subr.mxu0 0.0
    %1726 = vmatpush1.msra.mxu0 0.0
    %1727 = vmatprep.subr.mxu0 0.0
    %1728 = vmatpush1.msra.mxu0 0.0
    %1729 = vmatprep.subr.mxu0 0.0
    %1730 = vmatpush1.msra.mxu0 0.0
    %1731 = vmatprep.subr.mxu0 0.0
    %1732 = vmatpush1.msra.mxu0 0.0
    %1733 = vmatprep.subr.mxu0 0.0
    %1734 = vmatpush1.msra.mxu0 0.0
    %1735 = vmatprep.subr.mxu0 0.0
    %1736 = vmatpush1.msra.mxu0 0.0
    %1737 = vmatprep.subr.mxu0 0.0
    %1738 = vmatpush1.msra.mxu0 0.0
    %1739 = vmatprep.subr.mxu0 0.0
    %1740 = vmatpush1.msra.mxu0 0.0
    %1741 = vmatprep.subr.mxu0 0.0
    %1742 = vmatpush1.msra.mxu0 0.0
    %1743 = vmatprep.subr.mxu0 0.0
    %1744 = vmatpush1.msra.mxu0 0.0
    %1745 = vmatprep.mubr.f32.mxu0 0.0
    %v1746 = vand.u32 %v469, 4294901760
    %1747 = vmatmul.mubr.f32.gmra.mrb[0].mxu0 %v1746
    %v1748 = vpop.f32.mrb[0].mxu0
    %v1749 = vadd.f32 %v1662, %v1748
    %v1750 = vpop.f32.mrb[0].mxu0
    %1751 = vdwg.mxu0
    %vm1752 = vcmp.eq.s32.totalorder %v348, %v21
    %v1753 = vsel %vm1752, 1, 0
    %v1754 = vcvt.s32.f32 %v1753
    %vm1755 = vcmask 64512
    %v1757 = vsel %vm1755, %v1754, 0
    %v1760 = vsel %vm1755, %v1108, 0
    %1762 = vmatprep.subr.mxu0 0.0
    %v1763 = vand.u32 %v1760, 4294901760
    %1764 = vmatpush1.xpose.msra.mxu0 %v1763
    %1765 = vmatprep.subr.mxu0 0.0
    %1766 = vmatpush1.xpose.msra.mxu0 0.0
    %1767 = vmatprep.subr.mxu0 0.0
    %1768 = vmatpush1.xpose.msra.mxu0 0.0
    %1769 = vmatprep.subr.mxu0 0.0
    %1770 = vmatpush1.xpose.msra.mxu0 0.0
    %1771 = vmatprep.subr.mxu0 0.0
    %1772 = vmatpush1.xpose.msra.mxu0 0.0
    %1773 = vmatprep.subr.mxu0 0.0
    %1774 = vmatpush1.xpose.msra.mxu0 0.0
    %1775 = vmatprep.subr.mxu0 0.0
    %1776 = vmatpush1.xpose.msra.mxu0 0.0
    %1777 = vmatprep.subr.mxu0 0.0
    %1778 = vmatpush1.xpose.msra.mxu0 0.0
    %1779 = vmatprep.subr.mxu0 0.0
    %1780 = vmatpush1.xpose.msra.mxu0 0.0
    %1781 = vmatprep.subr.mxu0 0.0
    %1782 = vmatpush1.xpose.msra.mxu0 0.0
    %1783 = vmatprep.subr.mxu0 0.0
    %1784 = vmatpush1.xpose.msra.mxu0 0.0
    %1785 = vmatprep.subr.mxu0 0.0
    %1786 = vmatpush1.xpose.msra.mxu0 0.0
    %1787 = vmatprep.subr.mxu0 0.0
    %1788 = vmatpush1.xpose.msra.mxu0 0.0
    %1789 = vmatprep.subr.mxu0 0.0
    %1790 = vmatpush1.xpose.msra.mxu0 0.0
    %1791 = vmatprep.subr.mxu0 0.0
    %1792 = vmatpush1.xpose.msra.mxu0 0.0
    %1793 = vmatprep.subr.mxu0 0.0
    %1794 = vmatpush1.xpose.msra.mxu0 0.0
    %1795 = vmatprep.subr.mxu0 0.0
    %1796 = vmatpush1.xpose.msra.mxu0 0.0
    %1797 = vmatprep.subr.mxu0 0.0
    %1798 = vmatpush1.xpose.msra.mxu0 0.0
    %1799 = vmatprep.subr.mxu0 0.0
    %1800 = vmatpush1.xpose.msra.mxu0 0.0
    %1801 = vmatprep.subr.mxu0 0.0
    %1802 = vmatpush1.xpose.msra.mxu0 0.0
    %1803 = vmatprep.subr.mxu0 0.0
    %1804 = vmatpush1.xpose.msra.mxu0 0.0
    %1805 = vmatprep.subr.mxu0 0.0
    %1806 = vmatpush1.xpose.msra.mxu0 0.0
    %1807 = vmatprep.subr.mxu0 0.0
    %1808 = vmatpush1.xpose.msra.mxu0 0.0
    %1809 = vmatprep.subr.mxu0 0.0
    %1810 = vmatpush1.xpose.msra.mxu0 0.0
    %1811 = vmatprep.subr.mxu0 0.0
    %1812 = vmatpush1.xpose.msra.mxu0 0.0
    %1813 = vmatprep.subr.mxu0 0.0
    %1814 = vmatpush1.xpose.msra.mxu0 0.0
    %1815 = vmatprep.subr.mxu0 0.0
    %1816 = vmatpush1.xpose.msra.mxu0 0.0
    %1817 = vmatprep.subr.mxu0 0.0
    %1818 = vmatpush1.xpose.msra.mxu0 0.0
    %1819 = vmatprep.subr.mxu0 0.0
    %1820 = vmatpush1.xpose.msra.mxu0 0.0
    %1821 = vmatprep.subr.mxu0 0.0
    %1822 = vmatpush1.xpose.msra.mxu0 0.0
    %1823 = vmatprep.subr.mxu0 0.0
    %1824 = vmatpush1.xpose.msra.mxu0 0.0
    %1825 = vmatprep.subr.mxu0 0.0
    %1826 = vmatpush1.xpose.msra.mxu0 0.0
    %1827 = vmatprep.mubr.f32.mxu0 0.0
    %v1828 = vand.u32 %v1757, 4294901760
    %v1829 = vsub.f32 %v1757, %v1828
    %v1830 = vand.u32 %v1829, 4294901760
    %v1831 = vsub.f32 %v1829, %v1830
    %v1832 = vand.u32 %v1831, 4294901760
    %1833 = vmatmul.mubr.f32.gmra.mrb[0].mxu0 %v1832
    %v1834 = vpop.f32.mrb[0].mxu0
    %v1835 = vadd.f32 0.0, %v1834
    %v1836 = vpop.f32.mrb[0].mxu0
    %1837 = vdwg.mxu0
    %1838 = vmatprep.subr.mxu0 0.0
    %v1839 = vand.u32 %v1760, 4294901760
    %v1840 = vsub.f32 %v1760, %v1839
    %v1841 = vand.u32 %v1840, 4294901760
    %v1842 = vsub.f32 %v1840, %v1841
    %v1843 = vand.u32 %v1842, 4294901760
    %1844 = vmatpush1.xpose.msra.mxu0 %v1843
    %1845 = vmatprep.subr.mxu0 0.0
    %1846 = vmatpush1.xpose.msra.mxu0 0.0
    %1847 = vmatprep.subr.mxu0 0.0
    %1848 = vmatpush1.xpose.msra.mxu0 0.0
    %1849 = vmatprep.subr.mxu0 0.0
    %1850 = vmatpush1.xpose.msra.mxu0 0.0
    %1851 = vmatprep.subr.mxu0 0.0
    %1852 = vmatpush1.xpose.msra.mxu0 0.0
    %1853 = vmatprep.subr.mxu0 0.0
    %1854 = vmatpush1.xpose.msra.mxu0 0.0
    %1855 = vmatprep.subr.mxu0 0.0
    %1856 = vmatpush1.xpose.msra.mxu0 0.0
    %1857 = vmatprep.subr.mxu0 0.0
    %1858 = vmatpush1.xpose.msra.mxu0 0.0
    %1859 = vmatprep.subr.mxu0 0.0
    %1860 = vmatpush1.xpose.msra.mxu0 0.0
    %1861 = vmatprep.subr.mxu0 0.0
    %1862 = vmatpush1.xpose.msra.mxu0 0.0
    %1863 = vmatprep.subr.mxu0 0.0
    %1864 = vmatpush1.xpose.msra.mxu0 0.0
    %1865 = vmatprep.subr.mxu0 0.0
    %1866 = vmatpush1.xpose.msra.mxu0 0.0
    %1867 = vmatprep.subr.mxu0 0.0
    %1868 = vmatpush1.xpose.msra.mxu0 0.0
    %1869 = vmatprep.subr.mxu0 0.0
    %1870 = vmatpush1.xpose.msra.mxu0 0.0
    %1871 = vmatprep.subr.mxu0 0.0
    %1872 = vmatpush1.xpose.msra.mxu0 0.0
    %1873 = vmatprep.subr.mxu0 0.0
    %1874 = vmatpush1.xpose.msra.mxu0 0.0
    %1875 = vmatprep.subr.mxu0 0.0
    %1876 = vmatpush1.xpose.msra.mxu0 0.0
    %1877 = vmatprep.subr.mxu0 0.0
    %1878 = vmatpush1.xpose.msra.mxu0 0.0
    %1879 = vmatprep.subr.mxu0 0.0
    %1880 = vmatpush1.xpose.msra.mxu0 0.0
    %1881 = vmatprep.subr.mxu0 0.0
    %1882 = vmatpush1.xpose.msra.mxu0 0.0
    %1883 = vmatprep.subr.mxu0 0.0
    %1884 = vmatpush1.xpose.msra.mxu0 0.0
    %1885 = vmatprep.subr.mxu0 0.0
    %1886 = vmatpush1.xpose.msra.mxu0 0.0
    %1887 = vmatprep.subr.mxu0 0.0
    %1888 = vmatpush1.xpose.msra.mxu0 0.0
    %1889 = vmatprep.subr.mxu0 0.0
    %1890 = vmatpush1.xpose.msra.mxu0 0.0
    %1891 = vmatprep.subr.mxu0 0.0
    %1892 = vmatpush1.xpose.msra.mxu0 0.0
    %1893 = vmatprep.subr.mxu0 0.0
    %1894 = vmatpush1.xpose.msra.mxu0 0.0
    %1895 = vmatprep.subr.mxu0 0.0
    %1896 = vmatpush1.xpose.msra.mxu0 0.0
    %1897 = vmatprep.subr.mxu0 0.0
    %1898 = vmatpush1.xpose.msra.mxu0 0.0
    %1899 = vmatprep.subr.mxu0 0.0
    %1900 = vmatpush1.xpose.msra.mxu0 0.0
    %1901 = vmatprep.subr.mxu0 0.0
    %1902 = vmatpush1.xpose.msra.mxu0 0.0
    %1903 = vmatprep.subr.mxu0 0.0
    %1904 = vmatpush1.xpose.msra.mxu0 0.0
    %1905 = vmatprep.subr.mxu0 0.0
    %1906 = vmatpush1.xpose.msra.mxu0 0.0
    %1907 = vmatprep.mubr.f32.mxu0 0.0
    %v1908 = vand.u32 %v1757, 4294901760
    %1909 = vmatmul.mubr.f32.gmra.mrb[0].mxu0 %v1908
    %v1910 = vpop.f32.mrb[0].mxu0
    %v1911 = vadd.f32 %v1835, %v1910
    %v1912 = vpop.f32.mrb[0].mxu0
    %1913 = vdwg.mxu0
    %1914 = vmatprep.subr.mxu0 0.0
    %v1915 = vand.u32 %v1760, 4294901760
    %v1916 = vsub.f32 %v1760, %v1915
    %1917 = vmatpush1.xpose.msra.mxu0 %v1916
    %1918 = vmatprep.subr.mxu0 0.0
    %1919 = vmatpush1.xpose.msra.mxu0 0.0
    %1920 = vmatprep.subr.mxu0 0.0
    %1921 = vmatpush1.xpose.msra.mxu0 0.0
    %1922 = vmatprep.subr.mxu0 0.0
    %1923 = vmatpush1.xpose.msra.mxu0 0.0
    %1924 = vmatprep.subr.mxu0 0.0
    %1925 = vmatpush1.xpose.msra.mxu0 0.0
    %1926 = vmatprep.subr.mxu0 0.0
    %1927 = vmatpush1.xpose.msra.mxu0 0.0
    %1928 = vmatprep.subr.mxu0 0.0
    %1929 = vmatpush1.xpose.msra.mxu0 0.0
    %1930 = vmatprep.subr.mxu0 0.0
    %1931 = vmatpush1.xpose.msra.mxu0 0.0
    %1932 = vmatprep.subr.mxu0 0.0
    %1933 = vmatpush1.xpose.msra.mxu0 0.0
    %1934 = vmatprep.subr.mxu0 0.0
    %1935 = vmatpush1.xpose.msra.mxu0 0.0
    %1936 = vmatprep.subr.mxu0 0.0
    %1937 = vmatpush1.xpose.msra.mxu0 0.0
    %1938 = vmatprep.subr.mxu0 0.0
    %1939 = vmatpush1.xpose.msra.mxu0 0.0
    %1940 = vmatprep.subr.mxu0 0.0
    %1941 = vmatpush1.xpose.msra.mxu0 0.0
    %1942 = vmatprep.subr.mxu0 0.0
    %1943 = vmatpush1.xpose.msra.mxu0 0.0
    %1944 = vmatprep.subr.mxu0 0.0
    %1945 = vmatpush1.xpose.msra.mxu0 0.0
    %1946 = vmatprep.subr.mxu0 0.0
    %1947 = vmatpush1.xpose.msra.mxu0 0.0
    %1948 = vmatprep.subr.mxu0 0.0
    %1949 = vmatpush1.xpose.msra.mxu0 0.0
    %1950 = vmatprep.subr.mxu0 0.0
    %1951 = vmatpush1.xpose.msra.mxu0 0.0
    %1952 = vmatprep.subr.mxu0 0.0
    %1953 = vmatpush1.xpose.msra.mxu0 0.0
    %1954 = vmatprep.subr.mxu0 0.0
    %1955 = vmatpush1.xpose.msra.mxu0 0.0
    %1956 = vmatprep.subr.mxu0 0.0
    %1957 = vmatpush1.xpose.msra.mxu0 0.0
    %1958 = vmatprep.subr.mxu0 0.0
    %1959 = vmatpush1.xpose.msra.mxu0 0.0
    %1960 = vmatprep.subr.mxu0 0.0
    %1961 = vmatpush1.xpose.msra.mxu0 0.0
    %1962 = vmatprep.subr.mxu0 0.0
    %1963 = vmatpush1.xpose.msra.mxu0 0.0
    %1964 = vmatprep.subr.mxu0 0.0
    %1965 = vmatpush1.xpose.msra.mxu0 0.0
    %1966 = vmatprep.subr.mxu0 0.0
    %1967 = vmatpush1.xpose.msra.mxu0 0.0
    %1968 = vmatprep.subr.mxu0 0.0
    %1969 = vmatpush1.xpose.msra.mxu0 0.0
    %1970 = vmatprep.subr.mxu0 0.0
    %1971 = vmatpush1.xpose.msra.mxu0 0.0
    %1972 = vmatprep.subr.mxu0 0.0
    %1973 = vmatpush1.xpose.msra.mxu0 0.0
    %1974 = vmatprep.subr.mxu0 0.0
    %1975 = vmatpush1.xpose.msra.mxu0 0.0
    %1976 = vmatprep.subr.mxu0 0.0
    %1977 = vmatpush1.xpose.msra.mxu0 0.0
    %1978 = vmatprep.subr.mxu0 0.0
    %1979 = vmatpush1.xpose.msra.mxu0 0.0
    %1980 = vmatprep.mubr.f32.mxu0 0.0
    %v1981 = vand.u32 %v1757, 4294901760
    %v1982 = vsub.f32 %v1757, %v1981
    %1983 = vmatmul.mubr.f32.gmra.mrb[0].mxu0 %v1982
    %v1984 = vpop.f32.mrb[0].mxu0
    %v1985 = vadd.f32 %v1911, %v1984
    %v1986 = vpop.f32.mrb[0].mxu0
    %1987 = vdwg.mxu0
    %1988 = vmatprep.subr.mxu0 0.0
    %v1989 = vand.u32 %v1760, 4294901760
    %1990 = vmatpush1.xpose.msra.mxu0 %v1989
    %1991 = vmatprep.subr.mxu0 0.0
    %1992 = vmatpush1.xpose.msra.mxu0 0.0
    %1993 = vmatprep.subr.mxu0 0.0
    %1994 = vmatpush1.xpose.msra.mxu0 0.0
    %1995 = vmatprep.subr.mxu0 0.0
    %1996 = vmatpush1.xpose.msra.mxu0 0.0
    %1997 = vmatprep.subr.mxu0 0.0
    %1998 = vmatpush1.xpose.msra.mxu0 0.0
    %1999 = vmatprep.subr.mxu0 0.0
    %2000 = vmatpush1.xpose.msra.mxu0 0.0
    %2001 = vmatprep.subr.mxu0 0.0
    %2002 = vmatpush1.xpose.msra.mxu0 0.0
    %2003 = vmatprep.subr.mxu0 0.0
    %2004 = vmatpush1.xpose.msra.mxu0 0.0
    %2005 = vmatprep.subr.mxu0 0.0
    %2006 = vmatpush1.xpose.msra.mxu0 0.0
    %2007 = vmatprep.subr.mxu0 0.0
    %2008 = vmatpush1.xpose.msra.mxu0 0.0
    %2009 = vmatprep.subr.mxu0 0.0
    %2010 = vmatpush1.xpose.msra.mxu0 0.0
    %2011 = vmatprep.subr.mxu0 0.0
    %2012 = vmatpush1.xpose.msra.mxu0 0.0
    %2013 = vmatprep.subr.mxu0 0.0
    %2014 = vmatpush1.xpose.msra.mxu0 0.0
    %2015 = vmatprep.subr.mxu0 0.0
    %2016 = vmatpush1.xpose.msra.mxu0 0.0
    %2017 = vmatprep.subr.mxu0 0.0
    %2018 = vmatpush1.xpose.msra.mxu0 0.0
    %2019 = vmatprep.subr.mxu0 0.0
    %2020 = vmatpush1.xpose.msra.mxu0 0.0
    %2021 = vmatprep.subr.mxu0 0.0
    %2022 = vmatpush1.xpose.msra.mxu0 0.0
    %2023 = vmatprep.subr.mxu0 0.0
    %2024 = vmatpush1.xpose.msra.mxu0 0.0
    %2025 = vmatprep.subr.mxu0 0.0
    %2026 = vmatpush1.xpose.msra.mxu0 0.0
    %2027 = vmatprep.subr.mxu0 0.0
    %2028 = vmatpush1.xpose.msra.mxu0 0.0
    %2029 = vmatprep.subr.mxu0 0.0
    %2030 = vmatpush1.xpose.msra.mxu0 0.0
    %2031 = vmatprep.subr.mxu0 0.0
    %2032 = vmatpush1.xpose.msra.mxu0 0.0
    %2033 = vmatprep.subr.mxu0 0.0
    %2034 = vmatpush1.xpose.msra.mxu0 0.0
    %2035 = vmatprep.subr.mxu0 0.0
    %2036 = vmatpush1.xpose.msra.mxu0 0.0
    %2037 = vmatprep.subr.mxu0 0.0
    %2038 = vmatpush1.xpose.msra.mxu0 0.0
    %2039 = vmatprep.subr.mxu0 0.0
    %2040 = vmatpush1.xpose.msra.mxu0 0.0
    %2041 = vmatprep.subr.mxu0 0.0
    %2042 = vmatpush1.xpose.msra.mxu0 0.0
    %2043 = vmatprep.subr.mxu0 0.0
    %2044 = vmatpush1.xpose.msra.mxu0 0.0
    %2045 = vmatprep.subr.mxu0 0.0
    %2046 = vmatpush1.xpose.msra.mxu0 0.0
    %2047 = vmatprep.subr.mxu0 0.0
    %2048 = vmatpush1.xpose.msra.mxu0 0.0
    %2049 = vmatprep.subr.mxu0 0.0
    %2050 = vmatpush1.xpose.msra.mxu0 0.0
    %2051 = vmatprep.subr.mxu0 0.0
    %2052 = vmatpush1.xpose.msra.mxu0 0.0
    %2053 = vmatprep.mubr.f32.mxu0 0.0
    %v2054 = vand.u32 %v1757, 4294901760
    %v2055 = vsub.f32 %v1757, %v2054
    %v2056 = vand.u32 %v2055, 4294901760
    %2057 = vmatmul.mubr.f32.gmra.mrb[0].mxu0 %v2056
    %v2058 = vpop.f32.mrb[0].mxu0
    %v2059 = vadd.f32 %v1985, %v2058
    %v2060 = vpop.f32.mrb[0].mxu0
    %2061 = vdwg.mxu0
    %2062 = vmatprep.subr.mxu0 0.0
    %v2063 = vand.u32 %v1760, 4294901760
    %v2064 = vsub.f32 %v1760, %v2063
    %v2065 = vand.u32 %v2064, 4294901760
    %2066 = vmatpush1.xpose.msra.mxu0 %v2065
    %2067 = vmatprep.subr.mxu0 0.0
    %2068 = vmatpush1.xpose.msra.mxu0 0.0
    %2069 = vmatprep.subr.mxu0 0.0
    %2070 = vmatpush1.xpose.msra.mxu0 0.0
    %2071 = vmatprep.subr.mxu0 0.0
    %2072 = vmatpush1.xpose.msra.mxu0 0.0
    %2073 = vmatprep.subr.mxu0 0.0
    %2074 = vmatpush1.xpose.msra.mxu0 0.0
    %2075 = vmatprep.subr.mxu0 0.0
    %2076 = vmatpush1.xpose.msra.mxu0 0.0
    %2077 = vmatprep.subr.mxu0 0.0
    %2078 = vmatpush1.xpose.msra.mxu0 0.0
    %2079 = vmatprep.subr.mxu0 0.0
    %2080 = vmatpush1.xpose.msra.mxu0 0.0
    %2081 = vmatprep.subr.mxu0 0.0
    %2082 = vmatpush1.xpose.msra.mxu0 0.0
    %2083 = vmatprep.subr.mxu0 0.0
    %2084 = vmatpush1.xpose.msra.mxu0 0.0
    %2085 = vmatprep.subr.mxu0 0.0
    %2086 = vmatpush1.xpose.msra.mxu0 0.0
    %2087 = vmatprep.subr.mxu0 0.0
    %2088 = vmatpush1.xpose.msra.mxu0 0.0
    %2089 = vmatprep.subr.mxu0 0.0
    %2090 = vmatpush1.xpose.msra.mxu0 0.0
    %2091 = vmatprep.subr.mxu0 0.0
    %2092 = vmatpush1.xpose.msra.mxu0 0.0
    %2093 = vmatprep.subr.mxu0 0.0
    %2094 = vmatpush1.xpose.msra.mxu0 0.0
    %2095 = vmatprep.subr.mxu0 0.0
    %2096 = vmatpush1.xpose.msra.mxu0 0.0
    %2097 = vmatprep.subr.mxu0 0.0
    %2098 = vmatpush1.xpose.msra.mxu0 0.0
    %2099 = vmatprep.subr.mxu0 0.0
    %2100 = vmatpush1.xpose.msra.mxu0 0.0
    %2101 = vmatprep.subr.mxu0 0.0
    %2102 = vmatpush1.xpose.msra.mxu0 0.0
    %2103 = vmatprep.subr.mxu0 0.0
    %2104 = vmatpush1.xpose.msra.mxu0 0.0
    %2105 = vmatprep.subr.mxu0 0.0
    %2106 = vmatpush1.xpose.msra.mxu0 0.0
    %2107 = vmatprep.subr.mxu0 0.0
    %2108 = vmatpush1.xpose.msra.mxu0 0.0
    %2109 = vmatprep.subr.mxu0 0.0
    %2110 = vmatpush1.xpose.msra.mxu0 0.0
    %2111 = vmatprep.subr.mxu0 0.0
    %2112 = vmatpush1.xpose.msra.mxu0 0.0
    %2113 = vmatprep.subr.mxu0 0.0
    %2114 = vmatpush1.xpose.msra.mxu0 0.0
    %2115 = vmatprep.subr.mxu0 0.0
    %2116 = vmatpush1.xpose.msra.mxu0 0.0
    %2117 = vmatprep.subr.mxu0 0.0
    %2118 = vmatpush1.xpose.msra.mxu0 0.0
    %2119 = vmatprep.subr.mxu0 0.0
    %2120 = vmatpush1.xpose.msra.mxu0 0.0
    %2121 = vmatprep.subr.mxu0 0.0
    %2122 = vmatpush1.xpose.msra.mxu0 0.0
    %2123 = vmatprep.subr.mxu0 0.0
    %2124 = vmatpush1.xpose.msra.mxu0 0.0
    %2125 = vmatprep.subr.mxu0 0.0
    %2126 = vmatpush1.xpose.msra.mxu0 0.0
    %2127 = vmatprep.subr.mxu0 0.0
    %2128 = vmatpush1.xpose.msra.mxu0 0.0
    %2129 = vmatprep.mubr.f32.mxu0 0.0
    %v2130 = vand.u32 %v1757, 4294901760
    %2131 = vmatmul.mubr.f32.gmra.mrb[0].mxu0 %v2130
    %v2132 = vpop.f32.mrb[0].mxu0
    %v2133 = vadd.f32 %v2059, %v2132
    %v2134 = vpop.f32.mrb[0].mxu0
    %2135 = vdwg.mxu0
    %2136 = vmatprep.subr.mxu0 0.0
    %v2137 = vand.u32 %v1760, 4294901760
    %2138 = vmatpush1.xpose.msra.mxu0 %v2137
    %2139 = vmatprep.subr.mxu0 0.0
    %2140 = vmatpush1.xpose.msra.mxu0 0.0
    %2141 = vmatprep.subr.mxu0 0.0
    %2142 = vmatpush1.xpose.msra.mxu0 0.0
    %2143 = vmatprep.subr.mxu0 0.0
    %2144 = vmatpush1.xpose.msra.mxu0 0.0
    %2145 = vmatprep.subr.mxu0 0.0
    %2146 = vmatpush1.xpose.msra.mxu0 0.0
    %2147 = vmatprep.subr.mxu0 0.0
    %2148 = vmatpush1.xpose.msra.mxu0 0.0
    %2149 = vmatprep.subr.mxu0 0.0
    %2150 = vmatpush1.xpose.msra.mxu0 0.0
    %2151 = vmatprep.subr.mxu0 0.0
    %2152 = vmatpush1.xpose.msra.mxu0 0.0
    %2153 = vmatprep.subr.mxu0 0.0
    %2154 = vmatpush1.xpose.msra.mxu0 0.0
    %2155 = vmatprep.subr.mxu0 0.0
    %2156 = vmatpush1.xpose.msra.mxu0 0.0
    %2157 = vmatprep.subr.mxu0 0.0
    %2158 = vmatpush1.xpose.msra.mxu0 0.0
    %2159 = vmatprep.subr.mxu0 0.0
    %2160 = vmatpush1.xpose.msra.mxu0 0.0
    %2161 = vmatprep.subr.mxu0 0.0
    %2162 = vmatpush1.xpose.msra.mxu0 0.0
    %2163 = vmatprep.subr.mxu0 0.0
    %2164 = vmatpush1.xpose.msra.mxu0 0.0
    %2165 = vmatprep.subr.mxu0 0.0
    %2166 = vmatpush1.xpose.msra.mxu0 0.0
    %2167 = vmatprep.subr.mxu0 0.0
    %2168 = vmatpush1.xpose.msra.mxu0 0.0
    %2169 = vmatprep.subr.mxu0 0.0
    %2170 = vmatpush1.xpose.msra.mxu0 0.0
    %2171 = vmatprep.subr.mxu0 0.0
    %2172 = vmatpush1.xpose.msra.mxu0 0.0
    %2173 = vmatprep.subr.mxu0 0.0
    %2174 = vmatpush1.xpose.msra.mxu0 0.0
    %2175 = vmatprep.subr.mxu0 0.0
    %2176 = vmatpush1.xpose.msra.mxu0 0.0
    %2177 = vmatprep.subr.mxu0 0.0
    %2178 = vmatpush1.xpose.msra.mxu0 0.0
    %2179 = vmatprep.subr.mxu0 0.0
    %2180 = vmatpush1.xpose.msra.mxu0 0.0
    %2181 = vmatprep.subr.mxu0 0.0
    %2182 = vmatpush1.xpose.msra.mxu0 0.0
    %2183 = vmatprep.subr.mxu0 0.0
    %2184 = vmatpush1.xpose.msra.mxu0 0.0
    %2185 = vmatprep.subr.mxu0 0.0
    %2186 = vmatpush1.xpose.msra.mxu0 0.0
    %2187 = vmatprep.subr.mxu0 0.0
    %2188 = vmatpush1.xpose.msra.mxu0 0.0
    %2189 = vmatprep.subr.mxu0 0.0
    %2190 = vmatpush1.xpose.msra.mxu0 0.0
    %2191 = vmatprep.subr.mxu0 0.0
    %2192 = vmatpush1.xpose.msra.mxu0 0.0
    %2193 = vmatprep.subr.mxu0 0.0
    %2194 = vmatpush1.xpose.msra.mxu0 0.0
    %2195 = vmatprep.subr.mxu0 0.0
    %2196 = vmatpush1.xpose.msra.mxu0 0.0
    %2197 = vmatprep.subr.mxu0 0.0
    %2198 = vmatpush1.xpose.msra.mxu0 0.0
    %2199 = vmatprep.subr.mxu0 0.0
    %2200 = vmatpush1.xpose.msra.mxu0 0.0
    %2201 = vmatprep.mubr.f32.mxu0 0.0
    %v2202 = vand.u32 %v1757, 4294901760
    %2203 = vmatmul.mubr.f32.gmra.mrb[0].mxu0 %v2202
    %v2204 = vpop.f32.mrb[0].mxu0
    %v2205 = vadd.f32 %v2133, %v2204
    %v2206 = vpop.f32.mrb[0].mxu0
    %2207 = vdwg.mxu0
    %v2209 = vsel %vm1755, %v1749, 0
    %2211 = vmatprep.subr.mxu0 0.0
    %v2212 = vand.u32 %v2209, 4294901760
    %2213 = vmatpush1.xpose.msra.mxu0 %v2212
    %2214 = vmatprep.subr.mxu0 0.0
    %2215 = vmatpush1.xpose.msra.mxu0 0.0
    %2216 = vmatprep.subr.mxu0 0.0
    %2217 = vmatpush1.xpose.msra.mxu0 0.0
    %2218 = vmatprep.subr.mxu0 0.0
    %2219 = vmatpush1.xpose.msra.mxu0 0.0
    %2220 = vmatprep.subr.mxu0 0.0
    %2221 = vmatpush1.xpose.msra.mxu0 0.0
    %2222 = vmatprep.subr.mxu0 0.0
    %2223 = vmatpush1.xpose.msra.mxu0 0.0
    %2224 = vmatprep.subr.mxu0 0.0
    %2225 = vmatpush1.xpose.msra.mxu0 0.0
    %2226 = vmatprep.subr.mxu0 0.0
    %2227 = vmatpush1.xpose.msra.mxu0 0.0
    %2228 = vmatprep.subr.mxu0 0.0
    %2229 = vmatpush1.xpose.msra.mxu0 0.0
    %2230 = vmatprep.subr.mxu0 0.0
    %2231 = vmatpush1.xpose.msra.mxu0 0.0
    %2232 = vmatprep.subr.mxu0 0.0
    %2233 = vmatpush1.xpose.msra.mxu0 0.0
    %2234 = vmatprep.subr.mxu0 0.0
    %2235 = vmatpush1.xpose.msra.mxu0 0.0
    %2236 = vmatprep.subr.mxu0 0.0
    %2237 = vmatpush1.xpose.msra.mxu0 0.0
    %2238 = vmatprep.subr.mxu0 0.0
    %2239 = vmatpush1.xpose.msra.mxu0 0.0
    %2240 = vmatprep.subr.mxu0 0.0
    %2241 = vmatpush1.xpose.msra.mxu0 0.0
    %2242 = vmatprep.subr.mxu0 0.0
    %2243 = vmatpush1.xpose.msra.mxu0 0.0
    %2244 = vmatprep.subr.mxu0 0.0
    %2245 = vmatpush1.xpose.msra.mxu0 0.0
    %2246 = vmatprep.subr.mxu0 0.0
    %2247 = vmatpush1.xpose.msra.mxu0 0.0
    %2248 = vmatprep.subr.mxu0 0.0
    %2249 = vmatpush1.xpose.msra.mxu0 0.0
    %2250 = vmatprep.subr.mxu0 0.0
    %2251 = vmatpush1.xpose.msra.mxu0 0.0
    %2252 = vmatprep.subr.mxu0 0.0
    %2253 = vmatpush1.xpose.msra.mxu0 0.0
    %2254 = vmatprep.subr.mxu0 0.0
    %2255 = vmatpush1.xpose.msra.mxu0 0.0
    %2256 = vmatprep.subr.mxu0 0.0
    %2257 = vmatpush1.xpose.msra.mxu0 0.0
    %2258 = vmatprep.subr.mxu0 0.0
    %2259 = vmatpush1.xpose.msra.mxu0 0.0
    %2260 = vmatprep.subr.mxu0 0.0
    %2261 = vmatpush1.xpose.msra.mxu0 0.0
    %2262 = vmatprep.subr.mxu0 0.0
    %2263 = vmatpush1.xpose.msra.mxu0 0.0
    %2264 = vmatprep.subr.mxu0 0.0
    %2265 = vmatpush1.xpose.msra.mxu0 0.0
    %2266 = vmatprep.subr.mxu0 0.0
    %2267 = vmatpush1.xpose.msra.mxu0 0.0
    %2268 = vmatprep.subr.mxu0 0.0
    %2269 = vmatpush1.xpose.msra.mxu0 0.0
    %2270 = vmatprep.subr.mxu0 0.0
    %2271 = vmatpush1.xpose.msra.mxu0 0.0
    %2272 = vmatprep.subr.mxu0 0.0
    %2273 = vmatpush1.xpose.msra.mxu0 0.0
    %2274 = vmatprep.subr.mxu0 0.0
    %2275 = vmatpush1.xpose.msra.mxu0 0.0
    %2276 = vmatprep.mubr.f32.mxu0 0.0
    %v2277 = vand.u32 %v1757, 4294901760
    %v2278 = vsub.f32 %v1757, %v2277
    %v2279 = vand.u32 %v2278, 4294901760
    %v2280 = vsub.f32 %v2278, %v2279
    %v2281 = vand.u32 %v2280, 4294901760
    %2282 = vmatmul.mubr.f32.gmra.mrb[0].mxu0 %v2281
    %v2283 = vpop.f32.mrb[0].mxu0
    %v2284 = vadd.f32 0.0, %v2283
    %v2285 = vpop.f32.mrb[0].mxu0
    %2286 = vdwg.mxu0
    %2287 = vmatprep.subr.mxu0 0.0
    %v2288 = vand.u32 %v2209, 4294901760
    %v2289 = vsub.f32 %v2209, %v2288
    %v2290 = vand.u32 %v2289, 4294901760
    %v2291 = vsub.f32 %v2289, %v2290
    %v2292 = vand.u32 %v2291, 4294901760
    %2293 = vmatpush1.xpose.msra.mxu0 %v2292
    %2294 = vmatprep.subr.mxu0 0.0
    %2295 = vmatpush1.xpose.msra.mxu0 0.0
    %2296 = vmatprep.subr.mxu0 0.0
    %2297 = vmatpush1.xpose.msra.mxu0 0.0
    %2298 = vmatprep.subr.mxu0 0.0
    %2299 = vmatpush1.xpose.msra.mxu0 0.0
    %2300 = vmatprep.subr.mxu0 0.0
    %2301 = vmatpush1.xpose.msra.mxu0 0.0
    %2302 = vmatprep.subr.mxu0 0.0
    %2303 = vmatpush1.xpose.msra.mxu0 0.0
    %2304 = vmatprep.subr.mxu0 0.0
    %2305 = vmatpush1.xpose.msra.mxu0 0.0
    %2306 = vmatprep.subr.mxu0 0.0
    %2307 = vmatpush1.xpose.msra.mxu0 0.0
    %2308 = vmatprep.subr.mxu0 0.0
    %2309 = vmatpush1.xpose.msra.mxu0 0.0
    %2310 = vmatprep.subr.mxu0 0.0
    %2311 = vmatpush1.xpose.msra.mxu0 0.0
    %2312 = vmatprep.subr.mxu0 0.0
    %2313 = vmatpush1.xpose.msra.mxu0 0.0
    %2314 = vmatprep.subr.mxu0 0.0
    %2315 = vmatpush1.xpose.msra.mxu0 0.0
    %2316 = vmatprep.subr.mxu0 0.0
    %2317 = vmatpush1.xpose.msra.mxu0 0.0
    %2318 = vmatprep.subr.mxu0 0.0
    %2319 = vmatpush1.xpose.msra.mxu0 0.0
    %2320 = vmatprep.subr.mxu0 0.0
    %2321 = vmatpush1.xpose.msra.mxu0 0.0
    %2322 = vmatprep.subr.mxu0 0.0
    %2323 = vmatpush1.xpose.msra.mxu0 0.0
    %2324 = vmatprep.subr.mxu0 0.0
    %2325 = vmatpush1.xpose.msra.mxu0 0.0
    %2326 = vmatprep.subr.mxu0 0.0
    %2327 = vmatpush1.xpose.msra.mxu0 0.0
    %2328 = vmatprep.subr.mxu0 0.0
    %2329 = vmatpush1.xpose.msra.mxu0 0.0
    %2330 = vmatprep.subr.mxu0 0.0
    %2331 = vmatpush1.xpose.msra.mxu0 0.0
    %2332 = vmatprep.subr.mxu0 0.0
    %2333 = vmatpush1.xpose.msra.mxu0 0.0
    %2334 = vmatprep.subr.mxu0 0.0
    %2335 = vmatpush1.xpose.msra.mxu0 0.0
    %2336 = vmatprep.subr.mxu0 0.0
    %2337 = vmatpush1.xpose.msra.mxu0 0.0
    %2338 = vmatprep.subr.mxu0 0.0
    %2339 = vmatpush1.xpose.msra.mxu0 0.0
    %2340 = vmatprep.subr.mxu0 0.0
    %2341 = vmatpush1.xpose.msra.mxu0 0.0
    %2342 = vmatprep.subr.mxu0 0.0
    %2343 = vmatpush1.xpose.msra.mxu0 0.0
    %2344 = vmatprep.subr.mxu0 0.0
    %2345 = vmatpush1.xpose.msra.mxu0 0.0
    %2346 = vmatprep.subr.mxu0 0.0
    %2347 = vmatpush1.xpose.msra.mxu0 0.0
    %2348 = vmatprep.subr.mxu0 0.0
    %2349 = vmatpush1.xpose.msra.mxu0 0.0
    %2350 = vmatprep.subr.mxu0 0.0
    %2351 = vmatpush1.xpose.msra.mxu0 0.0
    %2352 = vmatprep.subr.mxu0 0.0
    %2353 = vmatpush1.xpose.msra.mxu0 0.0
    %2354 = vmatprep.subr.mxu0 0.0
    %2355 = vmatpush1.xpose.msra.mxu0 0.0
    %2356 = vmatprep.mubr.f32.mxu0 0.0
    %v2357 = vand.u32 %v1757, 4294901760
    %2358 = vmatmul.mubr.f32.gmra.mrb[0].mxu0 %v2357
    %v2359 = vpop.f32.mrb[0].mxu0
    %v2360 = vadd.f32 %v2284, %v2359
    %v2361 = vpop.f32.mrb[0].mxu0
    %2362 = vdwg.mxu0
    %2363 = vmatprep.subr.mxu0 0.0
    %v2364 = vand.u32 %v2209, 4294901760
    %v2365 = vsub.f32 %v2209, %v2364
    %2366 = vmatpush1.xpose.msra.mxu0 %v2365
    %2367 = vmatprep.subr.mxu0 0.0
    %2368 = vmatpush1.xpose.msra.mxu0 0.0
    %2369 = vmatprep.subr.mxu0 0.0
    %2370 = vmatpush1.xpose.msra.mxu0 0.0
    %2371 = vmatprep.subr.mxu0 0.0
    %2372 = vmatpush1.xpose.msra.mxu0 0.0
    %2373 = vmatprep.subr.mxu0 0.0
    %2374 = vmatpush1.xpose.msra.mxu0 0.0
    %2375 = vmatprep.subr.mxu0 0.0
    %2376 = vmatpush1.xpose.msra.mxu0 0.0
    %2377 = vmatprep.subr.mxu0 0.0
    %2378 = vmatpush1.xpose.msra.mxu0 0.0
    %2379 = vmatprep.subr.mxu0 0.0
    %2380 = vmatpush1.xpose.msra.mxu0 0.0
    %2381 = vmatprep.subr.mxu0 0.0
    %2382 = vmatpush1.xpose.msra.mxu0 0.0
    %2383 = vmatprep.subr.mxu0 0.0
    %2384 = vmatpush1.xpose.msra.mxu0 0.0
    %2385 = vmatprep.subr.mxu0 0.0
    %2386 = vmatpush1.xpose.msra.mxu0 0.0
    %2387 = vmatprep.subr.mxu0 0.0
    %2388 = vmatpush1.xpose.msra.mxu0 0.0
    %2389 = vmatprep.subr.mxu0 0.0
    %2390 = vmatpush1.xpose.msra.mxu0 0.0
    %2391 = vmatprep.subr.mxu0 0.0
    %2392 = vmatpush1.xpose.msra.mxu0 0.0
    %2393 = vmatprep.subr.mxu0 0.0
    %2394 = vmatpush1.xpose.msra.mxu0 0.0
    %2395 = vmatprep.subr.mxu0 0.0
    %2396 = vmatpush1.xpose.msra.mxu0 0.0
    %2397 = vmatprep.subr.mxu0 0.0
    %2398 = vmatpush1.xpose.msra.mxu0 0.0
    %2399 = vmatprep.subr.mxu0 0.0
    %2400 = vmatpush1.xpose.msra.mxu0 0.0
    %2401 = vmatprep.subr.mxu0 0.0
    %2402 = vmatpush1.xpose.msra.mxu0 0.0
    %2403 = vmatprep.subr.mxu0 0.0
    %2404 = vmatpush1.xpose.msra.mxu0 0.0
    %2405 = vmatprep.subr.mxu0 0.0
    %2406 = vmatpush1.xpose.msra.mxu0 0.0
    %2407 = vmatprep.subr.mxu0 0.0
    %2408 = vmatpush1.xpose.msra.mxu0 0.0
    %2409 = vmatprep.subr.mxu0 0.0
    %2410 = vmatpush1.xpose.msra.mxu0 0.0
    %2411 = vmatprep.subr.mxu0 0.0
    %2412 = vmatpush1.xpose.msra.mxu0 0.0
    %2413 = vmatprep.subr.mxu0 0.0
    %2414 = vmatpush1.xpose.msra.mxu0 0.0
    %2415 = vmatprep.subr.mxu0 0.0
    %2416 = vmatpush1.xpose.msra.mxu0 0.0
    %2417 = vmatprep.subr.mxu0 0.0
    %2418 = vmatpush1.xpose.msra.mxu0 0.0
    %2419 = vmatprep.subr.mxu0 0.0
    %2420 = vmatpush1.xpose.msra.mxu0 0.0
    %2421 = vmatprep.subr.mxu0 0.0
    %2422 = vmatpush1.xpose.msra.mxu0 0.0
    %2423 = vmatprep.subr.mxu0 0.0
    %2424 = vmatpush1.xpose.msra.mxu0 0.0
    %2425 = vmatprep.subr.mxu0 0.0
    %2426 = vmatpush1.xpose.msra.mxu0 0.0
    %2427 = vmatprep.subr.mxu0 0.0
    %2428 = vmatpush1.xpose.msra.mxu0 0.0
    %2429 = vmatprep.mubr.f32.mxu0 0.0
    %v2430 = vand.u32 %v1757, 4294901760
    %v2431 = vsub.f32 %v1757, %v2430
    %2432 = vmatmul.mubr.f32.gmra.mrb[0].mxu0 %v2431
    %v2433 = vpop.f32.mrb[0].mxu0
    %v2434 = vadd.f32 %v2360, %v2433
    %v2435 = vpop.f32.mrb[0].mxu0
    %2436 = vdwg.mxu0
    %2437 = vmatprep.subr.mxu0 0.0
    %v2438 = vand.u32 %v2209, 4294901760
    %2439 = vmatpush1.xpose.msra.mxu0 %v2438
    %2440 = vmatprep.subr.mxu0 0.0
    %2441 = vmatpush1.xpose.msra.mxu0 0.0
    %2442 = vmatprep.subr.mxu0 0.0
    %2443 = vmatpush1.xpose.msra.mxu0 0.0
    %2444 = vmatprep.subr.mxu0 0.0
    %2445 = vmatpush1.xpose.msra.mxu0 0.0
    %2446 = vmatprep.subr.mxu0 0.0
    %2447 = vmatpush1.xpose.msra.mxu0 0.0
    %2448 = vmatprep.subr.mxu0 0.0
    %2449 = vmatpush1.xpose.msra.mxu0 0.0
    %2450 = vmatprep.subr.mxu0 0.0
    %2451 = vmatpush1.xpose.msra.mxu0 0.0
    %2452 = vmatprep.subr.mxu0 0.0
    %2453 = vmatpush1.xpose.msra.mxu0 0.0
    %2454 = vmatprep.subr.mxu0 0.0
    %2455 = vmatpush1.xpose.msra.mxu0 0.0
    %2456 = vmatprep.subr.mxu0 0.0
    %2457 = vmatpush1.xpose.msra.mxu0 0.0
    %2458 = vmatprep.subr.mxu0 0.0
    %2459 = vmatpush1.xpose.msra.mxu0 0.0
    %2460 = vmatprep.subr.mxu0 0.0
    %2461 = vmatpush1.xpose.msra.mxu0 0.0
    %2462 = vmatprep.subr.mxu0 0.0
    %2463 = vmatpush1.xpose.msra.mxu0 0.0
    %2464 = vmatprep.subr.mxu0 0.0
    %2465 = vmatpush1.xpose.msra.mxu0 0.0
    %2466 = vmatprep.subr.mxu0 0.0
    %2467 = vmatpush1.xpose.msra.mxu0 0.0
    %2468 = vmatprep.subr.mxu0 0.0
    %2469 = vmatpush1.xpose.msra.mxu0 0.0
    %2470 = vmatprep.subr.mxu0 0.0
    %2471 = vmatpush1.xpose.msra.mxu0 0.0
    %2472 = vmatprep.subr.mxu0 0.0
    %2473 = vmatpush1.xpose.msra.mxu0 0.0
    %2474 = vmatprep.subr.mxu0 0.0
    %2475 = vmatpush1.xpose.msra.mxu0 0.0
    %2476 = vmatprep.subr.mxu0 0.0
    %2477 = vmatpush1.xpose.msra.mxu0 0.0
    %2478 = vmatprep.subr.mxu0 0.0
    %2479 = vmatpush1.xpose.msra.mxu0 0.0
    %2480 = vmatprep.subr.mxu0 0.0
    %2481 = vmatpush1.xpose.msra.mxu0 0.0
    %2482 = vmatprep.subr.mxu0 0.0
    %2483 = vmatpush1.xpose.msra.mxu0 0.0
    %2484 = vmatprep.subr.mxu0 0.0
    %2485 = vmatpush1.xpose.msra.mxu0 0.0
    %2486 = vmatprep.subr.mxu0 0.0
    %2487 = vmatpush1.xpose.msra.mxu0 0.0
    %2488 = vmatprep.subr.mxu0 0.0
    %2489 = vmatpush1.xpose.msra.mxu0 0.0
    %2490 = vmatprep.subr.mxu0 0.0
    %2491 = vmatpush1.xpose.msra.mxu0 0.0
    %2492 = vmatprep.subr.mxu0 0.0
    %2493 = vmatpush1.xpose.msra.mxu0 0.0
    %2494 = vmatprep.subr.mxu0 0.0
    %2495 = vmatpush1.xpose.msra.mxu0 0.0
    %2496 = vmatprep.subr.mxu0 0.0
    %2497 = vmatpush1.xpose.msra.mxu0 0.0
    %2498 = vmatprep.subr.mxu0 0.0
    %2499 = vmatpush1.xpose.msra.mxu0 0.0
    %2500 = vmatprep.subr.mxu0 0.0
    %2501 = vmatpush1.xpose.msra.mxu0 0.0
    %2502 = vmatprep.mubr.f32.mxu0 0.0
    %v2503 = vand.u32 %v1757, 4294901760
    %v2504 = vsub.f32 %v1757, %v2503
    %v2505 = vand.u32 %v2504, 4294901760
    %2506 = vmatmul.mubr.f32.gmra.mrb[0].mxu0 %v2505
    %v2507 = vpop.f32.mrb[0].mxu0
    %v2508 = vadd.f32 %v2434, %v2507
    %v2509 = vpop.f32.mrb[0].mxu0
    %2510 = vdwg.mxu0
    %2511 = vmatprep.subr.mxu0 0.0
    %v2512 = vand.u32 %v2209, 4294901760
    %v2513 = vsub.f32 %v2209, %v2512
    %v2514 = vand.u32 %v2513, 4294901760
    %2515 = vmatpush1.xpose.msra.mxu0 %v2514
    %2516 = vmatprep.subr.mxu0 0.0
    %2517 = vmatpush1.xpose.msra.mxu0 0.0
    %2518 = vmatprep.subr.mxu0 0.0
    %2519 = vmatpush1.xpose.msra.mxu0 0.0
    %2520 = vmatprep.subr.mxu0 0.0
    %2521 = vmatpush1.xpose.msra.mxu0 0.0
    %2522 = vmatprep.subr.mxu0 0.0
    %2523 = vmatpush1.xpose.msra.mxu0 0.0
    %2524 = vmatprep.subr.mxu0 0.0
    %2525 = vmatpush1.xpose.msra.mxu0 0.0
    %2526 = vmatprep.subr.mxu0 0.0
    %2527 = vmatpush1.xpose.msra.mxu0 0.0
    %2528 = vmatprep.subr.mxu0 0.0
    %2529 = vmatpush1.xpose.msra.mxu0 0.0
    %2530 = vmatprep.subr.mxu0 0.0
    %2531 = vmatpush1.xpose.msra.mxu0 0.0
    %2532 = vmatprep.subr.mxu0 0.0
    %2533 = vmatpush1.xpose.msra.mxu0 0.0
    %2534 = vmatprep.subr.mxu0 0.0
    %2535 = vmatpush1.xpose.msra.mxu0 0.0
    %2536 = vmatprep.subr.mxu0 0.0
    %2537 = vmatpush1.xpose.msra.mxu0 0.0
    %2538 = vmatprep.subr.mxu0 0.0
    %2539 = vmatpush1.xpose.msra.mxu0 0.0
    %2540 = vmatprep.subr.mxu0 0.0
    %2541 = vmatpush1.xpose.msra.mxu0 0.0
    %2542 = vmatprep.subr.mxu0 0.0
    %2543 = vmatpush1.xpose.msra.mxu0 0.0
    %2544 = vmatprep.subr.mxu0 0.0
    %2545 = vmatpush1.xpose.msra.mxu0 0.0
    %2546 = vmatprep.subr.mxu0 0.0
    %2547 = vmatpush1.xpose.msra.mxu0 0.0
    %2548 = vmatprep.subr.mxu0 0.0
    %2549 = vmatpush1.xpose.msra.mxu0 0.0
    %2550 = vmatprep.subr.mxu0 0.0
    %2551 = vmatpush1.xpose.msra.mxu0 0.0
    %2552 = vmatprep.subr.mxu0 0.0
    %2553 = vmatpush1.xpose.msra.mxu0 0.0
    %2554 = vmatprep.subr.mxu0 0.0
    %2555 = vmatpush1.xpose.msra.mxu0 0.0
    %2556 = vmatprep.subr.mxu0 0.0
    %2557 = vmatpush1.xpose.msra.mxu0 0.0
    %2558 = vmatprep.subr.mxu0 0.0
    %2559 = vmatpush1.xpose.msra.mxu0 0.0
    %2560 = vmatprep.subr.mxu0 0.0
    %2561 = vmatpush1.xpose.msra.mxu0 0.0
    %2562 = vmatprep.subr.mxu0 0.0
    %2563 = vmatpush1.xpose.msra.mxu0 0.0
    %2564 = vmatprep.subr.mxu0 0.0
    %2565 = vmatpush1.xpose.msra.mxu0 0.0
    %2566 = vmatprep.subr.mxu0 0.0
    %2567 = vmatpush1.xpose.msra.mxu0 0.0
    %2568 = vmatprep.subr.mxu0 0.0
    %2569 = vmatpush1.xpose.msra.mxu0 0.0
    %2570 = vmatprep.subr.mxu0 0.0
    %2571 = vmatpush1.xpose.msra.mxu0 0.0
    %2572 = vmatprep.subr.mxu0 0.0
    %2573 = vmatpush1.xpose.msra.mxu0 0.0
    %2574 = vmatprep.subr.mxu0 0.0
    %2575 = vmatpush1.xpose.msra.mxu0 0.0
    %2576 = vmatprep.subr.mxu0 0.0
    %2577 = vmatpush1.xpose.msra.mxu0 0.0
    %2578 = vmatprep.mubr.f32.mxu0 0.0
    %v2579 = vand.u32 %v1757, 4294901760
    %2580 = vmatmul.mubr.f32.gmra.mrb[0].mxu0 %v2579
    %v2581 = vpop.f32.mrb[0].mxu0
    %v2582 = vadd.f32 %v2508, %v2581
    %v2583 = vpop.f32.mrb[0].mxu0
    %2584 = vdwg.mxu0
    %2585 = vmatprep.subr.mxu0 0.0
    %v2586 = vand.u32 %v2209, 4294901760
    %2587 = vmatpush1.xpose.msra.mxu0 %v2586
    %2588 = vmatprep.subr.mxu0 0.0
    %2589 = vmatpush1.xpose.msra.mxu0 0.0
    %2590 = vmatprep.subr.mxu0 0.0
    %2591 = vmatpush1.xpose.msra.mxu0 0.0
    %2592 = vmatprep.subr.mxu0 0.0
    %2593 = vmatpush1.xpose.msra.mxu0 0.0
    %2594 = vmatprep.subr.mxu0 0.0
    %2595 = vmatpush1.xpose.msra.mxu0 0.0
    %2596 = vmatprep.subr.mxu0 0.0
    %2597 = vmatpush1.xpose.msra.mxu0 0.0
    %2598 = vmatprep.subr.mxu0 0.0
    %2599 = vmatpush1.xpose.msra.mxu0 0.0
    %2600 = vmatprep.subr.mxu0 0.0
    %2601 = vmatpush1.xpose.msra.mxu0 0.0
    %2602 = vmatprep.subr.mxu0 0.0
    %2603 = vmatpush1.xpose.msra.mxu0 0.0
    %2604 = vmatprep.subr.mxu0 0.0
    %2605 = vmatpush1.xpose.msra.mxu0 0.0
    %2606 = vmatprep.subr.mxu0 0.0
    %2607 = vmatpush1.xpose.msra.mxu0 0.0
    %2608 = vmatprep.subr.mxu0 0.0
    %2609 = vmatpush1.xpose.msra.mxu0 0.0
    %2610 = vmatprep.subr.mxu0 0.0
    %2611 = vmatpush1.xpose.msra.mxu0 0.0
    %2612 = vmatprep.subr.mxu0 0.0
    %2613 = vmatpush1.xpose.msra.mxu0 0.0
    %2614 = vmatprep.subr.mxu0 0.0
    %2615 = vmatpush1.xpose.msra.mxu0 0.0
    %2616 = vmatprep.subr.mxu0 0.0
    %2617 = vmatpush1.xpose.msra.mxu0 0.0
    %2618 = vmatprep.subr.mxu0 0.0
    %2619 = vmatpush1.xpose.msra.mxu0 0.0
    %2620 = vmatprep.subr.mxu0 0.0
    %2621 = vmatpush1.xpose.msra.mxu0 0.0
    %2622 = vmatprep.subr.mxu0 0.0
    %2623 = vmatpush1.xpose.msra.mxu0 0.0
    %2624 = vmatprep.subr.mxu0 0.0
    %2625 = vmatpush1.xpose.msra.mxu0 0.0
    %2626 = vmatprep.subr.mxu0 0.0
    %2627 = vmatpush1.xpose.msra.mxu0 0.0
    %2628 = vmatprep.subr.mxu0 0.0
    %2629 = vmatpush1.xpose.msra.mxu0 0.0
    %2630 = vmatprep.subr.mxu0 0.0
    %2631 = vmatpush1.xpose.msra.mxu0 0.0
    %2632 = vmatprep.subr.mxu0 0.0
    %2633 = vmatpush1.xpose.msra.mxu0 0.0
    %2634 = vmatprep.subr.mxu0 0.0
    %2635 = vmatpush1.xpose.msra.mxu0 0.0
    %2636 = vmatprep.subr.mxu0 0.0
    %2637 = vmatpush1.xpose.msra.mxu0 0.0
    %2638 = vmatprep.subr.mxu0 0.0
    %2639 = vmatpush1.xpose.msra.mxu0 0.0
    %2640 = vmatprep.subr.mxu0 0.0
    %2641 = vmatpush1.xpose.msra.mxu0 0.0
    %2642 = vmatprep.subr.mxu0 0.0
    %2643 = vmatpush1.xpose.msra.mxu0 0.0
    %2644 = vmatprep.subr.mxu0 0.0
    %2645 = vmatpush1.xpose.msra.mxu0 0.0
    %2646 = vmatprep.subr.mxu0 0.0
    %2647 = vmatpush1.xpose.msra.mxu0 0.0
    %2648 = vmatprep.subr.mxu0 0.0
    %2649 = vmatpush1.xpose.msra.mxu0 0.0
    %2650 = vmatprep.mubr.f32.mxu0 0.0
    %v2651 = vand.u32 %v1757, 4294901760
    %2652 = vmatmul.mubr.f32.gmra.mrb[0].mxu0 %v2651
    %v2653 = vpop.f32.mrb[0].mxu0
    %v2654 = vadd.f32 %v2582, %v2653
    %v2655 = vpop.f32.mrb[0].mxu0
    %2656 = vdwg.mxu0
    %v2657 = vlaneseq
    %v2658 = vshrl.u32 %v2657, 7
    %v2659 = vsub.s32 0, %v2658
    %v2660 = vrot.slane %v468, %v2659
    %v2661 = vlaneseq
    %v2662 = vshrl.u32 %v2661, 7
    %v2663 = vsub.s32 0, %v2662
    %v2664 = vrot.slane %v469, %v2663
    %2666 = vset.pattern.permute.xlu0 0
    %2667 = vperm.xlu0 %2666, %v2205
    %v2668 = vpop.permute.xlu0 %2667
    %2671 = vset.pattern.permute.xlu0 0
    %2672 = vperm.xlu0 %2671, %v2654
    %v2673 = vpop.permute.xlu0 %2672
    %v2675 = vsub.f32 %v2660, %v2668
    %v2676 = vsub.f32 %v2664, %v2673
    %v2677 = vmul.f32 %v2675, %v2675
    %v2678 = vmul.f32 %v2676, %v2676
    %v2679 = vlaneseq
    %v2680 = vshrl.u32 %v2679, 7
    %v2681 = vsub.s32 1, %v2680
    %v2682 = vrot.slane %v468, %v2681
    %v2683 = vlaneseq
    %v2684 = vshrl.u32 %v2683, 7
    %v2685 = vsub.s32 1, %v2684
    %v2686 = vrot.slane %v469, %v2685
    %2687 = vset.pattern.permute.xlu0 1
    %2688 = vperm.xlu0 %2687, %v2205
    %v2689 = vpop.permute.xlu0 %2688
    %2691 = vset.pattern.permute.xlu0 1
    %2692 = vperm.xlu0 %2691, %v2654
    %v2693 = vpop.permute.xlu0 %2692
    %v2695 = vsub.f32 %v2682, %v2689
    %v2696 = vsub.f32 %v2686, %v2693
    %v2697 = vmul.f32 %v2695, %v2695
    %v2698 = vmul.f32 %v2696, %v2696
    %v2699 = vadd.f32 %v2677, %v2697
    %v2700 = vadd.f32 %v2678, %v2698
    %v2701 = vlaneseq
    %v2702 = vshrl.u32 %v2701, 7
    %v2703 = vsub.s32 2, %v2702
    %v2704 = vrot.slane %v468, %v2703
    %v2705 = vlaneseq
    %v2706 = vshrl.u32 %v2705, 7
    %v2707 = vsub.s32 2, %v2706
    %v2708 = vrot.slane %v469, %v2707
    %2709 = vset.pattern.permute.xlu0 2
    %2710 = vperm.xlu0 %2709, %v2205
    %v2711 = vpop.permute.xlu0 %2710
    %2713 = vset.pattern.permute.xlu0 2
    %2714 = vperm.xlu0 %2713, %v2654
    %v2715 = vpop.permute.xlu0 %2714
    %v2717 = vsub.f32 %v2704, %v2711
    %v2718 = vsub.f32 %v2708, %v2715
    %v2719 = vmul.f32 %v2717, %v2717
    %v2720 = vmul.f32 %v2718, %v2718
    %v2721 = vadd.f32 %v2699, %v2719
    %v2722 = vadd.f32 %v2700, %v2720
    %2723 = vset.pattern.permute.xlu0 3
    %2724 = vperm.xlu0 %2723, %v2205
    %v2725 = vpop.permute.xlu0 %2724
    %2727 = vset.pattern.permute.xlu0 3
    %2728 = vperm.xlu0 %2727, %v2654
    %v2729 = vpop.permute.xlu0 %2728
    %v2731 = vlaneseq
    %v2732 = vshrl.u32 %v2731, 7
    %v2733 = vsub.s32 3, %v2732
    %v2734 = vrot.slane %v468, %v2733
    %v2735 = vlaneseq
    %v2736 = vshrl.u32 %v2735, 7
    %v2737 = vsub.s32 3, %v2736
    %v2738 = vrot.slane %v469, %v2737
    %v2739 = vmul.f32 %v2725, %v2734
    %v2740 = vmul.f32 %v2729, %v2738
    %v2741 = vmul.f32 %v468, %v468
    %v2742 = vmul.f32 %v469, %v469
    %v2743 = vmul.f32 %v2205, %v2205
    %v2744 = vmul.f32 %v2654, %v2654
    %2745 = vset.pattern.permute.xlu0 4
    %2746 = vperm.xlu0 %2745, %v2205
    %v2747 = vpop.permute.xlu0 %2746
    %2749 = vset.pattern.permute.xlu0 4
    %2750 = vperm.xlu0 %2749, %v2654
    %v2751 = vpop.permute.xlu0 %2750
    %v2753 = vlaneseq
    %v2754 = vshrl.u32 %v2753, 7
    %v2755 = vsub.s32 4, %v2754
    %v2756 = vrot.slane %v468, %v2755
    %v2757 = vlaneseq
    %v2758 = vshrl.u32 %v2757, 7
    %v2759 = vsub.s32 4, %v2758
    %v2760 = vrot.slane %v469, %v2759
    %v2761 = vmul.f32 %v2747, %v2756
    %v2762 = vmul.f32 %v2751, %v2760
    %v2763 = vadd.f32 %v2739, %v2761
    %v2764 = vadd.f32 %v2740, %v2762
    %v2767 = vrot.slane %v2741, 1
    %v2768 = vrot.slane %v2742, 1
    %v2771 = vadd.f32 %v2741, %v2767
    %v2772 = vadd.f32 %v2742, %v2768
    %2775 = vrot.lane.b32.xlu0 %v2743, 127
    %v2776 = vpop.permute.xlu0 %2775
    %2777 = vrot.lane.b32.xlu0 %v2744, 127
    %v2778 = vpop.permute.xlu0 %2777
    %v2781 = vadd.f32 %v2743, %v2776
    %v2782 = vadd.f32 %v2744, %v2778
    %2783 = vset.pattern.permute.xlu0 5
    %2784 = vperm.xlu0 %2783, %v2205
    %v2785 = vpop.permute.xlu0 %2784
    %2787 = vset.pattern.permute.xlu0 5
    %2788 = vperm.xlu0 %2787, %v2654
    %v2789 = vpop.permute.xlu0 %2788
    %v2791 = vlaneseq
    %v2792 = vshrl.u32 %v2791, 7
    %v2793 = vsub.s32 5, %v2792
    %v2794 = vrot.slane %v468, %v2793
    %v2795 = vlaneseq
    %v2796 = vshrl.u32 %v2795, 7
    %v2797 = vsub.s32 5, %v2796
    %v2798 = vrot.slane %v469, %v2797
    %v2799 = vmul.f32 %v2785, %v2794
    %v2800 = vmul.f32 %v2789, %v2798
    %v2801 = vadd.f32 %v2763, %v2799
    %v2802 = vadd.f32 %v2764, %v2800
    %v2803 = vrot.slane %v2741, 2
    %v2804 = vrot.slane %v2742, 2
    %v2807 = vadd.f32 %v2771, %v2803
    %v2808 = vadd.f32 %v2772, %v2804
    %2809 = vrot.lane.b32.xlu0 %v2743, 126
    %v2810 = vpop.permute.xlu0 %2809
    %2811 = vrot.lane.b32.xlu0 %v2744, 126
    %v2812 = vpop.permute.xlu0 %2811
    %v2815 = vadd.f32 %v2781, %v2810
    %v2816 = vadd.f32 %v2782, %v2812
    %2817 = vset.pattern.permute.xlu0 6
    %2818 = vperm.xlu0 %2817, %v2205
    %v2819 = vpop.permute.xlu0 %2818
    %2821 = vset.pattern.permute.xlu0 6
    %2822 = vperm.xlu0 %2821, %v2654
    %v2823 = vpop.permute.xlu0 %2822
    %v2825 = vlaneseq
    %v2826 = vshrl.u32 %v2825, 7
    %v2827 = vsub.s32 6, %v2826
    %v2828 = vrot.slane %v468, %v2827
    %v2829 = vlaneseq
    %v2830 = vshrl.u32 %v2829, 7
    %v2831 = vsub.s32 6, %v2830
    %v2832 = vrot.slane %v469, %v2831
    %v2833 = vmul.f32 %v2819, %v2828
    %v2834 = vmul.f32 %v2823, %v2832
    %v2835 = vadd.f32 %v2801, %v2833
    %v2836 = vadd.f32 %v2802, %v2834
    %v2837 = vrot.slane %v2741, 3
    %v2838 = vrot.slane %v2742, 3
    %v2841 = vadd.f32 %v2807, %v2837
    %v2842 = vadd.f32 %v2808, %v2838
    %2843 = vrot.lane.b32.xlu0 %v2743, 125
    %v2844 = vpop.permute.xlu0 %2843
    %2845 = vrot.lane.b32.xlu0 %v2744, 125
    %v2846 = vpop.permute.xlu0 %2845
    %v2849 = vadd.f32 %v2815, %v2844
    %v2850 = vadd.f32 %v2816, %v2846
    %v2851 = vrsqrt.pop %v2849
    %v2852 = vmul.f32 %v2849, %v2851
    %vm2853 = vcmp.eq.f32.partialorder %v2849, inf
    %v2854 = vsel %vm2853, %v2849, %v2852
    %vm2855 = vcmp.eq.f32.partialorder %v2849, 0.0
    %v2856 = vand.u32 %v2849, 2147483648
    %v2857 = vsel %vm2855, %v2856, %v2854
    %v2858 = vrsqrt.pop %v2850
    %v2859 = vmul.f32 %v2850, %v2858
    %vm2860 = vcmp.eq.f32.partialorder %v2850, inf
    %v2861 = vsel %vm2860, %v2850, %v2859
    %vm2862 = vcmp.eq.f32.partialorder %v2850, 0.0
    %v2863 = vand.u32 %v2850, 2147483648
    %v2864 = vsel %vm2862, %v2863, %v2861
    %v2865 = vrsqrt.pop %v2841
    %v2866 = vmul.f32 %v2841, %v2865
    %vm2867 = vcmp.eq.f32.partialorder %v2841, inf
    %v2868 = vsel %vm2867, %v2841, %v2866
    %vm2869 = vcmp.eq.f32.partialorder %v2841, 0.0
    %v2870 = vand.u32 %v2841, 2147483648
    %v2871 = vsel %vm2869, %v2870, %v2868
    %v2872 = vrsqrt.pop %v2842
    %v2873 = vmul.f32 %v2842, %v2872
    %vm2874 = vcmp.eq.f32.partialorder %v2842, inf
    %v2875 = vsel %vm2874, %v2842, %v2873
    %vm2876 = vcmp.eq.f32.partialorder %v2842, 0.0
    %v2877 = vand.u32 %v2842, 2147483648
    %v2878 = vsel %vm2876, %v2877, %v2875
    %2880 = vset.pattern.permute.xlu0 3
    %2881 = vperm.xlu0 %2880, %v2857
    %v2882 = vpop.permute.xlu0 %2881
    %2885 = vset.pattern.permute.xlu0 3
    %2886 = vperm.xlu0 %2885, %v2864
    %v2887 = vpop.permute.xlu0 %2886
    %v2889 = vlaneseq
    %v2890 = vshrl.u32 %v2889, 7
    %v2891 = vsub.s32 3, %v2890
    %v2892 = vrot.slane %v2871, %v2891
    %v2893 = vlaneseq
    %v2894 = vshrl.u32 %v2893, 7
    %v2895 = vsub.s32 3, %v2894
    %v2896 = vrot.slane %v2878, %v2895
    %v2897 = vmul.f32 %v2882, %v2892
    %v2898 = vmul.f32 %v2887, %v2896
    %v2899 = vmul.f32 %v2897, 2.0
    %v2900 = vmul.f32 %v2898, 2.0
    %v2901 = vsub.f32 %v2897, %v2835
    %v2902 = vsub.f32 %v2898, %v2836
    %v2903 = vmul.f32 %v2899, %v2901
    %v2904 = vmul.f32 %v2900, %v2902
    %v2905 = vmax.f32 %v2903, 0.0
    %v2906 = vmax.f32 %v2904, 0.0
    %v2907 = vadd.f32 %v2897, %v2835
    %v2908 = vadd.f32 %v2898, %v2836
    %v2909 = vmul.f32 %v2899, %v2907
    %v2910 = vmul.f32 %v2900, %v2908
    %v2911 = vmax.f32 %v2909, 0.0
    %v2912 = vmax.f32 %v2910, 0.0
    %vm2913 = vcmp.gt.f32.partialorder %v2911, 0.0
    %vm2914 = vcmp.gt.f32.partialorder %v2912, 0.0
    %v2915 = vrsqrt.pop %v2905
    %v2916 = vmul.f32 %v2905, %v2915
    %vm2917 = vcmp.eq.f32.partialorder %v2905, inf
    %v2918 = vsel %vm2917, %v2905, %v2916
    %vm2919 = vcmp.eq.f32.partialorder %v2905, 0.0
    %v2920 = vand.u32 %v2905, 2147483648
    %v2921 = vsel %vm2919, %v2920, %v2918
    %v2922 = vrsqrt.pop %v2906
    %v2923 = vmul.f32 %v2906, %v2922
    %vm2924 = vcmp.eq.f32.partialorder %v2906, inf
    %v2925 = vsel %vm2924, %v2906, %v2923
    %vm2926 = vcmp.eq.f32.partialorder %v2906, 0.0
    %v2927 = vand.u32 %v2906, 2147483648
    %v2928 = vsel %vm2926, %v2927, %v2925
    %v2929 = vsel %vm2913, %v2911, 1.0
    %v2930 = vsel %vm2914, %v2912, 1.0
    %v2931 = vrsqrt.pop %v2929
    %v2932 = vrsqrt.pop %v2930
    %v2933 = vmul.f32 %v2921, %v2931
    %v2934 = vmul.f32 %v2928, %v2932
    %vm2935 = vcmp.gt.f32.partialorder %v2933, 2.4142137
    %vm2936 = vcmp.gt.f32.partialorder %v2934, 2.4142137
    %vm2937 = vcmp.gt.f32.partialorder %v2933, 0.41421357
    %vm2938 = vcmp.gt.f32.partialorder %v2934, 0.41421357
    %vm2939 = vmxor %vm2935, 1
    %vm2940 = vmxor %vm2936, 1
    %vm2941 = vmand %vm2937, %vm2939
    %vm2942 = vmand %vm2938, %vm2940
    %v2943 = vadd.f32 %v2933, 1.0
    %v2944 = vadd.f32 %v2934, 1.0
    %v2945 = vsel %vm2935, %v2933, %v2943
    %v2946 = vsel %vm2936, %v2934, %v2944
    %v2947 = vrcp.pop %v2945
    %v2948 = vmul.f32 1.0, %v2947
    %v2949 = vrcp.pop %v2946
    %v2950 = vmul.f32 1.0, %v2949
    %v2951 = vsub.f32 0.0, %v2948
    %v2952 = vsub.f32 0.0, %v2950
    %v2953 = vsub.f32 %v2933, 1.0
    %v2954 = vsub.f32 %v2934, 1.0
    %v2955 = vmul.f32 %v2953, %v2948
    %v2956 = vmul.f32 %v2954, %v2950
    %v2957 = vsel %vm2941, %v2955, %v2933
    %v2958 = vsel %vm2942, %v2956, %v2934
    %v2959 = vsel %vm2935, %v2951, %v2957
    %v2960 = vsel %vm2936, %v2952, %v2958
    %v2961 = vsel %vm2941, 0.7853982, 0.0
    %v2962 = vsel %vm2942, 0.7853982, 0.0
    %v2963 = vsel %vm2935, 1.5707964, %v2961
    %v2964 = vsel %vm2936, 1.5707964, %v2962
    %v2965 = vmul.f32 %v2959, %v2959
    %v2966 = vmul.f32 %v2960, %v2960
    %v2967 = vmul.f32 %v2965, 0.080537446
    %v2968 = vmul.f32 %v2966, 0.080537446
    %v2969 = vsub.f32 %v2967, 0.13877685
    %v2970 = vsub.f32 %v2968, 0.13877685
    %v2971 = vmul.f32 %v2969, %v2965
    %v2972 = vmul.f32 %v2970, %v2966
    %v2973 = vadd.f32 %v2971, 0.19977711
    %v2974 = vadd.f32 %v2972, 0.19977711
    %v2975 = vmul.f32 %v2973, %v2965
    %v2976 = vmul.f32 %v2974, %v2966
    %v2977 = vsub.f32 %v2975, 0.3333295
    %v2978 = vsub.f32 %v2976, 0.3333295
    %v2979 = vmul.f32 %v2977, %v2965
    %v2980 = vmul.f32 %v2978, %v2966
    %v2981 = vmul.f32 %v2979, %v2959
    %v2982 = vmul.f32 %v2980, %v2960
    %v2983 = vadd.f32 %v2981, %v2959
    %v2984 = vadd.f32 %v2982, %v2960
    %v2985 = vadd.f32 %v2963, %v2983
    %v2986 = vadd.f32 %v2964, %v2984
    %vm2987 = vcmp.gt.f32.partialorder %v2905, 0.0
    %vm2988 = vcmp.gt.f32.partialorder %v2906, 0.0
    %v2989 = vsel %vm2987, 1.5707964, 0.0
    %v2990 = vsel %vm2988, 1.5707964, 0.0
    %v2991 = vsel %vm2913, %v2985, %v2989
    %v2992 = vsel %vm2914, %v2986, %v2990
    %v2993 = vmul.f32 %v2991, 2.0
    %v2994 = vmul.f32 %v2992, 2.0
    %2995 = vmin.xlane.f32.xlu0 %v2721
    %v2996 = vpop.xlane.xlu0 %2995
    %2997 = vmin.xlane.f32.xlu0 %v2722
    %v2998 = vpop.xlane.xlu0 %2997
    %vm2999 = vcmp.eq.f32.partialorder %v2721, %v2996
    %vm3000 = vcmp.eq.f32.partialorder %v2722, %v2998
    %v3001 = vsel %vm2999, %v21, 128
    %v3002 = vsel %vm3000, %v21, 128
    %v3003 = vand.u32 %v3001, 65535
    %v3004 = vshra.s32 %v3001, 16
    %v3005 = vcvt.s32.f32 %v3003
    %v3006 = vcvt.s32.f32 %v3004
    %3007 = vmin.xlane.f32.xlu0 %v3006
    %v3008 = vpop.xlane.xlu0 %3007
    %vm3009 = vcmp.eq.f32.partialorder %v3006, %v3008
    %v3010 = vsel %vm3009, %v3005, inf
    %3011 = vmin.xlane.f32.xlu0 %v3010
    %v3012 = vpop.xlane.xlu0 %3011
    %v3013 = vcvt.f32.s32 %v3012
    %v3014 = vcvt.f32.s32 %v3008
    %v3015 = vshll.u32 %v3014, 16
    %v3016 = vadd.s32 %v3015, %v3013
    %v3017 = vand.u32 %v3002, 65535
    %v3018 = vshra.s32 %v3002, 16
    %v3019 = vcvt.s32.f32 %v3017
    %v3020 = vcvt.s32.f32 %v3018
    %3021 = vmin.xlane.f32.xlu0 %v3020
    %v3022 = vpop.xlane.xlu0 %3021
    %vm3023 = vcmp.eq.f32.partialorder %v3020, %v3022
    %v3024 = vsel %vm3023, %v3019, inf
    %3025 = vmin.xlane.f32.xlu0 %v3024
    %v3026 = vpop.xlane.xlu0 %3025
    %v3027 = vcvt.f32.s32 %v3026
    %v3028 = vcvt.f32.s32 %v3022
    %v3029 = vshll.u32 %v3028, 16
    %v3030 = vadd.s32 %v3029, %v3027
    %vm3031 = vcmp.eq.s32.totalorder %v21, %v3016
    %vm3032 = vcmp.eq.s32.totalorder %v21, %v3030
    %v3033 = vsel %vm3031, inf, %v2721
    %v3034 = vsel %vm3032, inf, %v2722
    %3035 = vmin.xlane.f32.xlu0 %v3033
    %v3036 = vpop.xlane.xlu0 %3035
    %3037 = vmin.xlane.f32.xlu0 %v3034
    %v3038 = vpop.xlane.xlu0 %3037
    %vm3039 = vcmp.eq.f32.partialorder %v3033, %v3036
    %vm3040 = vcmp.eq.f32.partialorder %v3034, %v3038
    %v3041 = vsel %vm3039, %v21, 128
    %v3042 = vsel %vm3040, %v21, 128
    %v3043 = vand.u32 %v3041, 65535
    %v3044 = vshra.s32 %v3041, 16
    %v3045 = vcvt.s32.f32 %v3043
    %v3046 = vcvt.s32.f32 %v3044
    %3047 = vmin.xlane.f32.xlu0 %v3046
    %v3048 = vpop.xlane.xlu0 %3047
    %vm3049 = vcmp.eq.f32.partialorder %v3046, %v3048
    %v3050 = vsel %vm3049, %v3045, inf
    %3051 = vmin.xlane.f32.xlu0 %v3050
    %v3052 = vpop.xlane.xlu0 %3051
    %v3053 = vcvt.f32.s32 %v3052
    %v3054 = vcvt.f32.s32 %v3048
    %v3055 = vshll.u32 %v3054, 16
    %v3056 = vadd.s32 %v3055, %v3053
    %v3057 = vand.u32 %v3042, 65535
    %v3058 = vshra.s32 %v3042, 16
    %v3059 = vcvt.s32.f32 %v3057
    %v3060 = vcvt.s32.f32 %v3058
    %3061 = vmin.xlane.f32.xlu0 %v3060
    %v3062 = vpop.xlane.xlu0 %3061
    %vm3063 = vcmp.eq.f32.partialorder %v3060, %v3062
    %v3064 = vsel %vm3063, %v3059, inf
    %3065 = vmin.xlane.f32.xlu0 %v3064
    %v3066 = vpop.xlane.xlu0 %3065
    %v3067 = vcvt.f32.s32 %v3066
    %v3068 = vcvt.f32.s32 %v3062
    %v3069 = vshll.u32 %v3068, 16
    %v3070 = vadd.s32 %v3069, %v3067
    %vm3071 = vcmp.eq.s32.totalorder %v21, %v3056
    %vm3072 = vcmp.eq.s32.totalorder %v21, %v3070
    %v3073 = vsel %vm3071, %v2993, 0.0
    %v3074 = vsel %vm3072, %v2994, 0.0
    %3075 = vadd.xlane.f32.xlu0 %v3073
    %v3076 = vpop.xlane.xlu0 %3075
    %3077 = vadd.xlane.f32.xlu0 %v3074
    %v3078 = vpop.xlane.xlu0 %3077
    %v3079 = vadd.f32 %v3076, 0.0
    %v3080 = vadd.f32 %v3078, 0.0
    %v3081 = vsel %vm3071, inf, %v3033
    %v3082 = vsel %vm3072, inf, %v3034
    %3083 = vmin.xlane.f32.xlu0 %v3081
    %v3084 = vpop.xlane.xlu0 %3083
    %3085 = vmin.xlane.f32.xlu0 %v3082
    %v3086 = vpop.xlane.xlu0 %3085
    %vm3087 = vcmp.eq.f32.partialorder %v3081, %v3084
    %vm3088 = vcmp.eq.f32.partialorder %v3082, %v3086
    %v3089 = vsel %vm3087, %v21, 128
    %v3090 = vsel %vm3088, %v21, 128
    %v3091 = vand.u32 %v3089, 65535
    %v3092 = vshra.s32 %v3089, 16
    %v3093 = vcvt.s32.f32 %v3091
    %v3094 = vcvt.s32.f32 %v3092
    %3095 = vmin.xlane.f32.xlu0 %v3094
    %v3096 = vpop.xlane.xlu0 %3095
    %vm3097 = vcmp.eq.f32.partialorder %v3094, %v3096
    %v3098 = vsel %vm3097, %v3093, inf
    %3099 = vmin.xlane.f32.xlu0 %v3098
    %v3100 = vpop.xlane.xlu0 %3099
    %v3101 = vcvt.f32.s32 %v3100
    %v3102 = vcvt.f32.s32 %v3096
    %v3103 = vshll.u32 %v3102, 16
    %v3104 = vadd.s32 %v3103, %v3101
    %v3105 = vand.u32 %v3090, 65535
    %v3106 = vshra.s32 %v3090, 16
    %v3107 = vcvt.s32.f32 %v3105
    %v3108 = vcvt.s32.f32 %v3106
    %3109 = vmin.xlane.f32.xlu0 %v3108
    %v3110 = vpop.xlane.xlu0 %3109
    %vm3111 = vcmp.eq.f32.partialorder %v3108, %v3110
    %v3112 = vsel %vm3111, %v3107, inf
    %3113 = vmin.xlane.f32.xlu0 %v3112
    %v3114 = vpop.xlane.xlu0 %3113
    %v3115 = vcvt.f32.s32 %v3114
    %v3116 = vcvt.f32.s32 %v3110
    %v3117 = vshll.u32 %v3116, 16
    %v3118 = vadd.s32 %v3117, %v3115
    %vm3119 = vcmp.eq.s32.totalorder %v21, %v3104
    %vm3120 = vcmp.eq.s32.totalorder %v21, %v3118
    %v3121 = vsel %vm3119, %v2993, 0.0
    %v3122 = vsel %vm3120, %v2994, 0.0
    %3123 = vadd.xlane.f32.xlu0 %v3121
    %v3124 = vpop.xlane.xlu0 %3123
    %3125 = vadd.xlane.f32.xlu0 %v3122
    %v3126 = vpop.xlane.xlu0 %3125
    %v3127 = vadd.f32 %v3079, %v3124
    %v3128 = vadd.f32 %v3080, %v3126
    %v3129 = vsel %vm3119, inf, %v3081
    %v3130 = vsel %vm3120, inf, %v3082
    %3131 = vmin.xlane.f32.xlu0 %v3129
    %v3132 = vpop.xlane.xlu0 %3131
    %3133 = vmin.xlane.f32.xlu0 %v3130
    %v3134 = vpop.xlane.xlu0 %3133
    %vm3135 = vcmp.eq.f32.partialorder %v3129, %v3132
    %vm3136 = vcmp.eq.f32.partialorder %v3130, %v3134
    %v3137 = vsel %vm3135, %v21, 128
    %v3138 = vsel %vm3136, %v21, 128
    %v3139 = vand.u32 %v3137, 65535
    %v3140 = vshra.s32 %v3137, 16
    %v3141 = vcvt.s32.f32 %v3139
    %v3142 = vcvt.s32.f32 %v3140
    %3143 = vmin.xlane.f32.xlu0 %v3142
    %v3144 = vpop.xlane.xlu0 %3143
    %vm3145 = vcmp.eq.f32.partialorder %v3142, %v3144
    %v3146 = vsel %vm3145, %v3141, inf
    %3147 = vmin.xlane.f32.xlu0 %v3146
    %v3148 = vpop.xlane.xlu0 %3147
    %v3149 = vcvt.f32.s32 %v3148
    %v3150 = vcvt.f32.s32 %v3144
    %v3151 = vshll.u32 %v3150, 16
    %v3152 = vadd.s32 %v3151, %v3149
    %v3153 = vand.u32 %v3138, 65535
    %v3154 = vshra.s32 %v3138, 16
    %v3155 = vcvt.s32.f32 %v3153
    %v3156 = vcvt.s32.f32 %v3154
    %3157 = vmin.xlane.f32.xlu0 %v3156
    %v3158 = vpop.xlane.xlu0 %3157
    %vm3159 = vcmp.eq.f32.partialorder %v3156, %v3158
    %v3160 = vsel %vm3159, %v3155, inf
    %3161 = vmin.xlane.f32.xlu0 %v3160
    %v3162 = vpop.xlane.xlu0 %3161
    %v3163 = vcvt.f32.s32 %v3162
    %v3164 = vcvt.f32.s32 %v3158
    %v3165 = vshll.u32 %v3164, 16
    %v3166 = vadd.s32 %v3165, %v3163
    %vm3167 = vcmp.eq.s32.totalorder %v21, %v3152
    %vm3168 = vcmp.eq.s32.totalorder %v21, %v3166
    %v3169 = vsel %vm3167, %v2993, 0.0
    %v3170 = vsel %vm3168, %v2994, 0.0
    %3171 = vadd.xlane.f32.xlu0 %v3169
    %v3172 = vpop.xlane.xlu0 %3171
    %3173 = vadd.xlane.f32.xlu0 %v3170
    %v3174 = vpop.xlane.xlu0 %3173
    %v3175 = vadd.f32 %v3127, %v3172
    %v3176 = vadd.f32 %v3128, %v3174
    %v3177 = vsel %vm3167, inf, %v3129
    %v3178 = vsel %vm3168, inf, %v3130
    %3179 = vmin.xlane.f32.xlu0 %v3177
    %v3180 = vpop.xlane.xlu0 %3179
    %3181 = vmin.xlane.f32.xlu0 %v3178
    %v3182 = vpop.xlane.xlu0 %3181
    %vm3183 = vcmp.eq.f32.partialorder %v3177, %v3180
    %vm3184 = vcmp.eq.f32.partialorder %v3178, %v3182
    %v3185 = vsel %vm3183, %v21, 128
    %v3186 = vsel %vm3184, %v21, 128
    %v3187 = vand.u32 %v3185, 65535
    %v3188 = vshra.s32 %v3185, 16
    %v3189 = vcvt.s32.f32 %v3187
    %v3190 = vcvt.s32.f32 %v3188
    %3191 = vmin.xlane.f32.xlu0 %v3190
    %v3192 = vpop.xlane.xlu0 %3191
    %vm3193 = vcmp.eq.f32.partialorder %v3190, %v3192
    %v3194 = vsel %vm3193, %v3189, inf
    %3195 = vmin.xlane.f32.xlu0 %v3194
    %v3196 = vpop.xlane.xlu0 %3195
    %v3197 = vcvt.f32.s32 %v3196
    %v3198 = vcvt.f32.s32 %v3192
    %v3199 = vshll.u32 %v3198, 16
    %v3200 = vadd.s32 %v3199, %v3197
    %v3201 = vand.u32 %v3186, 65535
    %v3202 = vshra.s32 %v3186, 16
    %v3203 = vcvt.s32.f32 %v3201
    %v3204 = vcvt.s32.f32 %v3202
    %3205 = vmin.xlane.f32.xlu0 %v3204
    %v3206 = vpop.xlane.xlu0 %3205
    %vm3207 = vcmp.eq.f32.partialorder %v3204, %v3206
    %v3208 = vsel %vm3207, %v3203, inf
    %3209 = vmin.xlane.f32.xlu0 %v3208
    %v3210 = vpop.xlane.xlu0 %3209
    %v3211 = vcvt.f32.s32 %v3210
    %v3212 = vcvt.f32.s32 %v3206
    %v3213 = vshll.u32 %v3212, 16
    %v3214 = vadd.s32 %v3213, %v3211
    %vm3215 = vcmp.eq.s32.totalorder %v21, %v3200
    %vm3216 = vcmp.eq.s32.totalorder %v21, %v3214
    %v3217 = vsel %vm3215, %v2993, 0.0
    %v3218 = vsel %vm3216, %v2994, 0.0
    %3219 = vadd.xlane.f32.xlu0 %v3217
    %v3220 = vpop.xlane.xlu0 %3219
    %3221 = vadd.xlane.f32.xlu0 %v3218
    %v3222 = vpop.xlane.xlu0 %3221
    %v3223 = vadd.f32 %v3175, %v3220
    %v3224 = vadd.f32 %v3176, %v3222
    %v3225 = vsel %vm3215, inf, %v3177
    %v3226 = vsel %vm3216, inf, %v3178
    %3227 = vmin.xlane.f32.xlu0 %v3225
    %v3228 = vpop.xlane.xlu0 %3227
    %3229 = vmin.xlane.f32.xlu0 %v3226
    %v3230 = vpop.xlane.xlu0 %3229
    %vm3231 = vcmp.eq.f32.partialorder %v3225, %v3228
    %vm3232 = vcmp.eq.f32.partialorder %v3226, %v3230
    %v3233 = vsel %vm3231, %v21, 128
    %v3234 = vsel %vm3232, %v21, 128
    %v3235 = vand.u32 %v3233, 65535
    %v3236 = vshra.s32 %v3233, 16
    %v3237 = vcvt.s32.f32 %v3235
    %v3238 = vcvt.s32.f32 %v3236
    %3239 = vmin.xlane.f32.xlu0 %v3238
    %v3240 = vpop.xlane.xlu0 %3239
    %vm3241 = vcmp.eq.f32.partialorder %v3238, %v3240
    %v3242 = vsel %vm3241, %v3237, inf
    %3243 = vmin.xlane.f32.xlu0 %v3242
    %v3244 = vpop.xlane.xlu0 %3243
    %v3245 = vcvt.f32.s32 %v3244
    %v3246 = vcvt.f32.s32 %v3240
    %v3247 = vshll.u32 %v3246, 16
    %v3248 = vadd.s32 %v3247, %v3245
    %v3249 = vand.u32 %v3234, 65535
    %v3250 = vshra.s32 %v3234, 16
    %v3251 = vcvt.s32.f32 %v3249
    %v3252 = vcvt.s32.f32 %v3250
    %3253 = vmin.xlane.f32.xlu0 %v3252
    %v3254 = vpop.xlane.xlu0 %3253
    %vm3255 = vcmp.eq.f32.partialorder %v3252, %v3254
    %v3256 = vsel %vm3255, %v3251, inf
    %3257 = vmin.xlane.f32.xlu0 %v3256
    %v3258 = vpop.xlane.xlu0 %3257
    %v3259 = vcvt.f32.s32 %v3258
    %v3260 = vcvt.f32.s32 %v3254
    %v3261 = vshll.u32 %v3260, 16
    %v3262 = vadd.s32 %v3261, %v3259
    %vm3263 = vcmp.eq.s32.totalorder %v21, %v3248
    %vm3264 = vcmp.eq.s32.totalorder %v21, %v3262
    %v3265 = vsel %vm3263, %v2993, 0.0
    %v3266 = vsel %vm3264, %v2994, 0.0
    %3267 = vadd.xlane.f32.xlu0 %v3265
    %v3268 = vpop.xlane.xlu0 %3267
    %3269 = vadd.xlane.f32.xlu0 %v3266
    %v3270 = vpop.xlane.xlu0 %3269
    %v3271 = vadd.f32 %v3223, %v3268
    %v3272 = vadd.f32 %v3224, %v3270
    %v3273 = vsel %vm3263, inf, %v3225
    %v3274 = vsel %vm3264, inf, %v3226
    %3275 = vmin.xlane.f32.xlu0 %v3273
    %v3276 = vpop.xlane.xlu0 %3275
    %3277 = vmin.xlane.f32.xlu0 %v3274
    %v3278 = vpop.xlane.xlu0 %3277
    %vm3279 = vcmp.eq.f32.partialorder %v3273, %v3276
    %vm3280 = vcmp.eq.f32.partialorder %v3274, %v3278
    %v3281 = vsel %vm3279, %v21, 128
    %v3282 = vsel %vm3280, %v21, 128
    %v3283 = vand.u32 %v3281, 65535
    %v3284 = vshra.s32 %v3281, 16
    %v3285 = vcvt.s32.f32 %v3283
    %v3286 = vcvt.s32.f32 %v3284
    %3287 = vmin.xlane.f32.xlu0 %v3286
    %v3288 = vpop.xlane.xlu0 %3287
    %vm3289 = vcmp.eq.f32.partialorder %v3286, %v3288
    %v3290 = vsel %vm3289, %v3285, inf
    %3291 = vmin.xlane.f32.xlu0 %v3290
    %v3292 = vpop.xlane.xlu0 %3291
    %v3293 = vcvt.f32.s32 %v3292
    %v3294 = vcvt.f32.s32 %v3288
    %v3295 = vshll.u32 %v3294, 16
    %v3296 = vadd.s32 %v3295, %v3293
    %v3297 = vand.u32 %v3282, 65535
    %v3298 = vshra.s32 %v3282, 16
    %v3299 = vcvt.s32.f32 %v3297
    %v3300 = vcvt.s32.f32 %v3298
    %3301 = vmin.xlane.f32.xlu0 %v3300
    %v3302 = vpop.xlane.xlu0 %3301
    %vm3303 = vcmp.eq.f32.partialorder %v3300, %v3302
    %v3304 = vsel %vm3303, %v3299, inf
    %3305 = vmin.xlane.f32.xlu0 %v3304
    %v3306 = vpop.xlane.xlu0 %3305
    %v3307 = vcvt.f32.s32 %v3306
    %v3308 = vcvt.f32.s32 %v3302
    %v3309 = vshll.u32 %v3308, 16
    %v3310 = vadd.s32 %v3309, %v3307
    %vm3311 = vcmp.eq.s32.totalorder %v21, %v3296
    %vm3312 = vcmp.eq.s32.totalorder %v21, %v3310
    %v3313 = vsel %vm3311, %v2993, 0.0
    %v3314 = vsel %vm3312, %v2994, 0.0
    %3315 = vadd.xlane.f32.xlu0 %v3313
    %v3316 = vpop.xlane.xlu0 %3315
    %3317 = vadd.xlane.f32.xlu0 %v3314
    %v3318 = vpop.xlane.xlu0 %3317
    %v3319 = vadd.f32 %v3271, %v3316
    %v3320 = vadd.f32 %v3272, %v3318
    %v3321 = vsel %vm3311, inf, %v3273
    %v3322 = vsel %vm3312, inf, %v3274
    %3323 = vmin.xlane.f32.xlu0 %v3321
    %v3324 = vpop.xlane.xlu0 %3323
    %3325 = vmin.xlane.f32.xlu0 %v3322
    %v3326 = vpop.xlane.xlu0 %3325
    %vm3327 = vcmp.eq.f32.partialorder %v3321, %v3324
    %vm3328 = vcmp.eq.f32.partialorder %v3322, %v3326
    %v3329 = vsel %vm3327, %v21, 128
    %v3330 = vsel %vm3328, %v21, 128
    %v3331 = vand.u32 %v3329, 65535
    %v3332 = vshra.s32 %v3329, 16
    %v3333 = vcvt.s32.f32 %v3331
    %v3334 = vcvt.s32.f32 %v3332
    %3335 = vmin.xlane.f32.xlu0 %v3334
    %v3336 = vpop.xlane.xlu0 %3335
    %vm3337 = vcmp.eq.f32.partialorder %v3334, %v3336
    %v3338 = vsel %vm3337, %v3333, inf
    %3339 = vmin.xlane.f32.xlu0 %v3338
    %v3340 = vpop.xlane.xlu0 %3339
    %v3341 = vcvt.f32.s32 %v3340
    %v3342 = vcvt.f32.s32 %v3336
    %v3343 = vshll.u32 %v3342, 16
    %v3344 = vadd.s32 %v3343, %v3341
    %v3345 = vand.u32 %v3330, 65535
    %v3346 = vshra.s32 %v3330, 16
    %v3347 = vcvt.s32.f32 %v3345
    %v3348 = vcvt.s32.f32 %v3346
    %3349 = vmin.xlane.f32.xlu0 %v3348
    %v3350 = vpop.xlane.xlu0 %3349
    %vm3351 = vcmp.eq.f32.partialorder %v3348, %v3350
    %v3352 = vsel %vm3351, %v3347, inf
    %3353 = vmin.xlane.f32.xlu0 %v3352
    %v3354 = vpop.xlane.xlu0 %3353
    %v3355 = vcvt.f32.s32 %v3354
    %v3356 = vcvt.f32.s32 %v3350
    %v3357 = vshll.u32 %v3356, 16
    %v3358 = vadd.s32 %v3357, %v3355
    %vm3359 = vcmp.eq.s32.totalorder %v21, %v3344
    %vm3360 = vcmp.eq.s32.totalorder %v21, %v3358
    %v3361 = vsel %vm3359, %v2993, 0.0
    %v3362 = vsel %vm3360, %v2994, 0.0
    %3363 = vadd.xlane.f32.xlu0 %v3361
    %v3364 = vpop.xlane.xlu0 %3363
    %3365 = vadd.xlane.f32.xlu0 %v3362
    %v3366 = vpop.xlane.xlu0 %3365
    %v3367 = vadd.f32 %v3319, %v3364
    %v3368 = vadd.f32 %v3320, %v3366
    %v3369 = vmul.f32 %v3367, 0.14285715
    %v3370 = vmul.f32 %v3368, 0.14285715
    %vm3371 = vcmask 56320
    %v3372 = vsel %vm3371, %v2205, %v3369
    %v3373 = vsel %vm3371, %v2654, %v3370
    %v3374 = vsel %vm1755, %v3372, 0.0
    %v3375 = vsel %vm1755, %v3373, 0.0
    %3376 = vst [vmem:[#allocation2] sm:$0xff] %v3374
    %3377 = vst [vmem:[#allocation2 + $0x8] sm:$0xff] %v3375
    // Predicated region
    $region10: #{tpu_custom_call.1} parent=1 // pred_check
      _
    $region11: #{tpu_custom_call.1} parent=1 // pred_check_branch
      %3379 = sbr.rel (0) target = $region13
    $region12: #{tpu_custom_call.1} parent=1 // pred_region
      %s3381 = ssub.s32 256, 256
      %3382 = vsyncadd [#allocation3], %s3381
      %s3383 = sshll.u32 [#allocation2], 4
      %s3384 = int_to_ptr.vmem [resolvable:$true] %s3383
      %3389 = dma.vmem_to_hbm [thread:$0]  %s3384, 256, %s2, [#allocation3], 128, 128, 8
    $region13: #{tpu_custom_call.1} parent=1 // pred_fallthru
      _
    // Predicated region
    $region14: #{tpu_custom_call.1} parent=1 // pred_check
      _
    $region15: #{tpu_custom_call.1} parent=1 // pred_check_branch
      %3391 = sbr.rel (0) target = $region17
    $region16: #{tpu_custom_call.1} parent=1 // pred_region
      %s3393 = ssub.s32 32, 32
      %3394 = vsyncadd [#allocation5], %s3393
      %s3396 = sshll.u32 [#allocation4], 4
      %s3397 = int_to_ptr.vmem [resolvable:$true] %s3396
      %3399 = dma.vmem_to_hbm [thread:$0]  %s3397, 32, %s3, [#allocation5]
    $region17: #{tpu_custom_call.1} parent=1 // pred_fallthru
      _
    // Predicated region
    $region18: #{tpu_custom_call.1} parent=1 // pred_check
      _
    $region19: #{tpu_custom_call.1} parent=1 // pred_check_branch
      %3401 = sbr.rel (0) target = $region21
    $region20: #{tpu_custom_call.1} parent=1 // pred_region
      %3402 = dma.done [#allocation3], 256
    $region21: #{tpu_custom_call.1} parent=1 // pred_fallthru
      _
    // Predicated region
    $region22: #{tpu_custom_call.1} parent=1 // pred_check
      _
    $region23: #{tpu_custom_call.1} parent=1 // pred_check_branch
      %3404 = sbr.rel (0) target = $region25
    $region24: #{tpu_custom_call.1} parent=1 // pred_region
      %3405 = dma.done [#allocation5], 32
    $region25: #{tpu_custom_call.1} parent=1 // pred_fallthru
      _
    %3406 = vsyncpa [#allocation3], 1
    %3407 = vsyncpa [#allocation5], 1

</llo_original>
